<compile_context>
chip_gen: v7x
topology: tpu7x:2x2x1
jax: 0.10.0
libtpu: 0.0.40
codegen_flags: <defaults>
</compile_context>

<pallas_src>
import functools

import jax
import jax.numpy as jnp
from jax.experimental import pallas as pl
from jax.experimental.pallas import tpu as pltpu


IMAGENET_MEAN = jnp.array([0.485, 0.456, 0.406], jnp.float32)
IMAGENET_STD = jnp.array([0.229, 0.224, 0.225], jnp.float32)

_LANE = 128
# bf16 (4096, 256) w1 block = 2 MiB; x2 double-buffered when streamed.  At
# this working-set size a single K step (no accumulator carry, no per-step
# overhead) is the fastest choice, so the cap is set so K=3072 is one step.
_K_TILE_CAP = 4096


def _round_up(v, m):
    return (v + m - 1) // m * m


def _k_tiling(k):
    """K-reduction tiling.

    Returns (k_pad, tk) where k_pad = K rounded up to a lane multiple and tk
    is the largest 128-multiple divisor of k_pad that is <= _K_TILE_CAP, so
    tk always divides k_pad exactly and no extra zero padding is streamed.
    """
    k128 = _round_up(k, _LANE)
    if k128 <= _K_TILE_CAP:
        return k128, k128
    tk = _LANE
    for t in range(_K_TILE_CAP // _LANE, 0, -1):
        cand = t * _LANE
        if k128 % cand == 0:
            tk = cand
            break
    return k128, tk


# ---------------------------------------------------------------------------
# Shared epilogue math: masked logits -> cross-entropy (mean) + top-1 accuracy
# ---------------------------------------------------------------------------
def _ce_and_accuracy(logits, y, num_classes, loss_ref, accu_ref):
    n, c = logits.shape
    col = jax.lax.broadcasted_iota(jnp.int32, (n, c), 1)
    # mask padded class columns (1000 -> 1024 lane padding)
    logits = jnp.where(col < num_classes, logits, jnp.float32(-1e30))

    # cross-entropy (mean over batch), numerically stable log-sum-exp
    row_max = jnp.max(logits, axis=-1, keepdims=True)
    sum_exp = jnp.sum(jnp.exp(logits - row_max), axis=-1, keepdims=True)
    lse = row_max + jnp.log(sum_exp)
    true_logit = jnp.sum(jnp.where(col == y, logits, 0.0),
                         axis=-1, keepdims=True)
    loss_ref[0, 0] = jnp.mean(lse - true_logit)

    # top-1 accuracy; torch.argmax tie-break = first index hitting the max
    pred_idx = jnp.min(jnp.where(logits == row_max, col, c),
                       axis=-1, keepdims=True)
    accu_ref[0, 0] = jnp.mean((pred_idx == y).astype(jnp.float32))


# ---------------------------------------------------------------------------
# Single-pass kernel (whole K reduction in one grid step): no accumulator
# carry, no pl.when branches.
#   clamp(x,0,1) -> (Normalize folded into w1/b1) -> x @ w1 + b1 -> ReLU
#   -> @ w2 + b2 -> cross-entropy + top-1 accuracy
# ---------------------------------------------------------------------------
def _make_single_pass_kernel(num_classes):
    def kernel(x_ref, w1_ref, b1_ref, w2_ref, b2_ref, y_ref,
               loss_ref, accu_ref):
        xk = jnp.clip(x_ref[...], 0.0, 1.0).astype(jnp.bfloat16)
        h = jnp.dot(xk, w1_ref[...], preferred_element_type=jnp.float32)
        h = jnp.maximum(h + b1_ref[...], 0.0)                     # (N, HIDDEN)
        logits = jnp.dot(h.astype(jnp.bfloat16), w2_ref[...],
                         preferred_element_type=jnp.float32) + b2_ref[...]
        _ce_and_accuracy(logits, y_ref[...], num_classes, loss_ref, accu_ref)

    return kernel


# ---------------------------------------------------------------------------
# K-streamed kernel (multiple grid steps): bf16 w1 streamed over K with an
# f32 VMEM accumulator; second matmul + CE/accuracy as an epilogue on the
# last K step.  No intermediate ever round-trips through HBM.
# ---------------------------------------------------------------------------
def _make_streamed_kernel(num_classes):
    def kernel(x_ref, w1_ref, b1_ref, w2_ref, b2_ref, y_ref,
               loss_ref, accu_ref, h_acc_ref):
        k = pl.program_id(0)

        @pl.when(k == 0)
        def _init():
            h_acc_ref[...] = jnp.zeros_like(h_acc_ref)

        # clamp fused into the matmul load path; bf16 on the MXU, f32 accum.
        xk = jnp.clip(x_ref[...], 0.0, 1.0).astype(jnp.bfloat16)
        h_acc_ref[...] += jnp.dot(xk, w1_ref[...],
                                  preferred_element_type=jnp.float32)

        @pl.when(k == pl.num_programs(0) - 1)
        def _epilogue():
            h = jnp.maximum(h_acc_ref[...] + b1_ref[...], 0.0)    # (N, HIDDEN)
            logits = jnp.dot(h.astype(jnp.bfloat16), w2_ref[...],
                             preferred_element_type=jnp.float32) + b2_ref[...]
            _ce_and_accuracy(logits, y_ref[...], num_classes,
                             loss_ref, accu_ref)

    return kernel


def fused_clsloss(x_flat, w1, b1, w2, b2, y2d, *, num_classes, tk):
    n, k_pad = x_flat.shape
    hidden = w1.shape[1]
    nc_pad = w2.shape[1]
    assert k_pad % tk == 0
    nk = k_pad // tk
    single_pass = nk == 1

    cost = pl.CostEstimate(
        flops=2 * n * k_pad * hidden + 2 * n * hidden * nc_pad,
        transcendentals=n * nc_pad,
        bytes_accessed=(x_flat.size * 4 + w1.size * 2 + b1.size * 4
                        + w2.size * 2 + b2.size * 2 + y2d.size * 4 + 8),
    )

    if single_pass:
        kernel = _make_single_pass_kernel(num_classes)
        scratch_shapes = []
    else:
        kernel = _make_streamed_kernel(num_classes)
        scratch_shapes = [pltpu.VMEM((n, hidden), jnp.float32)]

    loss, accu = pl.pallas_call(
        kernel,
        out_shape=(jax.ShapeDtypeStruct((1, 1), jnp.float32),
                   jax.ShapeDtypeStruct((1, 1), jnp.float32)),
        grid_spec=pltpu.PrefetchScalarGridSpec(
            num_scalar_prefetch=0,
            grid=(nk,),
            in_specs=[
                pl.BlockSpec((n, tk), lambda i: (0, i)),           # x  : K-stream
                pl.BlockSpec((tk, hidden), lambda i: (i, 0)),      # w1 : K-stream
                pl.BlockSpec((1, hidden), lambda i: (0, 0)),       # b1 : resident
                pl.BlockSpec((hidden, nc_pad), lambda i: (0, 0)),  # w2 : resident (bf16)
                pl.BlockSpec((1, nc_pad), lambda i: (0, 0)),       # b2 : resident (bf16)
                pl.BlockSpec((n, 1), lambda i: (0, 0)),            # labels (last -> tiny DMA off prologue)
            ],
            out_specs=(pl.BlockSpec(memory_space=pltpu.MemorySpace.SMEM),
                       pl.BlockSpec(memory_space=pltpu.MemorySpace.SMEM)),
            scratch_shapes=scratch_shapes,
        ),
        compiler_params=pltpu.CompilerParams(
            # K axis carries the reduction -> "arbitrary".
            # TODO(synk): with batch=2 there is no batch grid axis worth
            # marking "parallel" for a second v7x TensorCore.
            dimension_semantics=("arbitrary",),
            vmem_limit_bytes=32 * 1024 * 1024,
        ),
        cost_estimate=cost,
    )(x_flat, w1, b1, w2, b2, y2d)
    return loss[0, 0], accu[0, 0]


# ---------------------------------------------------------------------------
# Module glue (Clsloss.forward, perceptual_loss=False path)
# ---------------------------------------------------------------------------
def init_classifier_params(key, in_features, hidden, num_classes):
    # TODO(synk): stands in for the frozen pretrained ResNet-50 of Clsloss,
    # which is not reproduced; a deterministic frozen 2-layer MLP head is used.
    k1, k2 = jax.random.split(key)
    w1 = jax.random.normal(k1, (in_features, hidden), jnp.float32) \
        * (1.0 / jnp.sqrt(float(in_features)))
    b1 = jnp.zeros((1, hidden), jnp.float32)
    w2 = jax.random.normal(k2, (hidden, num_classes), jnp.float32) \
        * (1.0 / jnp.sqrt(float(hidden)))
    b2 = jnp.zeros((1, num_classes), jnp.float32)
    return w1, b1, w2, b2


def prepare_classifier_params(raw_params, mean, std, c, h, w):
    """One-time setup: fold ImageNet Normalize into (w1, b1), pad K and class
    dims to lane multiples, cast the K-streamed w1 and resident w2/b2 to bf16.

    The bias fold is computed against the already-bf16-cast w1 so the
    correction is consistent with the weights the kernel actually multiplies.
    """
    w1, b1, w2, b2 = raw_params
    k = w1.shape[0]
    assert k == c * h * w

    inv_std_f = jnp.repeat((1.0 / std).astype(jnp.float32), h * w)   # (K,)
    mean_f = jnp.repeat(mean.astype(jnp.float32), h * w)             # (K,) NCHW

    # ((clamp(x) - mean) * inv_std) @ w1 + b1 == clamp(x) @ w1f + b1f
    w1f = (w1 * inv_std_f[:, None]).astype(jnp.bfloat16)
    b1f = b1 - mean_f @ w1f.astype(jnp.float32)

    k_pad, _ = _k_tiling(k)
    if k_pad != k:
        w1f = jnp.pad(w1f, ((0, k_pad - k), (0, 0)))

    num_classes = w2.shape[1]
    nc_pad = _round_up(num_classes, _LANE)
    w2p = jnp.pad(w2, ((0, 0), (0, nc_pad - num_classes))).astype(jnp.bfloat16)
    b2p = jnp.pad(b2, ((0, 0), (0, nc_pad - num_classes))).astype(jnp.bfloat16)
    return w1f, b1f, w2p, b2p


@functools.partial(jax.jit, static_argnames=("num_classes",))
def clsloss_forward(x_hat, y_true, params, *, num_classes):
    # TODO(synk): perceptual_loss branch (ResNet layer1-4 feature hooks + MSE)
    # is not implemented since the pretrained backbone is not reproduced; only
    # the perceptual_loss=False path is covered.
    # TODO(synk): at real Clsloss scale (224x224, large batch), clamp x in
    # this wrapper and stream it as bf16, re-derive tk, and bump
    # vmem_limit_bytes (keep total VMEM <= ~48 MiB on v7x).
    w1, b1, w2, b2 = params
    n = x_hat.shape[0]
    x_flat = x_hat.reshape(n, -1)                     # NCHW row-major flatten
    k = x_flat.shape[1]
    k_pad, tk = _k_tiling(k)
    assert w1.shape[0] == k_pad
    if k_pad != k:
        x_flat = jnp.pad(x_flat, ((0, 0), (0, k_pad - k)))
    y2d = y_true.reshape(n, 1).astype(jnp.int32)
    loss, accu = fused_clsloss(x_flat, w1, b1, w2, b2, y2d,
                               num_classes=num_classes, tk=tk)
    return loss, accu, None


if __name__ == "__main__":
    key = jax.random.PRNGKey(0)
    kx, ky, kp = jax.random.split(key, 3)

    N, C, H, W = 2, 3, 32, 32       # K = 3072 -> single K step (tk = 3072)
    NUM_CLASSES = 1000
    HIDDEN = 256

    # values outside [0, 1] so the clamp actually does work
    x_hat = jax.random.uniform(kx, (N, C, H, W), jnp.float32, -0.25, 1.25)
    y_true = jax.random.randint(ky, (N,), 0, NUM_CLASSES, dtype=jnp.int32)

    raw = init_classifier_params(kp, C * H * W, HIDDEN, NUM_CLASSES)
    params = prepare_classifier_params(raw, IMAGENET_MEAN, IMAGENET_STD, C, H, W)

    loss, accu, perc = clsloss_forward(x_hat, y_true, params,
                                       num_classes=NUM_CLASSES)
    jax.block_until_ready((loss, accu))
    print("KERNEL_OK")
</pallas_src>

<mosaic_0001>
module attributes {stable_mosaic.version = 11 : i64} {
  func.func @kernel(%arg0: i32, %arg1: memref<2x3072xf32, #tpu.memory_space<vmem>>, %arg2: memref<3072x256xbf16, #tpu.memory_space<vmem>>, %arg3: memref<1x256xf32, #tpu.memory_space<vmem>>, %arg4: memref<256x1024xbf16, #tpu.memory_space<vmem>>, %arg5: memref<1x1024xbf16, #tpu.memory_space<vmem>>, %arg6: memref<2x1xi32, #tpu.memory_space<vmem>>, %arg7: memref<1x1xf32, #tpu.memory_space<smem>>, %arg8: memref<1x1xf32, #tpu.memory_space<smem>>) attributes {dimension_semantics = [#tpu.dimension_semantics<arbitrary>], iteration_bounds = array<i64: 1>, scalar_prefetch = 0 : i64, scratch_operands = 0 : i64, tpu.core_type = #tpu.core_type<tc>, window_params = [{transform_indices = @transform_0, window_bounds = array<i64: 2, 3072>}, {transform_indices = @transform_1, window_bounds = array<i64: 3072, 256>}, {pipeline_mode = #tpu.pipeline_mode<synchronous>, transform_indices = @transform_2, window_bounds = array<i64: 1, 256>}, {pipeline_mode = #tpu.pipeline_mode<synchronous>, transform_indices = @transform_3, window_bounds = array<i64: 256, 1024>}, {pipeline_mode = #tpu.pipeline_mode<synchronous>, transform_indices = @transform_4, window_bounds = array<i64: 1, 1024>}, {pipeline_mode = #tpu.pipeline_mode<synchronous>, transform_indices = @transform_5, window_bounds = array<i64: 2, 1>}, {transform_indices = @transform_6, window_bounds = array<i64: 1, 1>}, {transform_indices = @transform_7, window_bounds = array<i64: 1, 1>}]} {
    %c0 = arith.constant 0 : index
    %c0_0 = arith.constant 0 : index
    %0 = vector.load %arg1[%c0, %c0_0] : memref<2x3072xf32, #tpu.memory_space<vmem>>, vector<2x3072xf32>
    %cst = arith.constant 0.000000e+00 : f32
    %cst_1 = arith.constant 1.000000e+00 : f32
    %1 = vector.broadcast %cst : f32 to vector<2x3072xf32>
    %2 = arith.maximumf %1, %0 : vector<2x3072xf32>
    %3 = vector.broadcast %cst_1 : f32 to vector<2x3072xf32>
    %4 = arith.minimumf %3, %2 : vector<2x3072xf32>
    %5 = arith.truncf %4 : vector<2x3072xf32> to vector<2x3072xbf16>
    %c0_2 = arith.constant 0 : index
    %c0_3 = arith.constant 0 : index
    %6 = vector.load %arg2[%c0_2, %c0_3] : memref<3072x256xbf16, #tpu.memory_space<vmem>>, vector<3072x256xbf16>
    %cst_4 = arith.constant dense<0.000000e+00> : vector<2x256xf32>
    %7 = tpu.matmul %5, %6, %cst_4 {dimension_numbers = #tpu.dot_dimension_numbers<[1], [0], [0], [1], [0, 0, 1, 1], [], []>} : vector<2x3072xbf16>, vector<3072x256xbf16>, vector<2x256xf32> -> vector<2x256xf32>
    %c0_5 = arith.constant 0 : index
    %c0_6 = arith.constant 0 : index
    %8 = vector.load %arg3[%c0_5, %c0_6] : memref<1x256xf32, #tpu.memory_space<vmem>>, vector<1x256xf32>
    %9 = vector.broadcast %8 : vector<1x256xf32> to vector<2x256xf32>
    %10 = arith.addf %7, %9 : vector<2x256xf32>
    %cst_7 = arith.constant 0.000000e+00 : f32
    %11 = vector.broadcast %cst_7 : f32 to vector<2x256xf32>
    %12 = arith.maximumf %10, %11 : vector<2x256xf32>
    %13 = arith.truncf %12 : vector<2x256xf32> to vector<2x256xbf16>
    %c0_8 = arith.constant 0 : index
    %c0_9 = arith.constant 0 : index
    %14 = vector.load %arg4[%c0_8, %c0_9] : memref<256x1024xbf16, #tpu.memory_space<vmem>>, vector<256x1024xbf16>
    %cst_10 = arith.constant dense<0.000000e+00> : vector<2x1024xf32>
    %15 = tpu.matmul %13, %14, %cst_10 {dimension_numbers = #tpu.dot_dimension_numbers<[1], [0], [0], [1], [0, 0, 1, 1], [], []>} : vector<2x256xbf16>, vector<256x1024xbf16>, vector<2x1024xf32> -> vector<2x1024xf32>
    %c0_11 = arith.constant 0 : index
    %c0_12 = arith.constant 0 : index
    %16 = vector.load %arg5[%c0_11, %c0_12] : memref<1x1024xbf16, #tpu.memory_space<vmem>>, vector<1x1024xbf16>
    %17 = arith.extf %16 : vector<1x1024xbf16> to vector<1x1024xf32>
    %18 = vector.broadcast %17 : vector<1x1024xf32> to vector<2x1024xf32>
    %19 = arith.addf %15, %18 : vector<2x1024xf32>
    %c0_13 = arith.constant 0 : index
    %c0_14 = arith.constant 0 : index
    %20 = vector.load %arg6[%c0_13, %c0_14] : memref<2x1xi32, #tpu.memory_space<vmem>>, vector<2x1xi32>
    %21 = tpu.iota {dimensions = array<i32: 1>} : vector<2x1024xi32>
    %c1000_i32 = arith.constant 1000 : i32
    %22 = vector.broadcast %c1000_i32 : i32 to vector<2x1024xi32>
    %23 = arith.cmpi slt, %21, %22 : vector<2x1024xi32>
    %cst_15 = arith.constant -1.000000e+30 : f32
    %24 = vector.broadcast %cst_15 : f32 to vector<2x1024xf32>
    %25 = arith.select %23, %19, %24 : vector<2x1024xi1>, vector<2x1024xf32>
    %cst_16 = arith.constant dense<0xFF800000> : vector<2xf32>
    %26 = vector.multi_reduction <maximumf>, %25, %cst_16 [1] : vector<2x1024xf32> to vector<2xf32>
    %27 = vector.shape_cast %26 : vector<2xf32> to vector<2x1xf32>
    %28 = vector.broadcast %27 : vector<2x1xf32> to vector<2x1024xf32>
    %29 = arith.subf %25, %28 : vector<2x1024xf32>
    %30 = math.exp %29 : vector<2x1024xf32>
    %cst_17 = arith.constant dense<0.000000e+00> : vector<2xf32>
    %31 = vector.multi_reduction <add>, %30, %cst_17 [1] : vector<2x1024xf32> to vector<2xf32>
    %32 = vector.shape_cast %31 : vector<2xf32> to vector<2x1xf32>
    %33 = math.log %32 : vector<2x1xf32>
    %34 = arith.addf %27, %33 : vector<2x1xf32>
    %35 = vector.broadcast %20 : vector<2x1xi32> to vector<2x1024xi32>
    %36 = arith.cmpi eq, %21, %35 : vector<2x1024xi32>
    %cst_18 = arith.constant 0.000000e+00 : f32
    %37 = vector.broadcast %cst_18 : f32 to vector<2x1024xf32>
    %38 = arith.select %36, %25, %37 : vector<2x1024xi1>, vector<2x1024xf32>
    %cst_19 = arith.constant dense<0.000000e+00> : vector<2xf32>
    %39 = vector.multi_reduction <add>, %38, %cst_19 [1] : vector<2x1024xf32> to vector<2xf32>
    %40 = vector.shape_cast %39 : vector<2xf32> to vector<2x1xf32>
    %41 = arith.subf %34, %40 : vector<2x1xf32>
    %42 = vector.shape_cast %41 : vector<2x1xf32> to vector<1x2x1xf32>
    %cst_20 = arith.constant dense<0.000000e+00> : vector<1xf32>
    %43 = vector.multi_reduction <add>, %42, %cst_20 [1, 2] : vector<1x2x1xf32> to vector<1xf32>
    %44 = vector.shape_cast %43 : vector<1xf32> to vector<1x1x1xf32>
    %45 = vector.extract %44[0, 0, 0] : f32 from vector<1x1x1xf32>
    %cst_21 = arith.constant 2.000000e+00 : f32
    %46 = arith.divf %45, %cst_21 : f32
    %c0_22 = arith.constant 0 : index
    %c0_23 = arith.constant 0 : index
    %47 = memref.load %arg7[%c0_22, %c0_23] : memref<1x1xf32, #tpu.memory_space<smem>>
    memref.store %46, %arg7[%c0_22, %c0_23] : memref<1x1xf32, #tpu.memory_space<smem>>
    %48 = vector.broadcast %27 : vector<2x1xf32> to vector<2x1024xf32>
    %49 = arith.cmpf oeq, %25, %48 : vector<2x1024xf32>
    %c1024_i32 = arith.constant 1024 : i32
    %50 = vector.broadcast %c1024_i32 : i32 to vector<2x1024xi32>
    %51 = arith.select %49, %21, %50 : vector<2x1024xi1>, vector<2x1024xi32>
    %cst_24 = arith.constant dense<2147483647> : vector<2xi32>
    %52 = vector.multi_reduction <minsi>, %51, %cst_24 [1] : vector<2x1024xi32> to vector<2xi32>
    %53 = vector.shape_cast %52 : vector<2xi32> to vector<2x1xi32>
    %54 = arith.cmpi eq, %53, %20 : vector<2x1xi32>
    %55 = arith.extui %54 : vector<2x1xi1> to vector<2x1xi32>
    %56 = arith.sitofp %55 : vector<2x1xi32> to vector<2x1xf32>
    %57 = vector.shape_cast %56 : vector<2x1xf32> to vector<1x2x1xf32>
    %cst_25 = arith.constant dense<0.000000e+00> : vector<1xf32>
    %58 = vector.multi_reduction <add>, %57, %cst_25 [1, 2] : vector<1x2x1xf32> to vector<1xf32>
    %59 = vector.shape_cast %58 : vector<1xf32> to vector<1x1x1xf32>
    %60 = vector.extract %59[0, 0, 0] : f32 from vector<1x1x1xf32>
    %cst_26 = arith.constant 2.000000e+00 : f32
    %61 = arith.divf %60, %cst_26 : f32
    %c0_27 = arith.constant 0 : index
    %c0_28 = arith.constant 0 : index
    %62 = memref.load %arg8[%c0_27, %c0_28] : memref<1x1xf32, #tpu.memory_space<smem>>
    memref.store %61, %arg8[%c0_27, %c0_28] : memref<1x1xf32, #tpu.memory_space<smem>>
    return
  }
  func.func @transform_0(%arg0: i32) -> (i32, i32) {
    %c0_i32 = arith.constant 0 : i32
    %c0_i32_0 = arith.constant 0 : i32
    return %c0_i32, %arg0 : i32, i32
  }
  func.func @transform_1(%arg0: i32) -> (i32, i32) {
    %c0_i32 = arith.constant 0 : i32
    %c0_i32_0 = arith.constant 0 : i32
    return %arg0, %c0_i32 : i32, i32
  }
  func.func @transform_2(%arg0: i32) -> (i32, i32) {
    %c0_i32 = arith.constant 0 : i32
    %c0_i32_0 = arith.constant 0 : i32
    %c0_i32_1 = arith.constant 0 : i32
    return %c0_i32, %c0_i32_0 : i32, i32
  }
  func.func @transform_3(%arg0: i32) -> (i32, i32) {
    %c0_i32 = arith.constant 0 : i32
    %c0_i32_0 = arith.constant 0 : i32
    %c0_i32_1 = arith.constant 0 : i32
    return %c0_i32, %c0_i32_0 : i32, i32
  }
  func.func @transform_4(%arg0: i32) -> (i32, i32) {
    %c0_i32 = arith.constant 0 : i32
    %c0_i32_0 = arith.constant 0 : i32
    %c0_i32_1 = arith.constant 0 : i32
    return %c0_i32, %c0_i32_0 : i32, i32
  }
  func.func @transform_5(%arg0: i32) -> (i32, i32) {
    %c0_i32 = arith.constant 0 : i32
    %c0_i32_0 = arith.constant 0 : i32
    %c0_i32_1 = arith.constant 0 : i32
    return %c0_i32, %c0_i32_0 : i32, i32
  }
  func.func @transform_6(%arg0: i32) -> (i32, i32) {
    %c0_i32 = arith.constant 0 : i32
    %c0_i32_0 = arith.constant 0 : i32
    %c0_i32_1 = arith.constant 0 : i32
    return %c0_i32, %c0_i32_0 : i32, i32
  }
  func.func @transform_7(%arg0: i32) -> (i32, i32) {
    %c0_i32 = arith.constant 0 : i32
    %c0_i32_0 = arith.constant 0 : i32
    %c0_i32_1 = arith.constant 0 : i32
    return %c0_i32, %c0_i32_0 : i32, i32
  }
}

</mosaic_0001>

<llo_original>
// kernel: clsloss_forward.1
$region0: #{clsloss_forward.1}
  #allocation0 [shape = 'u32[]', space=smem, size = 0x4, offset = 0x4, fixed_abs, tag = 'smem constant byte address 0x4 - core index']
  #allocation1 [shape = 'u32[144,128]{1,0:T(1,128)}', space=vmem, size = 0x12000, scoped, tag = 'internal scratch']
  %s0 = inlined_call_operand.vmem [shape: f32[2,3072], index: 0, kind: input, shape index: {}]
  %s1 = inlined_call_operand.hbm [shape: bf16[3072,256], index: 1, kind: input, shape index: {}]
  %s2 = inlined_call_operand.hbm [shape: f32[1,256], index: 2, kind: input, shape index: {}]
  %s3 = inlined_call_operand.hbm [shape: bf16[256,1024], index: 3, kind: input, shape index: {}]
  %s4 = inlined_call_operand.hbm [shape: bf16[1,1024], index: 4, kind: input, shape index: {}]
  %s5 = inlined_call_operand.vmem [shape: s32[2,1], index: 5, kind: input, shape index: {}]
  %s6 = inlined_call_operand.hbm [shape: f32[1,1], index: 6, kind: output, shape index: {0}]
  %s7 = inlined_call_operand.hbm [shape: f32[1,1], index: 7, kind: output, shape index: {1}]
  %8 = xla_tuple %s6, %s7
  %s9 = sld [smem:[#allocation0]]
  $region58: #{clsloss_forward.1} parent=0
    _
  %s11 = ssub.s32 1, %s9
  %s12 = scalar_select 0, %s11, %s9
  $region1: #{clsloss_forward.1} parent=0
    #allocation2 [shape = 'u8[1572864]{0}', space=vmem, size = 0x180000, scoped, tag = 'input window, operand 1, single buffered']
    #allocation3 [shape = 's32[1]{0}', space=sflag, size = 0x4, scoped, tag = 'scoped memory for clsloss_forward.1']
    #allocation4 [shape = 's32[1]{0}', space=sflag, size = 0x4, scoped, tag = 'scoped memory for clsloss_forward.1']
    #allocation5 [shape = 'u8[1024]{0}', space=vmem, size = 0x400, scoped, tag = 'input window, operand 2, single buffered']
    #allocation6 [shape = 's32[1]{0}', space=sflag, size = 0x4, scoped, tag = 'scoped memory for clsloss_forward.1']
    #allocation7 [shape = 'u8[524288]{0}', space=vmem, size = 0x80000, scoped, tag = 'input window, operand 3, single buffered']
    #allocation8 [shape = 'u8[4096]{0}', space=vmem, size = 0x1000, scoped, tag = 'input window, operand 4, single buffered']
    #allocation9 [shape = 's32[1]{0}', space=sflag, size = 0x4, scoped, tag = 'scoped memory for clsloss_forward.1']
    #allocation10 [shape = 'u8[512]{0}', space=smem, size = 0x200, scoped, tag = 'output window, operand 0, single buffered']
    #allocation11 [shape = 'u8[512]{0}', space=smem, size = 0x200, scoped, tag = 'output window, operand 1, single buffered']
    #allocation12 [shape = 's32[1]{0}', space=sflag, size = 0x4, scoped, tag = 'scoped memory for clsloss_forward.1']
    %13 = vsyncpa [#allocation3], 0
    %14 = vsyncpa [#allocation6], 0
    %15 = vsyncpa [#allocation9], 0
    %16 = vsyncpa [#allocation4], 0
    %17 = vsyncpa [#allocation12], 0
    // Predicated region
    $region2: #{clsloss_forward.1} parent=1 // pred_check
      _
    $region3: #{clsloss_forward.1} parent=1 // pred_check_branch
      %19 = sbr.rel (0) target = $region5
    $region4: #{clsloss_forward.1} parent=1 // pred_region
      _
    $region5: #{clsloss_forward.1} parent=1 // pred_fallthru
      _
    // Predicated region
    $region6: #{clsloss_forward.1} parent=1 // pred_check
      _
    $region7: #{clsloss_forward.1} parent=1 // pred_check_branch
      %21 = sbr.rel (0) target = $region9
    $region8: #{clsloss_forward.1} parent=1 // pred_region
      %s23 = ssub.s32 49152, 49152
      %24 = vsyncadd [#allocation3], %s23
      %s25 = sshll.u32 [#allocation2], 4
      %s26 = int_to_ptr.vmem [resolvable:$true] %s25
      %31 = dma.hbm_to_vmem [thread:$0]  %s1, 49152, %s26, [#allocation3], 128, 128, 8
    $region9: #{clsloss_forward.1} parent=1 // pred_fallthru
      _
    // Predicated region
    $region10: #{clsloss_forward.1} parent=1 // pred_check
      _
    $region11: #{clsloss_forward.1} parent=1 // pred_check_branch
      %33 = sbr.rel (0) target = $region13
    $region12: #{clsloss_forward.1} parent=1 // pred_region
      %s35 = ssub.s32 32, 32
      %36 = vsyncadd [#allocation6], %s35
      %s38 = sshll.u32 [#allocation5], 4
      %s39 = int_to_ptr.vmem [resolvable:$true] %s38
      %41 = dma.hbm_to_vmem [thread:$0]  %s2, 32, %s39, [#allocation6]
    $region13: #{clsloss_forward.1} parent=1 // pred_fallthru
      _
    // Predicated region
    $region14: #{clsloss_forward.1} parent=1 // pred_check
      _
    $region15: #{clsloss_forward.1} parent=1 // pred_check_branch
      %43 = sbr.rel (0) target = $region17
    $region16: #{clsloss_forward.1} parent=1 // pred_region
      %s45 = ssub.s32 16384, 16384
      %46 = vsyncadd [#allocation6], %s45
      %s47 = sshll.u32 [#allocation7], 4
      %s48 = int_to_ptr.vmem [resolvable:$true] %s47
      %53 = dma.hbm_to_vmem [thread:$0]  %s3, 16384, %s48, [#allocation6], 512, 512, 32
    $region17: #{clsloss_forward.1} parent=1 // pred_fallthru
      _
    // Predicated region
    $region18: #{clsloss_forward.1} parent=1 // pred_check
      _
    $region19: #{clsloss_forward.1} parent=1 // pred_check_branch
      %55 = sbr.rel (0) target = $region21
    $region20: #{clsloss_forward.1} parent=1 // pred_region
      %s57 = ssub.s32 128, 128
      %58 = vsyncadd [#allocation9], %s57
      %s60 = sshll.u32 [#allocation8], 4
      %s61 = int_to_ptr.vmem [resolvable:$true] %s60
      %63 = dma.hbm_to_vmem [thread:$0]  %s4, 128, %s61, [#allocation9]
    $region21: #{clsloss_forward.1} parent=1 // pred_fallthru
      _
    // Predicated region
    $region22: #{clsloss_forward.1} parent=1 // pred_check
      _
    $region23: #{clsloss_forward.1} parent=1 // pred_check_branch
      %65 = sbr.rel (0) target = $region25
    $region24: #{clsloss_forward.1} parent=1 // pred_region
      _
    $region25: #{clsloss_forward.1} parent=1 // pred_fallthru
      _
    // Predicated region
    $region26: #{clsloss_forward.1} parent=1 // pred_check
      _
    $region27: #{clsloss_forward.1} parent=1 // pred_check_branch
      %67 = sbr.rel (0) target = $region29
    $region28: #{clsloss_forward.1} parent=1 // pred_region
      %68 = dma.done [#allocation3], 49152
    $region29: #{clsloss_forward.1} parent=1 // pred_fallthru
      _
    // Predicated region
    $region30: #{clsloss_forward.1} parent=1 // pred_check
      _
    $region31: #{clsloss_forward.1} parent=1 // pred_check_branch
      %70 = sbr.rel (0) target = $region33
    $region32: #{clsloss_forward.1} parent=1 // pred_region
      %71 = dma.done [#allocation6], 32
    $region33: #{clsloss_forward.1} parent=1 // pred_fallthru
      _
    // Predicated region
    $region34: #{clsloss_forward.1} parent=1 // pred_check
      _
    $region35: #{clsloss_forward.1} parent=1 // pred_check_branch
      %73 = sbr.rel (0) target = $region37
    $region36: #{clsloss_forward.1} parent=1 // pred_region
      %74 = dma.done [#allocation6], 16384
    $region37: #{clsloss_forward.1} parent=1 // pred_fallthru
      _
    // Predicated region
    $region38: #{clsloss_forward.1} parent=1 // pred_check
      _
    $region39: #{clsloss_forward.1} parent=1 // pred_check_branch
      %76 = sbr.rel (0) target = $region41
    $region40: #{clsloss_forward.1} parent=1 // pred_region
      %77 = dma.done [#allocation9], 128
    $region41: #{clsloss_forward.1} parent=1 // pred_fallthru
      _
    %v78 = vld [vmem:[%s0] sm:$0xff]
    %v79 = vld [vmem:[%s0 + $0x8] sm:$0xff]
    %v80 = vld [vmem:[%s0 + $0x10] sm:$0xff]
    %v81 = vld [vmem:[%s0 + $0x18] sm:$0xff]
    %v82 = vld [vmem:[%s0 + $0x20] sm:$0xff]
    %v83 = vld [vmem:[%s0 + $0x28] sm:$0xff]
    %v84 = vmax.f32 %v78, 0.0
    %v85 = vmax.f32 %v79, 0.0
    %v86 = vmax.f32 %v80, 0.0
    %v87 = vmax.f32 %v81, 0.0
    %v88 = vmax.f32 %v82, 0.0
    %v89 = vmax.f32 %v83, 0.0
    %v90 = vmin.f32 %v84, 1.0
    %v91 = vmin.f32 %v85, 1.0
    %v92 = vmin.f32 %v86, 1.0
    %v93 = vmin.f32 %v87, 1.0
    %v94 = vmin.f32 %v88, 1.0
    %v95 = vmin.f32 %v89, 1.0
    %v102 = vcombine.high %v90, %v90
    %v104 = vunpack.c.l.s4 1983009808
    %v105 = vunpack.c.0.s8 %v104
    %v106 = vlaneseq
    %v107 = vshrl.u32 %v106, 7
    %v108 = vsub.s32 %v105, %v107
    %v109 = vrot.slane %v90, %v108
    %v111 = vunpack.c.l.s4 1983009808
    %v112 = vunpack.c.0.s8 %v111
    %v113 = vlaneseq
    %v114 = vshrl.u32 %v113, 7
    %v115 = vsub.s32 %v112, %v114
    %v116 = vrot.slane %v102, %v115
    %v117 = vcombine.high %v109, %v109
    %v118 = vcombine.high %v116, %v116
    %v119 = vcombine.high %v91, %v91
    %v121 = vunpack.c.l.s4 1983009808
    %v122 = vunpack.c.0.s8 %v121
    %v123 = vlaneseq
    %v124 = vshrl.u32 %v123, 7
    %v125 = vsub.s32 %v122, %v124
    %v126 = vrot.slane %v91, %v125
    %v128 = vunpack.c.l.s4 1983009808
    %v129 = vunpack.c.0.s8 %v128
    %v130 = vlaneseq
    %v131 = vshrl.u32 %v130, 7
    %v132 = vsub.s32 %v129, %v131
    %v133 = vrot.slane %v119, %v132
    %v134 = vcombine.high %v126, %v126
    %v135 = vcombine.high %v133, %v133
    %v136 = vcombine.high %v92, %v92
    %v138 = vunpack.c.l.s4 1983009808
    %v139 = vunpack.c.0.s8 %v138
    %v140 = vlaneseq
    %v141 = vshrl.u32 %v140, 7
    %v142 = vsub.s32 %v139, %v141
    %v143 = vrot.slane %v92, %v142
    %v145 = vunpack.c.l.s4 1983009808
    %v146 = vunpack.c.0.s8 %v145
    %v147 = vlaneseq
    %v148 = vshrl.u32 %v147, 7
    %v149 = vsub.s32 %v146, %v148
    %v150 = vrot.slane %v136, %v149
    %v151 = vcombine.high %v143, %v143
    %v152 = vcombine.high %v150, %v150
    %v153 = vcombine.high %v93, %v93
    %v155 = vunpack.c.l.s4 1983009808
    %v156 = vunpack.c.0.s8 %v155
    %v157 = vlaneseq
    %v158 = vshrl.u32 %v157, 7
    %v159 = vsub.s32 %v156, %v158
    %v160 = vrot.slane %v93, %v159
    %v162 = vunpack.c.l.s4 1983009808
    %v163 = vunpack.c.0.s8 %v162
    %v164 = vlaneseq
    %v165 = vshrl.u32 %v164, 7
    %v166 = vsub.s32 %v163, %v165
    %v167 = vrot.slane %v153, %v166
    %v168 = vcombine.high %v160, %v160
    %v169 = vcombine.high %v167, %v167
    %v170 = vcombine.high %v94, %v94
    %v172 = vunpack.c.l.s4 1983009808
    %v173 = vunpack.c.0.s8 %v172
    %v174 = vlaneseq
    %v175 = vshrl.u32 %v174, 7
    %v176 = vsub.s32 %v173, %v175
    %v177 = vrot.slane %v94, %v176
    %v179 = vunpack.c.l.s4 1983009808
    %v180 = vunpack.c.0.s8 %v179
    %v181 = vlaneseq
    %v182 = vshrl.u32 %v181, 7
    %v183 = vsub.s32 %v180, %v182
    %v184 = vrot.slane %v170, %v183
    %v185 = vcombine.high %v177, %v177
    %v186 = vcombine.high %v184, %v184
    %v187 = vcombine.high %v95, %v95
    %v189 = vunpack.c.l.s4 1983009808
    %v190 = vunpack.c.0.s8 %v189
    %v191 = vlaneseq
    %v192 = vshrl.u32 %v191, 7
    %v193 = vsub.s32 %v190, %v192
    %v194 = vrot.slane %v95, %v193
    %v196 = vunpack.c.l.s4 1983009808
    %v197 = vunpack.c.0.s8 %v196
    %v198 = vlaneseq
    %v199 = vshrl.u32 %v198, 7
    %v200 = vsub.s32 %v197, %v199
    %v201 = vrot.slane %v187, %v200
    %v202 = vcombine.high %v194, %v194
    %v203 = vcombine.high %v201, %v201
    %v228 = vpack.c.bf16 %v109, %v109
    %v229 = vpack.c.bf16 %v117, %v117
    %v230 = vpack.c.bf16 %v116, %v116
    %v231 = vpack.c.bf16 %v118, %v118
    %v232 = vpack.c.bf16 %v126, %v126
    %v233 = vpack.c.bf16 %v134, %v134
    %v234 = vpack.c.bf16 %v133, %v133
    %v235 = vpack.c.bf16 %v135, %v135
    %v236 = vpack.c.bf16 %v143, %v143
    %v237 = vpack.c.bf16 %v151, %v151
    %v238 = vpack.c.bf16 %v150, %v150
    %v239 = vpack.c.bf16 %v152, %v152
    %v240 = vpack.c.bf16 %v160, %v160
    %v241 = vpack.c.bf16 %v168, %v168
    %v242 = vpack.c.bf16 %v167, %v167
    %v243 = vpack.c.bf16 %v169, %v169
    %v244 = vpack.c.bf16 %v177, %v177
    %v245 = vpack.c.bf16 %v185, %v185
    %v246 = vpack.c.bf16 %v184, %v184
    %v247 = vpack.c.bf16 %v186, %v186
    %v248 = vpack.c.bf16 %v194, %v194
    %v249 = vpack.c.bf16 %v202, %v202
    %v250 = vpack.c.bf16 %v201, %v201
    %v251 = vpack.c.bf16 %v203, %v203
    %v252 = vld [vmem:[#allocation2] sm:$0xff]
    %v253 = vld [vmem:[#allocation2 + $0x8] sm:$0xff]
    %v254 = vld [vmem:[#allocation2 + $0x10] sm:$0xff]
    %v255 = vld [vmem:[#allocation2 + $0x18] sm:$0xff]
    %v256 = vld [vmem:[#allocation2 + $0x20] sm:$0xff]
    %v257 = vld [vmem:[#allocation2 + $0x28] sm:$0xff]
    %v258 = vld [vmem:[#allocation2 + $0x30] sm:$0xff]
    %v259 = vld [vmem:[#allocation2 + $0x38] sm:$0xff]
    %v260 = vld [vmem:[#allocation2 + $0x40] sm:$0xff]
    %v261 = vld [vmem:[#allocation2 + $0x48] sm:$0xff]
    %v262 = vld [vmem:[#allocation2 + $0x50] sm:$0xff]
    %v263 = vld [vmem:[#allocation2 + $0x58] sm:$0xff]
    %v264 = vld [vmem:[#allocation2 + $0x60] sm:$0xff]
    %v265 = vld [vmem:[#allocation2 + $0x68] sm:$0xff]
    %v266 = vld [vmem:[#allocation2 + $0x70] sm:$0xff]
    %v267 = vld [vmem:[#allocation2 + $0x78] sm:$0xff]
    %v268 = vld [vmem:[#allocation2 + $0x80] sm:$0xff]
    %v269 = vld [vmem:[#allocation2 + $0x88] sm:$0xff]
    %v270 = vld [vmem:[#allocation2 + $0x90] sm:$0xff]
    %v271 = vld [vmem:[#allocation2 + $0x98] sm:$0xff]
    %v272 = vld [vmem:[#allocation2 + $0xa0] sm:$0xff]
    %v273 = vld [vmem:[#allocation2 + $0xa8] sm:$0xff]
    %v274 = vld [vmem:[#allocation2 + $0xb0] sm:$0xff]
    %v275 = vld [vmem:[#allocation2 + $0xb8] sm:$0xff]
    %v276 = vld [vmem:[#allocation2 + $0xc0] sm:$0xff]
    %v277 = vld [vmem:[#allocation2 + $0xc8] sm:$0xff]
    %v278 = vld [vmem:[#allocation2 + $0xd0] sm:$0xff]
    %v279 = vld [vmem:[#allocation2 + $0xd8] sm:$0xff]
    %v280 = vld [vmem:[#allocation2 + $0xe0] sm:$0xff]
    %v281 = vld [vmem:[#allocation2 + $0xe8] sm:$0xff]
    %v282 = vld [vmem:[#allocation2 + $0xf0] sm:$0xff]
    %v283 = vld [vmem:[#allocation2 + $0xf8] sm:$0xff]
    %v284 = vld [vmem:[#allocation2 + $0x100] sm:$0xff]
    %v285 = vld [vmem:[#allocation2 + $0x108] sm:$0xff]
    %v286 = vld [vmem:[#allocation2 + $0x110] sm:$0xff]
    %v287 = vld [vmem:[#allocation2 + $0x118] sm:$0xff]
    %v288 = vld [vmem:[#allocation2 + $0x120] sm:$0xff]
    %v289 = vld [vmem:[#allocation2 + $0x128] sm:$0xff]
    %v290 = vld [vmem:[#allocation2 + $0x130] sm:$0xff]
    %v291 = vld [vmem:[#allocation2 + $0x138] sm:$0xff]
    %v292 = vld [vmem:[#allocation2 + $0x140] sm:$0xff]
    %v293 = vld [vmem:[#allocation2 + $0x148] sm:$0xff]
    %v294 = vld [vmem:[#allocation2 + $0x150] sm:$0xff]
    %v295 = vld [vmem:[#allocation2 + $0x158] sm:$0xff]
    %v296 = vld [vmem:[#allocation2 + $0x160] sm:$0xff]
    %v297 = vld [vmem:[#allocation2 + $0x168] sm:$0xff]
    %v298 = vld [vmem:[#allocation2 + $0x170] sm:$0xff]
    %v299 = vld [vmem:[#allocation2 + $0x178] sm:$0xff]
    %v300 = vld [vmem:[#allocation2 + $0x180] sm:$0xff]
    %v301 = vld [vmem:[#allocation2 + $0x188] sm:$0xff]
    %v302 = vld [vmem:[#allocation2 + $0x190] sm:$0xff]
    %v303 = vld [vmem:[#allocation2 + $0x198] sm:$0xff]
    %v304 = vld [vmem:[#allocation2 + $0x1a0] sm:$0xff]
    %v305 = vld [vmem:[#allocation2 + $0x1a8] sm:$0xff]
    %v306 = vld [vmem:[#allocation2 + $0x1b0] sm:$0xff]
    %v307 = vld [vmem:[#allocation2 + $0x1b8] sm:$0xff]
    %v308 = vld [vmem:[#allocation2 + $0x1c0] sm:$0xff]
    %v309 = vld [vmem:[#allocation2 + $0x1c8] sm:$0xff]
    %v310 = vld [vmem:[#allocation2 + $0x1d0] sm:$0xff]
    %v311 = vld [vmem:[#allocation2 + $0x1d8] sm:$0xff]
    %v312 = vld [vmem:[#allocation2 + $0x1e0] sm:$0xff]
    %v313 = vld [vmem:[#allocation2 + $0x1e8] sm:$0xff]
    %v314 = vld [vmem:[#allocation2 + $0x1f0] sm:$0xff]
    %v315 = vld [vmem:[#allocation2 + $0x1f8] sm:$0xff]
    %v316 = vld [vmem:[#allocation2 + $0x200] sm:$0xff]
    %v317 = vld [vmem:[#allocation2 + $0x208] sm:$0xff]
    %v318 = vld [vmem:[#allocation2 + $0x210] sm:$0xff]
    %v319 = vld [vmem:[#allocation2 + $0x218] sm:$0xff]
    %v320 = vld [vmem:[#allocation2 + $0x220] sm:$0xff]
    %v321 = vld [vmem:[#allocation2 + $0x228] sm:$0xff]
    %v322 = vld [vmem:[#allocation2 + $0x230] sm:$0xff]
    %v323 = vld [vmem:[#allocation2 + $0x238] sm:$0xff]
    %v324 = vld [vmem:[#allocation2 + $0x240] sm:$0xff]
    %v325 = vld [vmem:[#allocation2 + $0x248] sm:$0xff]
    %v326 = vld [vmem:[#allocation2 + $0x250] sm:$0xff]
    %v327 = vld [vmem:[#allocation2 + $0x258] sm:$0xff]
    %v328 = vld [vmem:[#allocation2 + $0x260] sm:$0xff]
    %v329 = vld [vmem:[#allocation2 + $0x268] sm:$0xff]
    %v330 = vld [vmem:[#allocation2 + $0x270] sm:$0xff]
    %v331 = vld [vmem:[#allocation2 + $0x278] sm:$0xff]
    %v332 = vld [vmem:[#allocation2 + $0x280] sm:$0xff]
    %v333 = vld [vmem:[#allocation2 + $0x288] sm:$0xff]
    %v334 = vld [vmem:[#allocation2 + $0x290] sm:$0xff]
    %v335 = vld [vmem:[#allocation2 + $0x298] sm:$0xff]
    %v336 = vld [vmem:[#allocation2 + $0x2a0] sm:$0xff]
    %v337 = vld [vmem:[#allocation2 + $0x2a8] sm:$0xff]
    %v338 = vld [vmem:[#allocation2 + $0x2b0] sm:$0xff]
    %v339 = vld [vmem:[#allocation2 + $0x2b8] sm:$0xff]
    %v340 = vld [vmem:[#allocation2 + $0x2c0] sm:$0xff]
    %v341 = vld [vmem:[#allocation2 + $0x2c8] sm:$0xff]
    %v342 = vld [vmem:[#allocation2 + $0x2d0] sm:$0xff]
    %v343 = vld [vmem:[#allocation2 + $0x2d8] sm:$0xff]
    %v344 = vld [vmem:[#allocation2 + $0x2e0] sm:$0xff]
    %v345 = vld [vmem:[#allocation2 + $0x2e8] sm:$0xff]
    %v346 = vld [vmem:[#allocation2 + $0x2f0] sm:$0xff]
    %v347 = vld [vmem:[#allocation2 + $0x2f8] sm:$0xff]
    %v348 = vld [vmem:[#allocation2 + $0x300] sm:$0xff]
    %v349 = vld [vmem:[#allocation2 + $0x308] sm:$0xff]
    %v350 = vld [vmem:[#allocation2 + $0x310] sm:$0xff]
    %v351 = vld [vmem:[#allocation2 + $0x318] sm:$0xff]
    %v352 = vld [vmem:[#allocation2 + $0x320] sm:$0xff]
    %v353 = vld [vmem:[#allocation2 + $0x328] sm:$0xff]
    %v354 = vld [vmem:[#allocation2 + $0x330] sm:$0xff]
    %v355 = vld [vmem:[#allocation2 + $0x338] sm:$0xff]
    %v356 = vld [vmem:[#allocation2 + $0x340] sm:$0xff]
    %v357 = vld [vmem:[#allocation2 + $0x348] sm:$0xff]
    %v358 = vld [vmem:[#allocation2 + $0x350] sm:$0xff]
    %v359 = vld [vmem:[#allocation2 + $0x358] sm:$0xff]
    %v360 = vld [vmem:[#allocation2 + $0x360] sm:$0xff]
    %v361 = vld [vmem:[#allocation2 + $0x368] sm:$0xff]
    %v362 = vld [vmem:[#allocation2 + $0x370] sm:$0xff]
    %v363 = vld [vmem:[#allocation2 + $0x378] sm:$0xff]
    %v364 = vld [vmem:[#allocation2 + $0x380] sm:$0xff]
    %v365 = vld [vmem:[#allocation2 + $0x388] sm:$0xff]
    %v366 = vld [vmem:[#allocation2 + $0x390] sm:$0xff]
    %v367 = vld [vmem:[#allocation2 + $0x398] sm:$0xff]
    %v368 = vld [vmem:[#allocation2 + $0x3a0] sm:$0xff]
    %v369 = vld [vmem:[#allocation2 + $0x3a8] sm:$0xff]
    %v370 = vld [vmem:[#allocation2 + $0x3b0] sm:$0xff]
    %v371 = vld [vmem:[#allocation2 + $0x3b8] sm:$0xff]
    %v372 = vld [vmem:[#allocation2 + $0x3c0] sm:$0xff]
    %v373 = vld [vmem:[#allocation2 + $0x3c8] sm:$0xff]
    %v374 = vld [vmem:[#allocation2 + $0x3d0] sm:$0xff]
    %v375 = vld [vmem:[#allocation2 + $0x3d8] sm:$0xff]
    %v376 = vld [vmem:[#allocation2 + $0x3e0] sm:$0xff]
    %v377 = vld [vmem:[#allocation2 + $0x3e8] sm:$0xff]
    %v378 = vld [vmem:[#allocation2 + $0x3f0] sm:$0xff]
    %v379 = vld [vmem:[#allocation2 + $0x3f8] sm:$0xff]
    %v380 = vld [vmem:[#allocation2 + $0x400] sm:$0xff]
    %v381 = vld [vmem:[#allocation2 + $0x408] sm:$0xff]
    %v382 = vld [vmem:[#allocation2 + $0x410] sm:$0xff]
    %v383 = vld [vmem:[#allocation2 + $0x418] sm:$0xff]
    %v384 = vld [vmem:[#allocation2 + $0x420] sm:$0xff]
    %v385 = vld [vmem:[#allocation2 + $0x428] sm:$0xff]
    %v386 = vld [vmem:[#allocation2 + $0x430] sm:$0xff]
    %v387 = vld [vmem:[#allocation2 + $0x438] sm:$0xff]
    %v388 = vld [vmem:[#allocation2 + $0x440] sm:$0xff]
    %v389 = vld [vmem:[#allocation2 + $0x448] sm:$0xff]
    %v390 = vld [vmem:[#allocation2 + $0x450] sm:$0xff]
    %v391 = vld [vmem:[#allocation2 + $0x458] sm:$0xff]
    %v392 = vld [vmem:[#allocation2 + $0x460] sm:$0xff]
    %v393 = vld [vmem:[#allocation2 + $0x468] sm:$0xff]
    %v394 = vld [vmem:[#allocation2 + $0x470] sm:$0xff]
    %v395 = vld [vmem:[#allocation2 + $0x478] sm:$0xff]
    %v396 = vld [vmem:[#allocation2 + $0x480] sm:$0xff]
    %v397 = vld [vmem:[#allocation2 + $0x488] sm:$0xff]
    %v398 = vld [vmem:[#allocation2 + $0x490] sm:$0xff]
    %v399 = vld [vmem:[#allocation2 + $0x498] sm:$0xff]
    %v400 = vld [vmem:[#allocation2 + $0x4a0] sm:$0xff]
    %v401 = vld [vmem:[#allocation2 + $0x4a8] sm:$0xff]
    %v402 = vld [vmem:[#allocation2 + $0x4b0] sm:$0xff]
    %v403 = vld [vmem:[#allocation2 + $0x4b8] sm:$0xff]
    %v404 = vld [vmem:[#allocation2 + $0x4c0] sm:$0xff]
    %v405 = vld [vmem:[#allocation2 + $0x4c8] sm:$0xff]
    %v406 = vld [vmem:[#allocation2 + $0x4d0] sm:$0xff]
    %v407 = vld [vmem:[#allocation2 + $0x4d8] sm:$0xff]
    %v408 = vld [vmem:[#allocation2 + $0x4e0] sm:$0xff]
    %v409 = vld [vmem:[#allocation2 + $0x4e8] sm:$0xff]
    %v410 = vld [vmem:[#allocation2 + $0x4f0] sm:$0xff]
    %v411 = vld [vmem:[#allocation2 + $0x4f8] sm:$0xff]
    %v412 = vld [vmem:[#allocation2 + $0x500] sm:$0xff]
    %v413 = vld [vmem:[#allocation2 + $0x508] sm:$0xff]
    %v414 = vld [vmem:[#allocation2 + $0x510] sm:$0xff]
    %v415 = vld [vmem:[#allocation2 + $0x518] sm:$0xff]
    %v416 = vld [vmem:[#allocation2 + $0x520] sm:$0xff]
    %v417 = vld [vmem:[#allocation2 + $0x528] sm:$0xff]
    %v418 = vld [vmem:[#allocation2 + $0x530] sm:$0xff]
    %v419 = vld [vmem:[#allocation2 + $0x538] sm:$0xff]
    %v420 = vld [vmem:[#allocation2 + $0x540] sm:$0xff]
    %v421 = vld [vmem:[#allocation2 + $0x548] sm:$0xff]
    %v422 = vld [vmem:[#allocation2 + $0x550] sm:$0xff]
    %v423 = vld [vmem:[#allocation2 + $0x558] sm:$0xff]
    %v424 = vld [vmem:[#allocation2 + $0x560] sm:$0xff]
    %v425 = vld [vmem:[#allocation2 + $0x568] sm:$0xff]
    %v426 = vld [vmem:[#allocation2 + $0x570] sm:$0xff]
    %v427 = vld [vmem:[#allocation2 + $0x578] sm:$0xff]
    %v428 = vld [vmem:[#allocation2 + $0x580] sm:$0xff]
    %v429 = vld [vmem:[#allocation2 + $0x588] sm:$0xff]
    %v430 = vld [vmem:[#allocation2 + $0x590] sm:$0xff]
    %v431 = vld [vmem:[#allocation2 + $0x598] sm:$0xff]
    %v432 = vld [vmem:[#allocation2 + $0x5a0] sm:$0xff]
    %v433 = vld [vmem:[#allocation2 + $0x5a8] sm:$0xff]
    %v434 = vld [vmem:[#allocation2 + $0x5b0] sm:$0xff]
    %v435 = vld [vmem:[#allocation2 + $0x5b8] sm:$0xff]
    %v436 = vld [vmem:[#allocation2 + $0x5c0] sm:$0xff]
    %v437 = vld [vmem:[#allocation2 + $0x5c8] sm:$0xff]
    %v438 = vld [vmem:[#allocation2 + $0x5d0] sm:$0xff]
    %v439 = vld [vmem:[#allocation2 + $0x5d8] sm:$0xff]
    %v440 = vld [vmem:[#allocation2 + $0x5e0] sm:$0xff]
    %v441 = vld [vmem:[#allocation2 + $0x5e8] sm:$0xff]
    %v442 = vld [vmem:[#allocation2 + $0x5f0] sm:$0xff]
    %v443 = vld [vmem:[#allocation2 + $0x5f8] sm:$0xff]
    %v444 = vld [vmem:[#allocation2 + $0x600] sm:$0xff]
    %v445 = vld [vmem:[#allocation2 + $0x608] sm:$0xff]
    %v446 = vld [vmem:[#allocation2 + $0x610] sm:$0xff]
    %v447 = vld [vmem:[#allocation2 + $0x618] sm:$0xff]
    %v448 = vld [vmem:[#allocation2 + $0x620] sm:$0xff]
    %v449 = vld [vmem:[#allocation2 + $0x628] sm:$0xff]
    %v450 = vld [vmem:[#allocation2 + $0x630] sm:$0xff]
    %v451 = vld [vmem:[#allocation2 + $0x638] sm:$0xff]
    %v452 = vld [vmem:[#allocation2 + $0x640] sm:$0xff]
    %v453 = vld [vmem:[#allocation2 + $0x648] sm:$0xff]
    %v454 = vld [vmem:[#allocation2 + $0x650] sm:$0xff]
    %v455 = vld [vmem:[#allocation2 + $0x658] sm:$0xff]
    %v456 = vld [vmem:[#allocation2 + $0x660] sm:$0xff]
    %v457 = vld [vmem:[#allocation2 + $0x668] sm:$0xff]
    %v458 = vld [vmem:[#allocation2 + $0x670] sm:$0xff]
    %v459 = vld [vmem:[#allocation2 + $0x678] sm:$0xff]
    %v460 = vld [vmem:[#allocation2 + $0x680] sm:$0xff]
    %v461 = vld [vmem:[#allocation2 + $0x688] sm:$0xff]
    %v462 = vld [vmem:[#allocation2 + $0x690] sm:$0xff]
    %v463 = vld [vmem:[#allocation2 + $0x698] sm:$0xff]
    %v464 = vld [vmem:[#allocation2 + $0x6a0] sm:$0xff]
    %v465 = vld [vmem:[#allocation2 + $0x6a8] sm:$0xff]
    %v466 = vld [vmem:[#allocation2 + $0x6b0] sm:$0xff]
    %v467 = vld [vmem:[#allocation2 + $0x6b8] sm:$0xff]
    %v468 = vld [vmem:[#allocation2 + $0x6c0] sm:$0xff]
    %v469 = vld [vmem:[#allocation2 + $0x6c8] sm:$0xff]
    %v470 = vld [vmem:[#allocation2 + $0x6d0] sm:$0xff]
    %v471 = vld [vmem:[#allocation2 + $0x6d8] sm:$0xff]
    %v472 = vld [vmem:[#allocation2 + $0x6e0] sm:$0xff]
    %v473 = vld [vmem:[#allocation2 + $0x6e8] sm:$0xff]
    %v474 = vld [vmem:[#allocation2 + $0x6f0] sm:$0xff]
    %v475 = vld [vmem:[#allocation2 + $0x6f8] sm:$0xff]
    %v476 = vld [vmem:[#allocation2 + $0x700] sm:$0xff]
    %v477 = vld [vmem:[#allocation2 + $0x708] sm:$0xff]
    %v478 = vld [vmem:[#allocation2 + $0x710] sm:$0xff]
    %v479 = vld [vmem:[#allocation2 + $0x718] sm:$0xff]
    %v480 = vld [vmem:[#allocation2 + $0x720] sm:$0xff]
    %v481 = vld [vmem:[#allocation2 + $0x728] sm:$0xff]
    %v482 = vld [vmem:[#allocation2 + $0x730] sm:$0xff]
    %v483 = vld [vmem:[#allocation2 + $0x738] sm:$0xff]
    %v484 = vld [vmem:[#allocation2 + $0x740] sm:$0xff]
    %v485 = vld [vmem:[#allocation2 + $0x748] sm:$0xff]
    %v486 = vld [vmem:[#allocation2 + $0x750] sm:$0xff]
    %v487 = vld [vmem:[#allocation2 + $0x758] sm:$0xff]
    %v488 = vld [vmem:[#allocation2 + $0x760] sm:$0xff]
    %v489 = vld [vmem:[#allocation2 + $0x768] sm:$0xff]
    %v490 = vld [vmem:[#allocation2 + $0x770] sm:$0xff]
    %v491 = vld [vmem:[#allocation2 + $0x778] sm:$0xff]
    %v492 = vld [vmem:[#allocation2 + $0x780] sm:$0xff]
    %v493 = vld [vmem:[#allocation2 + $0x788] sm:$0xff]
    %v494 = vld [vmem:[#allocation2 + $0x790] sm:$0xff]
    %v495 = vld [vmem:[#allocation2 + $0x798] sm:$0xff]
    %v496 = vld [vmem:[#allocation2 + $0x7a0] sm:$0xff]
    %v497 = vld [vmem:[#allocation2 + $0x7a8] sm:$0xff]
    %v498 = vld [vmem:[#allocation2 + $0x7b0] sm:$0xff]
    %v499 = vld [vmem:[#allocation2 + $0x7b8] sm:$0xff]
    %v500 = vld [vmem:[#allocation2 + $0x7c0] sm:$0xff]
    %v501 = vld [vmem:[#allocation2 + $0x7c8] sm:$0xff]
    %v502 = vld [vmem:[#allocation2 + $0x7d0] sm:$0xff]
    %v503 = vld [vmem:[#allocation2 + $0x7d8] sm:$0xff]
    %v504 = vld [vmem:[#allocation2 + $0x7e0] sm:$0xff]
    %v505 = vld [vmem:[#allocation2 + $0x7e8] sm:$0xff]
    %v506 = vld [vmem:[#allocation2 + $0x7f0] sm:$0xff]
    %v507 = vld [vmem:[#allocation2 + $0x7f8] sm:$0xff]
    %v508 = vld [vmem:[#allocation2 + $0x800] sm:$0xff]
    %v509 = vld [vmem:[#allocation2 + $0x808] sm:$0xff]
    %v510 = vld [vmem:[#allocation2 + $0x810] sm:$0xff]
    %v511 = vld [vmem:[#allocation2 + $0x818] sm:$0xff]
    %v512 = vld [vmem:[#allocation2 + $0x820] sm:$0xff]
    %v513 = vld [vmem:[#allocation2 + $0x828] sm:$0xff]
    %v514 = vld [vmem:[#allocation2 + $0x830] sm:$0xff]
    %v515 = vld [vmem:[#allocation2 + $0x838] sm:$0xff]
    %v516 = vld [vmem:[#allocation2 + $0x840] sm:$0xff]
    %v517 = vld [vmem:[#allocation2 + $0x848] sm:$0xff]
    %v518 = vld [vmem:[#allocation2 + $0x850] sm:$0xff]
    %v519 = vld [vmem:[#allocation2 + $0x858] sm:$0xff]
    %v520 = vld [vmem:[#allocation2 + $0x860] sm:$0xff]
    %v521 = vld [vmem:[#allocation2 + $0x868] sm:$0xff]
    %v522 = vld [vmem:[#allocation2 + $0x870] sm:$0xff]
    %v523 = vld [vmem:[#allocation2 + $0x878] sm:$0xff]
    %v524 = vld [vmem:[#allocation2 + $0x880] sm:$0xff]
    %v525 = vld [vmem:[#allocation2 + $0x888] sm:$0xff]
    %v526 = vld [vmem:[#allocation2 + $0x890] sm:$0xff]
    %v527 = vld [vmem:[#allocation2 + $0x898] sm:$0xff]
    %v528 = vld [vmem:[#allocation2 + $0x8a0] sm:$0xff]
    %v529 = vld [vmem:[#allocation2 + $0x8a8] sm:$0xff]
    %v530 = vld [vmem:[#allocation2 + $0x8b0] sm:$0xff]
    %v531 = vld [vmem:[#allocation2 + $0x8b8] sm:$0xff]
    %v532 = vld [vmem:[#allocation2 + $0x8c0] sm:$0xff]
    %v533 = vld [vmem:[#allocation2 + $0x8c8] sm:$0xff]
    %v534 = vld [vmem:[#allocation2 + $0x8d0] sm:$0xff]
    %v535 = vld [vmem:[#allocation2 + $0x8d8] sm:$0xff]
    %v536 = vld [vmem:[#allocation2 + $0x8e0] sm:$0xff]
    %v537 = vld [vmem:[#allocation2 + $0x8e8] sm:$0xff]
    %v538 = vld [vmem:[#allocation2 + $0x8f0] sm:$0xff]
    %v539 = vld [vmem:[#allocation2 + $0x8f8] sm:$0xff]
    %v540 = vld [vmem:[#allocation2 + $0x900] sm:$0xff]
    %v541 = vld [vmem:[#allocation2 + $0x908] sm:$0xff]
    %v542 = vld [vmem:[#allocation2 + $0x910] sm:$0xff]
    %v543 = vld [vmem:[#allocation2 + $0x918] sm:$0xff]
    %v544 = vld [vmem:[#allocation2 + $0x920] sm:$0xff]
    %v545 = vld [vmem:[#allocation2 + $0x928] sm:$0xff]
    %v546 = vld [vmem:[#allocation2 + $0x930] sm:$0xff]
    %v547 = vld [vmem:[#allocation2 + $0x938] sm:$0xff]
    %v548 = vld [vmem:[#allocation2 + $0x940] sm:$0xff]
    %v549 = vld [vmem:[#allocation2 + $0x948] sm:$0xff]
    %v550 = vld [vmem:[#allocation2 + $0x950] sm:$0xff]
    %v551 = vld [vmem:[#allocation2 + $0x958] sm:$0xff]
    %v552 = vld [vmem:[#allocation2 + $0x960] sm:$0xff]
    %v553 = vld [vmem:[#allocation2 + $0x968] sm:$0xff]
    %v554 = vld [vmem:[#allocation2 + $0x970] sm:$0xff]
    %v555 = vld [vmem:[#allocation2 + $0x978] sm:$0xff]
    %v556 = vld [vmem:[#allocation2 + $0x980] sm:$0xff]
    %v557 = vld [vmem:[#allocation2 + $0x988] sm:$0xff]
    %v558 = vld [vmem:[#allocation2 + $0x990] sm:$0xff]
    %v559 = vld [vmem:[#allocation2 + $0x998] sm:$0xff]
    %v560 = vld [vmem:[#allocation2 + $0x9a0] sm:$0xff]
    %v561 = vld [vmem:[#allocation2 + $0x9a8] sm:$0xff]
    %v562 = vld [vmem:[#allocation2 + $0x9b0] sm:$0xff]
    %v563 = vld [vmem:[#allocation2 + $0x9b8] sm:$0xff]
    %v564 = vld [vmem:[#allocation2 + $0x9c0] sm:$0xff]
    %v565 = vld [vmem:[#allocation2 + $0x9c8] sm:$0xff]
    %v566 = vld [vmem:[#allocation2 + $0x9d0] sm:$0xff]
    %v567 = vld [vmem:[#allocation2 + $0x9d8] sm:$0xff]
    %v568 = vld [vmem:[#allocation2 + $0x9e0] sm:$0xff]
    %v569 = vld [vmem:[#allocation2 + $0x9e8] sm:$0xff]
    %v570 = vld [vmem:[#allocation2 + $0x9f0] sm:$0xff]
    %v571 = vld [vmem:[#allocation2 + $0x9f8] sm:$0xff]
    %v572 = vld [vmem:[#allocation2 + $0xa00] sm:$0xff]
    %v573 = vld [vmem:[#allocation2 + $0xa08] sm:$0xff]
    %v574 = vld [vmem:[#allocation2 + $0xa10] sm:$0xff]
    %v575 = vld [vmem:[#allocation2 + $0xa18] sm:$0xff]
    %v576 = vld [vmem:[#allocation2 + $0xa20] sm:$0xff]
    %v577 = vld [vmem:[#allocation2 + $0xa28] sm:$0xff]
    %v578 = vld [vmem:[#allocation2 + $0xa30] sm:$0xff]
    %v579 = vld [vmem:[#allocation2 + $0xa38] sm:$0xff]
    %v580 = vld [vmem:[#allocation2 + $0xa40] sm:$0xff]
    %v581 = vld [vmem:[#allocation2 + $0xa48] sm:$0xff]
    %v582 = vld [vmem:[#allocation2 + $0xa50] sm:$0xff]
    %v583 = vld [vmem:[#allocation2 + $0xa58] sm:$0xff]
    %v584 = vld [vmem:[#allocation2 + $0xa60] sm:$0xff]
    %v585 = vld [vmem:[#allocation2 + $0xa68] sm:$0xff]
    %v586 = vld [vmem:[#allocation2 + $0xa70] sm:$0xff]
    %v587 = vld [vmem:[#allocation2 + $0xa78] sm:$0xff]
    %v588 = vld [vmem:[#allocation2 + $0xa80] sm:$0xff]
    %v589 = vld [vmem:[#allocation2 + $0xa88] sm:$0xff]
    %v590 = vld [vmem:[#allocation2 + $0xa90] sm:$0xff]
    %v591 = vld [vmem:[#allocation2 + $0xa98] sm:$0xff]
    %v592 = vld [vmem:[#allocation2 + $0xaa0] sm:$0xff]
    %v593 = vld [vmem:[#allocation2 + $0xaa8] sm:$0xff]
    %v594 = vld [vmem:[#allocation2 + $0xab0] sm:$0xff]
    %v595 = vld [vmem:[#allocation2 + $0xab8] sm:$0xff]
    %v596 = vld [vmem:[#allocation2 + $0xac0] sm:$0xff]
    %v597 = vld [vmem:[#allocation2 + $0xac8] sm:$0xff]
    %v598 = vld [vmem:[#allocation2 + $0xad0] sm:$0xff]
    %v599 = vld [vmem:[#allocation2 + $0xad8] sm:$0xff]
    %v600 = vld [vmem:[#allocation2 + $0xae0] sm:$0xff]
    %v601 = vld [vmem:[#allocation2 + $0xae8] sm:$0xff]
    %v602 = vld [vmem:[#allocation2 + $0xaf0] sm:$0xff]
    %v603 = vld [vmem:[#allocation2 + $0xaf8] sm:$0xff]
    %v604 = vld [vmem:[#allocation2 + $0xb00] sm:$0xff]
    %v605 = vld [vmem:[#allocation2 + $0xb08] sm:$0xff]
    %v606 = vld [vmem:[#allocation2 + $0xb10] sm:$0xff]
    %v607 = vld [vmem:[#allocation2 + $0xb18] sm:$0xff]
    %v608 = vld [vmem:[#allocation2 + $0xb20] sm:$0xff]
    %v609 = vld [vmem:[#allocation2 + $0xb28] sm:$0xff]
    %v610 = vld [vmem:[#allocation2 + $0xb30] sm:$0xff]
    %v611 = vld [vmem:[#allocation2 + $0xb38] sm:$0xff]
    %v612 = vld [vmem:[#allocation2 + $0xb40] sm:$0xff]
    %v613 = vld [vmem:[#allocation2 + $0xb48] sm:$0xff]
    %v614 = vld [vmem:[#allocation2 + $0xb50] sm:$0xff]
    %v615 = vld [vmem:[#allocation2 + $0xb58] sm:$0xff]
    %v616 = vld [vmem:[#allocation2 + $0xb60] sm:$0xff]
    %v617 = vld [vmem:[#allocation2 + $0xb68] sm:$0xff]
    %v618 = vld [vmem:[#allocation2 + $0xb70] sm:$0xff]
    %v619 = vld [vmem:[#allocation2 + $0xb78] sm:$0xff]
    %v620 = vld [vmem:[#allocation2 + $0xb80] sm:$0xff]
    %v621 = vld [vmem:[#allocation2 + $0xb88] sm:$0xff]
    %v622 = vld [vmem:[#allocation2 + $0xb90] sm:$0xff]
    %v623 = vld [vmem:[#allocation2 + $0xb98] sm:$0xff]
    %v624 = vld [vmem:[#allocation2 + $0xba0] sm:$0xff]
    %v625 = vld [vmem:[#allocation2 + $0xba8] sm:$0xff]
    %v626 = vld [vmem:[#allocation2 + $0xbb0] sm:$0xff]
    %v627 = vld [vmem:[#allocation2 + $0xbb8] sm:$0xff]
    %v628 = vld [vmem:[#allocation2 + $0xbc0] sm:$0xff]
    %v629 = vld [vmem:[#allocation2 + $0xbc8] sm:$0xff]
    %v630 = vld [vmem:[#allocation2 + $0xbd0] sm:$0xff]
    %v631 = vld [vmem:[#allocation2 + $0xbd8] sm:$0xff]
    %v632 = vld [vmem:[#allocation2 + $0xbe0] sm:$0xff]
    %v633 = vld [vmem:[#allocation2 + $0xbe8] sm:$0xff]
    %v634 = vld [vmem:[#allocation2 + $0xbf0] sm:$0xff]
    %v635 = vld [vmem:[#allocation2 + $0xbf8] sm:$0xff]
    %v636 = vld [vmem:[#allocation5] sm:$0x3]
    %v638 = vlaneseq
    %v639 = vshrl.u32 %v638, 7
    %v640 = vsub.s32 0, %v639
    %v641 = vrot.slane %v636, %v640
    %v642 = vlaneseq
    %v643 = vshrl.u32 %v642, 7
    %v644 = vsub.s32 1, %v643
    %v645 = vrot.slane %v636, %v644
    %v1032 = vunpack.c.l.b16 %v252
    %v1033 = vunpack.c.h.b16 %v252
    %v1034 = vunpack.c.l.b16 %v253
    %v1035 = vunpack.c.h.b16 %v253
    %v1036 = vunpack.c.l.b16 %v254
    %v1037 = vunpack.c.h.b16 %v254
    %v1038 = vunpack.c.l.b16 %v255
    %v1039 = vunpack.c.h.b16 %v255
    %v1040 = vunpack.c.l.b16 %v256
    %v1041 = vunpack.c.h.b16 %v256
    %v1042 = vunpack.c.l.b16 %v257
    %v1043 = vunpack.c.h.b16 %v257
    %v1044 = vunpack.c.l.b16 %v258
    %v1045 = vunpack.c.h.b16 %v258
    %v1046 = vunpack.c.l.b16 %v259
    %v1047 = vunpack.c.h.b16 %v259
    %v1048 = vunpack.c.l.b16 %v260
    %v1049 = vunpack.c.h.b16 %v260
    %v1050 = vunpack.c.l.b16 %v261
    %v1051 = vunpack.c.h.b16 %v261
    %v1052 = vunpack.c.l.b16 %v262
    %v1053 = vunpack.c.h.b16 %v262
    %v1054 = vunpack.c.l.b16 %v263
    %v1055 = vunpack.c.h.b16 %v263
    %v1056 = vunpack.c.l.b16 %v264
    %v1057 = vunpack.c.h.b16 %v264
    %v1058 = vunpack.c.l.b16 %v265
    %v1059 = vunpack.c.h.b16 %v265
    %v1060 = vunpack.c.l.b16 %v266
    %v1061 = vunpack.c.h.b16 %v266
    %v1062 = vunpack.c.l.b16 %v267
    %v1063 = vunpack.c.h.b16 %v267
    %v1064 = vunpack.c.l.b16 %v268
    %v1065 = vunpack.c.h.b16 %v268
    %v1066 = vunpack.c.l.b16 %v269
    %v1067 = vunpack.c.h.b16 %v269
    %v1068 = vunpack.c.l.b16 %v270
    %v1069 = vunpack.c.h.b16 %v270
    %v1070 = vunpack.c.l.b16 %v271
    %v1071 = vunpack.c.h.b16 %v271
    %v1072 = vunpack.c.l.b16 %v272
    %v1073 = vunpack.c.h.b16 %v272
    %v1074 = vunpack.c.l.b16 %v273
    %v1075 = vunpack.c.h.b16 %v273
    %v1076 = vunpack.c.l.b16 %v274
    %v1077 = vunpack.c.h.b16 %v274
    %v1078 = vunpack.c.l.b16 %v275
    %v1079 = vunpack.c.h.b16 %v275
    %v1080 = vunpack.c.l.b16 %v276
    %v1081 = vunpack.c.h.b16 %v276
    %v1082 = vunpack.c.l.b16 %v277
    %v1083 = vunpack.c.h.b16 %v277
    %v1084 = vunpack.c.l.b16 %v278
    %v1085 = vunpack.c.h.b16 %v278
    %v1086 = vunpack.c.l.b16 %v279
    %v1087 = vunpack.c.h.b16 %v279
    %v1088 = vunpack.c.l.b16 %v280
    %v1089 = vunpack.c.h.b16 %v280
    %v1090 = vunpack.c.l.b16 %v281
    %v1091 = vunpack.c.h.b16 %v281
    %v1092 = vunpack.c.l.b16 %v282
    %v1093 = vunpack.c.h.b16 %v282
    %v1094 = vunpack.c.l.b16 %v283
    %v1095 = vunpack.c.h.b16 %v283
    %v1096 = vunpack.c.l.b16 %v284
    %v1097 = vunpack.c.h.b16 %v284
    %v1098 = vunpack.c.l.b16 %v285
    %v1099 = vunpack.c.h.b16 %v285
    %v1100 = vunpack.c.l.b16 %v286
    %v1101 = vunpack.c.h.b16 %v286
    %v1102 = vunpack.c.l.b16 %v287
    %v1103 = vunpack.c.h.b16 %v287
    %v1104 = vunpack.c.l.b16 %v288
    %v1105 = vunpack.c.h.b16 %v288
    %v1106 = vunpack.c.l.b16 %v289
    %v1107 = vunpack.c.h.b16 %v289
    %v1108 = vunpack.c.l.b16 %v290
    %v1109 = vunpack.c.h.b16 %v290
    %v1110 = vunpack.c.l.b16 %v291
    %v1111 = vunpack.c.h.b16 %v291
    %v1112 = vunpack.c.l.b16 %v292
    %v1113 = vunpack.c.h.b16 %v292
    %v1114 = vunpack.c.l.b16 %v293
    %v1115 = vunpack.c.h.b16 %v293
    %v1116 = vunpack.c.l.b16 %v294
    %v1117 = vunpack.c.h.b16 %v294
    %v1118 = vunpack.c.l.b16 %v295
    %v1119 = vunpack.c.h.b16 %v295
    %v1120 = vunpack.c.l.b16 %v296
    %v1121 = vunpack.c.h.b16 %v296
    %v1122 = vunpack.c.l.b16 %v297
    %v1123 = vunpack.c.h.b16 %v297
    %v1124 = vunpack.c.l.b16 %v298
    %v1125 = vunpack.c.h.b16 %v298
    %v1126 = vunpack.c.l.b16 %v299
    %v1127 = vunpack.c.h.b16 %v299
    %v1128 = vunpack.c.l.b16 %v300
    %v1129 = vunpack.c.h.b16 %v300
    %v1130 = vunpack.c.l.b16 %v301
    %v1131 = vunpack.c.h.b16 %v301
    %v1132 = vunpack.c.l.b16 %v302
    %v1133 = vunpack.c.h.b16 %v302
    %v1134 = vunpack.c.l.b16 %v303
    %v1135 = vunpack.c.h.b16 %v303
    %v1136 = vunpack.c.l.b16 %v304
    %v1137 = vunpack.c.h.b16 %v304
    %v1138 = vunpack.c.l.b16 %v305
    %v1139 = vunpack.c.h.b16 %v305
    %v1140 = vunpack.c.l.b16 %v306
    %v1141 = vunpack.c.h.b16 %v306
    %v1142 = vunpack.c.l.b16 %v307
    %v1143 = vunpack.c.h.b16 %v307
    %v1144 = vunpack.c.l.b16 %v308
    %v1145 = vunpack.c.h.b16 %v308
    %v1146 = vunpack.c.l.b16 %v309
    %v1147 = vunpack.c.h.b16 %v309
    %v1148 = vunpack.c.l.b16 %v310
    %v1149 = vunpack.c.h.b16 %v310
    %v1150 = vunpack.c.l.b16 %v311
    %v1151 = vunpack.c.h.b16 %v311
    %v1152 = vunpack.c.l.b16 %v312
    %v1153 = vunpack.c.h.b16 %v312
    %v1154 = vunpack.c.l.b16 %v313
    %v1155 = vunpack.c.h.b16 %v313
    %v1156 = vunpack.c.l.b16 %v314
    %v1157 = vunpack.c.h.b16 %v314
    %v1158 = vunpack.c.l.b16 %v315
    %v1159 = vunpack.c.h.b16 %v315
    %v1160 = vunpack.c.l.b16 %v316
    %v1161 = vunpack.c.h.b16 %v316
    %v1162 = vunpack.c.l.b16 %v317
    %v1163 = vunpack.c.h.b16 %v317
    %v1164 = vunpack.c.l.b16 %v318
    %v1165 = vunpack.c.h.b16 %v318
    %v1166 = vunpack.c.l.b16 %v319
    %v1167 = vunpack.c.h.b16 %v319
    %v1168 = vunpack.c.l.b16 %v320
    %v1169 = vunpack.c.h.b16 %v320
    %v1170 = vunpack.c.l.b16 %v321
    %v1171 = vunpack.c.h.b16 %v321
    %v1172 = vunpack.c.l.b16 %v322
    %v1173 = vunpack.c.h.b16 %v322
    %v1174 = vunpack.c.l.b16 %v323
    %v1175 = vunpack.c.h.b16 %v323
    %v1176 = vunpack.c.l.b16 %v324
    %v1177 = vunpack.c.h.b16 %v324
    %v1178 = vunpack.c.l.b16 %v325
    %v1179 = vunpack.c.h.b16 %v325
    %v1180 = vunpack.c.l.b16 %v326
    %v1181 = vunpack.c.h.b16 %v326
    %v1182 = vunpack.c.l.b16 %v327
    %v1183 = vunpack.c.h.b16 %v327
    %v1184 = vunpack.c.l.b16 %v328
    %v1185 = vunpack.c.h.b16 %v328
    %v1186 = vunpack.c.l.b16 %v329
    %v1187 = vunpack.c.h.b16 %v329
    %v1188 = vunpack.c.l.b16 %v330
    %v1189 = vunpack.c.h.b16 %v330
    %v1190 = vunpack.c.l.b16 %v331
    %v1191 = vunpack.c.h.b16 %v331
    %v1192 = vunpack.c.l.b16 %v332
    %v1193 = vunpack.c.h.b16 %v332
    %v1194 = vunpack.c.l.b16 %v333
    %v1195 = vunpack.c.h.b16 %v333
    %v1196 = vunpack.c.l.b16 %v334
    %v1197 = vunpack.c.h.b16 %v334
    %v1198 = vunpack.c.l.b16 %v335
    %v1199 = vunpack.c.h.b16 %v335
    %v1200 = vunpack.c.l.b16 %v336
    %v1201 = vunpack.c.h.b16 %v336
    %v1202 = vunpack.c.l.b16 %v337
    %v1203 = vunpack.c.h.b16 %v337
    %v1204 = vunpack.c.l.b16 %v338
    %v1205 = vunpack.c.h.b16 %v338
    %v1206 = vunpack.c.l.b16 %v339
    %v1207 = vunpack.c.h.b16 %v339
    %v1208 = vunpack.c.l.b16 %v340
    %v1209 = vunpack.c.h.b16 %v340
    %v1210 = vunpack.c.l.b16 %v341
    %v1211 = vunpack.c.h.b16 %v341
    %v1212 = vunpack.c.l.b16 %v342
    %v1213 = vunpack.c.h.b16 %v342
    %v1214 = vunpack.c.l.b16 %v343
    %v1215 = vunpack.c.h.b16 %v343
    %v1216 = vunpack.c.l.b16 %v344
    %v1217 = vunpack.c.h.b16 %v344
    %v1218 = vunpack.c.l.b16 %v345
    %v1219 = vunpack.c.h.b16 %v345
    %v1220 = vunpack.c.l.b16 %v346
    %v1221 = vunpack.c.h.b16 %v346
    %v1222 = vunpack.c.l.b16 %v347
    %v1223 = vunpack.c.h.b16 %v347
    %v1224 = vunpack.c.l.b16 %v348
    %v1225 = vunpack.c.h.b16 %v348
    %v1226 = vunpack.c.l.b16 %v349
    %v1227 = vunpack.c.h.b16 %v349
    %v1228 = vunpack.c.l.b16 %v350
    %v1229 = vunpack.c.h.b16 %v350
    %v1230 = vunpack.c.l.b16 %v351
    %v1231 = vunpack.c.h.b16 %v351
    %v1232 = vunpack.c.l.b16 %v352
    %v1233 = vunpack.c.h.b16 %v352
    %v1234 = vunpack.c.l.b16 %v353
    %v1235 = vunpack.c.h.b16 %v353
    %v1236 = vunpack.c.l.b16 %v354
    %v1237 = vunpack.c.h.b16 %v354
    %v1238 = vunpack.c.l.b16 %v355
    %v1239 = vunpack.c.h.b16 %v355
    %v1240 = vunpack.c.l.b16 %v356
    %v1241 = vunpack.c.h.b16 %v356
    %v1242 = vunpack.c.l.b16 %v357
    %v1243 = vunpack.c.h.b16 %v357
    %v1244 = vunpack.c.l.b16 %v358
    %v1245 = vunpack.c.h.b16 %v358
    %v1246 = vunpack.c.l.b16 %v359
    %v1247 = vunpack.c.h.b16 %v359
    %v1248 = vunpack.c.l.b16 %v360
    %v1249 = vunpack.c.h.b16 %v360
    %v1250 = vunpack.c.l.b16 %v361
    %v1251 = vunpack.c.h.b16 %v361
    %v1252 = vunpack.c.l.b16 %v362
    %v1253 = vunpack.c.h.b16 %v362
    %v1254 = vunpack.c.l.b16 %v363
    %v1255 = vunpack.c.h.b16 %v363
    %v1256 = vunpack.c.l.b16 %v364
    %v1257 = vunpack.c.h.b16 %v364
    %v1258 = vunpack.c.l.b16 %v365
    %v1259 = vunpack.c.h.b16 %v365
    %v1260 = vunpack.c.l.b16 %v366
    %v1261 = vunpack.c.h.b16 %v366
    %v1262 = vunpack.c.l.b16 %v367
    %v1263 = vunpack.c.h.b16 %v367
    %v1264 = vunpack.c.l.b16 %v368
    %v1265 = vunpack.c.h.b16 %v368
    %v1266 = vunpack.c.l.b16 %v369
    %v1267 = vunpack.c.h.b16 %v369
    %v1268 = vunpack.c.l.b16 %v370
    %v1269 = vunpack.c.h.b16 %v370
    %v1270 = vunpack.c.l.b16 %v371
    %v1271 = vunpack.c.h.b16 %v371
    %v1272 = vunpack.c.l.b16 %v372
    %v1273 = vunpack.c.h.b16 %v372
    %v1274 = vunpack.c.l.b16 %v373
    %v1275 = vunpack.c.h.b16 %v373
    %v1276 = vunpack.c.l.b16 %v374
    %v1277 = vunpack.c.h.b16 %v374
    %v1278 = vunpack.c.l.b16 %v375
    %v1279 = vunpack.c.h.b16 %v375
    %v1280 = vunpack.c.l.b16 %v376
    %v1281 = vunpack.c.h.b16 %v376
    %v1282 = vunpack.c.l.b16 %v377
    %v1283 = vunpack.c.h.b16 %v377
    %v1284 = vunpack.c.l.b16 %v378
    %v1285 = vunpack.c.h.b16 %v378
    %v1286 = vunpack.c.l.b16 %v379
    %v1287 = vunpack.c.h.b16 %v379
    %v1288 = vunpack.c.l.b16 %v380
    %v1289 = vunpack.c.h.b16 %v380
    %v1290 = vunpack.c.l.b16 %v381
    %v1291 = vunpack.c.h.b16 %v381
    %v1292 = vunpack.c.l.b16 %v382
    %v1293 = vunpack.c.h.b16 %v382
    %v1294 = vunpack.c.l.b16 %v383
    %v1295 = vunpack.c.h.b16 %v383
    %v1296 = vunpack.c.l.b16 %v384
    %v1297 = vunpack.c.h.b16 %v384
    %v1298 = vunpack.c.l.b16 %v385
    %v1299 = vunpack.c.h.b16 %v385
    %v1300 = vunpack.c.l.b16 %v386
    %v1301 = vunpack.c.h.b16 %v386
    %v1302 = vunpack.c.l.b16 %v387
    %v1303 = vunpack.c.h.b16 %v387
    %v1304 = vunpack.c.l.b16 %v388
    %v1305 = vunpack.c.h.b16 %v388
    %v1306 = vunpack.c.l.b16 %v389
    %v1307 = vunpack.c.h.b16 %v389
    %v1308 = vunpack.c.l.b16 %v390
    %v1309 = vunpack.c.h.b16 %v390
    %v1310 = vunpack.c.l.b16 %v391
    %v1311 = vunpack.c.h.b16 %v391
    %v1312 = vunpack.c.l.b16 %v392
    %v1313 = vunpack.c.h.b16 %v392
    %v1314 = vunpack.c.l.b16 %v393
    %v1315 = vunpack.c.h.b16 %v393
    %v1316 = vunpack.c.l.b16 %v394
    %v1317 = vunpack.c.h.b16 %v394
    %v1318 = vunpack.c.l.b16 %v395
    %v1319 = vunpack.c.h.b16 %v395
    %v1320 = vunpack.c.l.b16 %v396
    %v1321 = vunpack.c.h.b16 %v396
    %v1322 = vunpack.c.l.b16 %v397
    %v1323 = vunpack.c.h.b16 %v397
    %v1324 = vunpack.c.l.b16 %v398
    %v1325 = vunpack.c.h.b16 %v398
    %v1326 = vunpack.c.l.b16 %v399
    %v1327 = vunpack.c.h.b16 %v399
    %v1328 = vunpack.c.l.b16 %v400
    %v1329 = vunpack.c.h.b16 %v400
    %v1330 = vunpack.c.l.b16 %v401
    %v1331 = vunpack.c.h.b16 %v401
    %v1332 = vunpack.c.l.b16 %v402
    %v1333 = vunpack.c.h.b16 %v402
    %v1334 = vunpack.c.l.b16 %v403
    %v1335 = vunpack.c.h.b16 %v403
    %v1336 = vunpack.c.l.b16 %v404
    %v1337 = vunpack.c.h.b16 %v404
    %v1338 = vunpack.c.l.b16 %v405
    %v1339 = vunpack.c.h.b16 %v405
    %v1340 = vunpack.c.l.b16 %v406
    %v1341 = vunpack.c.h.b16 %v406
    %v1342 = vunpack.c.l.b16 %v407
    %v1343 = vunpack.c.h.b16 %v407
    %v1344 = vunpack.c.l.b16 %v408
    %v1345 = vunpack.c.h.b16 %v408
    %v1346 = vunpack.c.l.b16 %v409
    %v1347 = vunpack.c.h.b16 %v409
    %v1348 = vunpack.c.l.b16 %v410
    %v1349 = vunpack.c.h.b16 %v410
    %v1350 = vunpack.c.l.b16 %v411
    %v1351 = vunpack.c.h.b16 %v411
    %v1352 = vunpack.c.l.b16 %v412
    %v1353 = vunpack.c.h.b16 %v412
    %v1354 = vunpack.c.l.b16 %v413
    %v1355 = vunpack.c.h.b16 %v413
    %v1356 = vunpack.c.l.b16 %v414
    %v1357 = vunpack.c.h.b16 %v414
    %v1358 = vunpack.c.l.b16 %v415
    %v1359 = vunpack.c.h.b16 %v415
    %v1360 = vunpack.c.l.b16 %v416
    %v1361 = vunpack.c.h.b16 %v416
    %v1362 = vunpack.c.l.b16 %v417
    %v1363 = vunpack.c.h.b16 %v417
    %v1364 = vunpack.c.l.b16 %v418
    %v1365 = vunpack.c.h.b16 %v418
    %v1366 = vunpack.c.l.b16 %v419
    %v1367 = vunpack.c.h.b16 %v419
    %v1368 = vunpack.c.l.b16 %v420
    %v1369 = vunpack.c.h.b16 %v420
    %v1370 = vunpack.c.l.b16 %v421
    %v1371 = vunpack.c.h.b16 %v421
    %v1372 = vunpack.c.l.b16 %v422
    %v1373 = vunpack.c.h.b16 %v422
    %v1374 = vunpack.c.l.b16 %v423
    %v1375 = vunpack.c.h.b16 %v423
    %v1376 = vunpack.c.l.b16 %v424
    %v1377 = vunpack.c.h.b16 %v424
    %v1378 = vunpack.c.l.b16 %v425
    %v1379 = vunpack.c.h.b16 %v425
    %v1380 = vunpack.c.l.b16 %v426
    %v1381 = vunpack.c.h.b16 %v426
    %v1382 = vunpack.c.l.b16 %v427
    %v1383 = vunpack.c.h.b16 %v427
    %v1384 = vunpack.c.l.b16 %v428
    %v1385 = vunpack.c.h.b16 %v428
    %v1386 = vunpack.c.l.b16 %v429
    %v1387 = vunpack.c.h.b16 %v429
    %v1388 = vunpack.c.l.b16 %v430
    %v1389 = vunpack.c.h.b16 %v430
    %v1390 = vunpack.c.l.b16 %v431
    %v1391 = vunpack.c.h.b16 %v431
    %v1392 = vunpack.c.l.b16 %v432
    %v1393 = vunpack.c.h.b16 %v432
    %v1394 = vunpack.c.l.b16 %v433
    %v1395 = vunpack.c.h.b16 %v433
    %v1396 = vunpack.c.l.b16 %v434
    %v1397 = vunpack.c.h.b16 %v434
    %v1398 = vunpack.c.l.b16 %v435
    %v1399 = vunpack.c.h.b16 %v435
    %v1400 = vunpack.c.l.b16 %v436
    %v1401 = vunpack.c.h.b16 %v436
    %v1402 = vunpack.c.l.b16 %v437
    %v1403 = vunpack.c.h.b16 %v437
    %v1404 = vunpack.c.l.b16 %v438
    %v1405 = vunpack.c.h.b16 %v438
    %v1406 = vunpack.c.l.b16 %v439
    %v1407 = vunpack.c.h.b16 %v439
    %v1408 = vunpack.c.l.b16 %v440
    %v1409 = vunpack.c.h.b16 %v440
    %v1410 = vunpack.c.l.b16 %v441
    %v1411 = vunpack.c.h.b16 %v441
    %v1412 = vunpack.c.l.b16 %v442
    %v1413 = vunpack.c.h.b16 %v442
    %v1414 = vunpack.c.l.b16 %v443
    %v1415 = vunpack.c.h.b16 %v443
    %v1416 = vunpack.c.l.b16 %v444
    %v1417 = vunpack.c.h.b16 %v444
    %v1418 = vunpack.c.l.b16 %v445
    %v1419 = vunpack.c.h.b16 %v445
    %v1420 = vunpack.c.l.b16 %v446
    %v1421 = vunpack.c.h.b16 %v446
    %v1422 = vunpack.c.l.b16 %v447
    %v1423 = vunpack.c.h.b16 %v447
    %v1424 = vunpack.c.l.b16 %v448
    %v1425 = vunpack.c.h.b16 %v448
    %v1426 = vunpack.c.l.b16 %v449
    %v1427 = vunpack.c.h.b16 %v449
    %v1428 = vunpack.c.l.b16 %v450
    %v1429 = vunpack.c.h.b16 %v450
    %v1430 = vunpack.c.l.b16 %v451
    %v1431 = vunpack.c.h.b16 %v451
    %v1432 = vunpack.c.l.b16 %v452
    %v1433 = vunpack.c.h.b16 %v452
    %v1434 = vunpack.c.l.b16 %v453
    %v1435 = vunpack.c.h.b16 %v453
    %v1436 = vunpack.c.l.b16 %v454
    %v1437 = vunpack.c.h.b16 %v454
    %v1438 = vunpack.c.l.b16 %v455
    %v1439 = vunpack.c.h.b16 %v455
    %v1440 = vunpack.c.l.b16 %v456
    %v1441 = vunpack.c.h.b16 %v456
    %v1442 = vunpack.c.l.b16 %v457
    %v1443 = vunpack.c.h.b16 %v457
    %v1444 = vunpack.c.l.b16 %v458
    %v1445 = vunpack.c.h.b16 %v458
    %v1446 = vunpack.c.l.b16 %v459
    %v1447 = vunpack.c.h.b16 %v459
    %v1448 = vunpack.c.l.b16 %v460
    %v1449 = vunpack.c.h.b16 %v460
    %v1450 = vunpack.c.l.b16 %v461
    %v1451 = vunpack.c.h.b16 %v461
    %v1452 = vunpack.c.l.b16 %v462
    %v1453 = vunpack.c.h.b16 %v462
    %v1454 = vunpack.c.l.b16 %v463
    %v1455 = vunpack.c.h.b16 %v463
    %v1456 = vunpack.c.l.b16 %v464
    %v1457 = vunpack.c.h.b16 %v464
    %v1458 = vunpack.c.l.b16 %v465
    %v1459 = vunpack.c.h.b16 %v465
    %v1460 = vunpack.c.l.b16 %v466
    %v1461 = vunpack.c.h.b16 %v466
    %v1462 = vunpack.c.l.b16 %v467
    %v1463 = vunpack.c.h.b16 %v467
    %v1464 = vunpack.c.l.b16 %v468
    %v1465 = vunpack.c.h.b16 %v468
    %v1466 = vunpack.c.l.b16 %v469
    %v1467 = vunpack.c.h.b16 %v469
    %v1468 = vunpack.c.l.b16 %v470
    %v1469 = vunpack.c.h.b16 %v470
    %v1470 = vunpack.c.l.b16 %v471
    %v1471 = vunpack.c.h.b16 %v471
    %v1472 = vunpack.c.l.b16 %v472
    %v1473 = vunpack.c.h.b16 %v472
    %v1474 = vunpack.c.l.b16 %v473
    %v1475 = vunpack.c.h.b16 %v473
    %v1476 = vunpack.c.l.b16 %v474
    %v1477 = vunpack.c.h.b16 %v474
    %v1478 = vunpack.c.l.b16 %v475
    %v1479 = vunpack.c.h.b16 %v475
    %v1480 = vunpack.c.l.b16 %v476
    %v1481 = vunpack.c.h.b16 %v476
    %v1482 = vunpack.c.l.b16 %v477
    %v1483 = vunpack.c.h.b16 %v477
    %v1484 = vunpack.c.l.b16 %v478
    %v1485 = vunpack.c.h.b16 %v478
    %v1486 = vunpack.c.l.b16 %v479
    %v1487 = vunpack.c.h.b16 %v479
    %v1488 = vunpack.c.l.b16 %v480
    %v1489 = vunpack.c.h.b16 %v480
    %v1490 = vunpack.c.l.b16 %v481
    %v1491 = vunpack.c.h.b16 %v481
    %v1492 = vunpack.c.l.b16 %v482
    %v1493 = vunpack.c.h.b16 %v482
    %v1494 = vunpack.c.l.b16 %v483
    %v1495 = vunpack.c.h.b16 %v483
    %v1496 = vunpack.c.l.b16 %v484
    %v1497 = vunpack.c.h.b16 %v484
    %v1498 = vunpack.c.l.b16 %v485
    %v1499 = vunpack.c.h.b16 %v485
    %v1500 = vunpack.c.l.b16 %v486
    %v1501 = vunpack.c.h.b16 %v486
    %v1502 = vunpack.c.l.b16 %v487
    %v1503 = vunpack.c.h.b16 %v487
    %v1504 = vunpack.c.l.b16 %v488
    %v1505 = vunpack.c.h.b16 %v488
    %v1506 = vunpack.c.l.b16 %v489
    %v1507 = vunpack.c.h.b16 %v489
    %v1508 = vunpack.c.l.b16 %v490
    %v1509 = vunpack.c.h.b16 %v490
    %v1510 = vunpack.c.l.b16 %v491
    %v1511 = vunpack.c.h.b16 %v491
    %v1512 = vunpack.c.l.b16 %v492
    %v1513 = vunpack.c.h.b16 %v492
    %v1514 = vunpack.c.l.b16 %v493
    %v1515 = vunpack.c.h.b16 %v493
    %v1516 = vunpack.c.l.b16 %v494
    %v1517 = vunpack.c.h.b16 %v494
    %v1518 = vunpack.c.l.b16 %v495
    %v1519 = vunpack.c.h.b16 %v495
    %v1520 = vunpack.c.l.b16 %v496
    %v1521 = vunpack.c.h.b16 %v496
    %v1522 = vunpack.c.l.b16 %v497
    %v1523 = vunpack.c.h.b16 %v497
    %v1524 = vunpack.c.l.b16 %v498
    %v1525 = vunpack.c.h.b16 %v498
    %v1526 = vunpack.c.l.b16 %v499
    %v1527 = vunpack.c.h.b16 %v499
    %v1528 = vunpack.c.l.b16 %v500
    %v1529 = vunpack.c.h.b16 %v500
    %v1530 = vunpack.c.l.b16 %v501
    %v1531 = vunpack.c.h.b16 %v501
    %v1532 = vunpack.c.l.b16 %v502
    %v1533 = vunpack.c.h.b16 %v502
    %v1534 = vunpack.c.l.b16 %v503
    %v1535 = vunpack.c.h.b16 %v503
    %v1536 = vunpack.c.l.b16 %v504
    %v1537 = vunpack.c.h.b16 %v504
    %v1538 = vunpack.c.l.b16 %v505
    %v1539 = vunpack.c.h.b16 %v505
    %v1540 = vunpack.c.l.b16 %v506
    %v1541 = vunpack.c.h.b16 %v506
    %v1542 = vunpack.c.l.b16 %v507
    %v1543 = vunpack.c.h.b16 %v507
    %v1544 = vunpack.c.l.b16 %v508
    %v1545 = vunpack.c.h.b16 %v508
    %v1546 = vunpack.c.l.b16 %v509
    %v1547 = vunpack.c.h.b16 %v509
    %v1548 = vunpack.c.l.b16 %v510
    %v1549 = vunpack.c.h.b16 %v510
    %v1550 = vunpack.c.l.b16 %v511
    %v1551 = vunpack.c.h.b16 %v511
    %v1552 = vunpack.c.l.b16 %v512
    %v1553 = vunpack.c.h.b16 %v512
    %v1554 = vunpack.c.l.b16 %v513
    %v1555 = vunpack.c.h.b16 %v513
    %v1556 = vunpack.c.l.b16 %v514
    %v1557 = vunpack.c.h.b16 %v514
    %v1558 = vunpack.c.l.b16 %v515
    %v1559 = vunpack.c.h.b16 %v515
    %v1560 = vunpack.c.l.b16 %v516
    %v1561 = vunpack.c.h.b16 %v516
    %v1562 = vunpack.c.l.b16 %v517
    %v1563 = vunpack.c.h.b16 %v517
    %v1564 = vunpack.c.l.b16 %v518
    %v1565 = vunpack.c.h.b16 %v518
    %v1566 = vunpack.c.l.b16 %v519
    %v1567 = vunpack.c.h.b16 %v519
    %v1568 = vunpack.c.l.b16 %v520
    %v1569 = vunpack.c.h.b16 %v520
    %v1570 = vunpack.c.l.b16 %v521
    %v1571 = vunpack.c.h.b16 %v521
    %v1572 = vunpack.c.l.b16 %v522
    %v1573 = vunpack.c.h.b16 %v522
    %v1574 = vunpack.c.l.b16 %v523
    %v1575 = vunpack.c.h.b16 %v523
    %v1576 = vunpack.c.l.b16 %v524
    %v1577 = vunpack.c.h.b16 %v524
    %v1578 = vunpack.c.l.b16 %v525
    %v1579 = vunpack.c.h.b16 %v525
    %v1580 = vunpack.c.l.b16 %v526
    %v1581 = vunpack.c.h.b16 %v526
    %v1582 = vunpack.c.l.b16 %v527
    %v1583 = vunpack.c.h.b16 %v527
    %v1584 = vunpack.c.l.b16 %v528
    %v1585 = vunpack.c.h.b16 %v528
    %v1586 = vunpack.c.l.b16 %v529
    %v1587 = vunpack.c.h.b16 %v529
    %v1588 = vunpack.c.l.b16 %v530
    %v1589 = vunpack.c.h.b16 %v530
    %v1590 = vunpack.c.l.b16 %v531
    %v1591 = vunpack.c.h.b16 %v531
    %v1592 = vunpack.c.l.b16 %v532
    %v1593 = vunpack.c.h.b16 %v532
    %v1594 = vunpack.c.l.b16 %v533
    %v1595 = vunpack.c.h.b16 %v533
    %v1596 = vunpack.c.l.b16 %v534
    %v1597 = vunpack.c.h.b16 %v534
    %v1598 = vunpack.c.l.b16 %v535
    %v1599 = vunpack.c.h.b16 %v535
    %v1600 = vunpack.c.l.b16 %v536
    %v1601 = vunpack.c.h.b16 %v536
    %v1602 = vunpack.c.l.b16 %v537
    %v1603 = vunpack.c.h.b16 %v537
    %v1604 = vunpack.c.l.b16 %v538
    %v1605 = vunpack.c.h.b16 %v538
    %v1606 = vunpack.c.l.b16 %v539
    %v1607 = vunpack.c.h.b16 %v539
    %v1608 = vunpack.c.l.b16 %v540
    %v1609 = vunpack.c.h.b16 %v540
    %v1610 = vunpack.c.l.b16 %v541
    %v1611 = vunpack.c.h.b16 %v541
    %v1612 = vunpack.c.l.b16 %v542
    %v1613 = vunpack.c.h.b16 %v542
    %v1614 = vunpack.c.l.b16 %v543
    %v1615 = vunpack.c.h.b16 %v543
    %v1616 = vunpack.c.l.b16 %v544
    %v1617 = vunpack.c.h.b16 %v544
    %v1618 = vunpack.c.l.b16 %v545
    %v1619 = vunpack.c.h.b16 %v545
    %v1620 = vunpack.c.l.b16 %v546
    %v1621 = vunpack.c.h.b16 %v546
    %v1622 = vunpack.c.l.b16 %v547
    %v1623 = vunpack.c.h.b16 %v547
    %v1624 = vunpack.c.l.b16 %v548
    %v1625 = vunpack.c.h.b16 %v548
    %v1626 = vunpack.c.l.b16 %v549
    %v1627 = vunpack.c.h.b16 %v549
    %v1628 = vunpack.c.l.b16 %v550
    %v1629 = vunpack.c.h.b16 %v550
    %v1630 = vunpack.c.l.b16 %v551
    %v1631 = vunpack.c.h.b16 %v551
    %v1632 = vunpack.c.l.b16 %v552
    %v1633 = vunpack.c.h.b16 %v552
    %v1634 = vunpack.c.l.b16 %v553
    %v1635 = vunpack.c.h.b16 %v553
    %v1636 = vunpack.c.l.b16 %v554
    %v1637 = vunpack.c.h.b16 %v554
    %v1638 = vunpack.c.l.b16 %v555
    %v1639 = vunpack.c.h.b16 %v555
    %v1640 = vunpack.c.l.b16 %v556
    %v1641 = vunpack.c.h.b16 %v556
    %v1642 = vunpack.c.l.b16 %v557
    %v1643 = vunpack.c.h.b16 %v557
    %v1644 = vunpack.c.l.b16 %v558
    %v1645 = vunpack.c.h.b16 %v558
    %v1646 = vunpack.c.l.b16 %v559
    %v1647 = vunpack.c.h.b16 %v559
    %v1648 = vunpack.c.l.b16 %v560
    %v1649 = vunpack.c.h.b16 %v560
    %v1650 = vunpack.c.l.b16 %v561
    %v1651 = vunpack.c.h.b16 %v561
    %v1652 = vunpack.c.l.b16 %v562
    %v1653 = vunpack.c.h.b16 %v562
    %v1654 = vunpack.c.l.b16 %v563
    %v1655 = vunpack.c.h.b16 %v563
    %v1656 = vunpack.c.l.b16 %v564
    %v1657 = vunpack.c.h.b16 %v564
    %v1658 = vunpack.c.l.b16 %v565
    %v1659 = vunpack.c.h.b16 %v565
    %v1660 = vunpack.c.l.b16 %v566
    %v1661 = vunpack.c.h.b16 %v566
    %v1662 = vunpack.c.l.b16 %v567
    %v1663 = vunpack.c.h.b16 %v567
    %v1664 = vunpack.c.l.b16 %v568
    %v1665 = vunpack.c.h.b16 %v568
    %v1666 = vunpack.c.l.b16 %v569
    %v1667 = vunpack.c.h.b16 %v569
    %v1668 = vunpack.c.l.b16 %v570
    %v1669 = vunpack.c.h.b16 %v570
    %v1670 = vunpack.c.l.b16 %v571
    %v1671 = vunpack.c.h.b16 %v571
    %v1672 = vunpack.c.l.b16 %v572
    %v1673 = vunpack.c.h.b16 %v572
    %v1674 = vunpack.c.l.b16 %v573
    %v1675 = vunpack.c.h.b16 %v573
    %v1676 = vunpack.c.l.b16 %v574
    %v1677 = vunpack.c.h.b16 %v574
    %v1678 = vunpack.c.l.b16 %v575
    %v1679 = vunpack.c.h.b16 %v575
    %v1680 = vunpack.c.l.b16 %v576
    %v1681 = vunpack.c.h.b16 %v576
    %v1682 = vunpack.c.l.b16 %v577
    %v1683 = vunpack.c.h.b16 %v577
    %v1684 = vunpack.c.l.b16 %v578
    %v1685 = vunpack.c.h.b16 %v578
    %v1686 = vunpack.c.l.b16 %v579
    %v1687 = vunpack.c.h.b16 %v579
    %v1688 = vunpack.c.l.b16 %v580
    %v1689 = vunpack.c.h.b16 %v580
    %v1690 = vunpack.c.l.b16 %v581
    %v1691 = vunpack.c.h.b16 %v581
    %v1692 = vunpack.c.l.b16 %v582
    %v1693 = vunpack.c.h.b16 %v582
    %v1694 = vunpack.c.l.b16 %v583
    %v1695 = vunpack.c.h.b16 %v583
    %v1696 = vunpack.c.l.b16 %v584
    %v1697 = vunpack.c.h.b16 %v584
    %v1698 = vunpack.c.l.b16 %v585
    %v1699 = vunpack.c.h.b16 %v585
    %v1700 = vunpack.c.l.b16 %v586
    %v1701 = vunpack.c.h.b16 %v586
    %v1702 = vunpack.c.l.b16 %v587
    %v1703 = vunpack.c.h.b16 %v587
    %v1704 = vunpack.c.l.b16 %v588
    %v1705 = vunpack.c.h.b16 %v588
    %v1706 = vunpack.c.l.b16 %v589
    %v1707 = vunpack.c.h.b16 %v589
    %v1708 = vunpack.c.l.b16 %v590
    %v1709 = vunpack.c.h.b16 %v590
    %v1710 = vunpack.c.l.b16 %v591
    %v1711 = vunpack.c.h.b16 %v591
    %v1712 = vunpack.c.l.b16 %v592
    %v1713 = vunpack.c.h.b16 %v592
    %v1714 = vunpack.c.l.b16 %v593
    %v1715 = vunpack.c.h.b16 %v593
    %v1716 = vunpack.c.l.b16 %v594
    %v1717 = vunpack.c.h.b16 %v594
    %v1718 = vunpack.c.l.b16 %v595
    %v1719 = vunpack.c.h.b16 %v595
    %v1720 = vunpack.c.l.b16 %v596
    %v1721 = vunpack.c.h.b16 %v596
    %v1722 = vunpack.c.l.b16 %v597
    %v1723 = vunpack.c.h.b16 %v597
    %v1724 = vunpack.c.l.b16 %v598
    %v1725 = vunpack.c.h.b16 %v598
    %v1726 = vunpack.c.l.b16 %v599
    %v1727 = vunpack.c.h.b16 %v599
    %v1728 = vunpack.c.l.b16 %v600
    %v1729 = vunpack.c.h.b16 %v600
    %v1730 = vunpack.c.l.b16 %v601
    %v1731 = vunpack.c.h.b16 %v601
    %v1732 = vunpack.c.l.b16 %v602
    %v1733 = vunpack.c.h.b16 %v602
    %v1734 = vunpack.c.l.b16 %v603
    %v1735 = vunpack.c.h.b16 %v603
    %v1736 = vunpack.c.l.b16 %v604
    %v1737 = vunpack.c.h.b16 %v604
    %v1738 = vunpack.c.l.b16 %v605
    %v1739 = vunpack.c.h.b16 %v605
    %v1740 = vunpack.c.l.b16 %v606
    %v1741 = vunpack.c.h.b16 %v606
    %v1742 = vunpack.c.l.b16 %v607
    %v1743 = vunpack.c.h.b16 %v607
    %v1744 = vunpack.c.l.b16 %v608
    %v1745 = vunpack.c.h.b16 %v608
    %v1746 = vunpack.c.l.b16 %v609
    %v1747 = vunpack.c.h.b16 %v609
    %v1748 = vunpack.c.l.b16 %v610
    %v1749 = vunpack.c.h.b16 %v610
    %v1750 = vunpack.c.l.b16 %v611
    %v1751 = vunpack.c.h.b16 %v611
    %v1752 = vunpack.c.l.b16 %v612
    %v1753 = vunpack.c.h.b16 %v612
    %v1754 = vunpack.c.l.b16 %v613
    %v1755 = vunpack.c.h.b16 %v613
    %v1756 = vunpack.c.l.b16 %v614
    %v1757 = vunpack.c.h.b16 %v614
    %v1758 = vunpack.c.l.b16 %v615
    %v1759 = vunpack.c.h.b16 %v615
    %v1760 = vunpack.c.l.b16 %v616
    %v1761 = vunpack.c.h.b16 %v616
    %v1762 = vunpack.c.l.b16 %v617
    %v1763 = vunpack.c.h.b16 %v617
    %v1764 = vunpack.c.l.b16 %v618
    %v1765 = vunpack.c.h.b16 %v618
    %v1766 = vunpack.c.l.b16 %v619
    %v1767 = vunpack.c.h.b16 %v619
    %v1768 = vunpack.c.l.b16 %v620
    %v1769 = vunpack.c.h.b16 %v620
    %v1770 = vunpack.c.l.b16 %v621
    %v1771 = vunpack.c.h.b16 %v621
    %v1772 = vunpack.c.l.b16 %v622
    %v1773 = vunpack.c.h.b16 %v622
    %v1774 = vunpack.c.l.b16 %v623
    %v1775 = vunpack.c.h.b16 %v623
    %v1776 = vunpack.c.l.b16 %v624
    %v1777 = vunpack.c.h.b16 %v624
    %v1778 = vunpack.c.l.b16 %v625
    %v1779 = vunpack.c.h.b16 %v625
    %v1780 = vunpack.c.l.b16 %v626
    %v1781 = vunpack.c.h.b16 %v626
    %v1782 = vunpack.c.l.b16 %v627
    %v1783 = vunpack.c.h.b16 %v627
    %v1784 = vunpack.c.l.b16 %v628
    %v1785 = vunpack.c.h.b16 %v628
    %v1786 = vunpack.c.l.b16 %v629
    %v1787 = vunpack.c.h.b16 %v629
    %v1788 = vunpack.c.l.b16 %v630
    %v1789 = vunpack.c.h.b16 %v630
    %v1790 = vunpack.c.l.b16 %v631
    %v1791 = vunpack.c.h.b16 %v631
    %v1792 = vunpack.c.l.b16 %v632
    %v1793 = vunpack.c.h.b16 %v632
    %v1794 = vunpack.c.l.b16 %v633
    %v1795 = vunpack.c.h.b16 %v633
    %v1796 = vunpack.c.l.b16 %v634
    %v1797 = vunpack.c.h.b16 %v634
    %v1798 = vunpack.c.l.b16 %v635
    %v1799 = vunpack.c.h.b16 %v635
    %v1800 = vpack.c.b16 %v1034, %v1032
    %v1801 = vpack.c.b16 %v1035, %v1033
    %v1802 = vpack.c.b16 %v1038, %v1036
    %v1803 = vpack.c.b16 %v1039, %v1037
    %v1804 = vpack.c.b16 %v1042, %v1040
    %v1805 = vpack.c.b16 %v1043, %v1041
    %v1806 = vpack.c.b16 %v1046, %v1044
    %v1807 = vpack.c.b16 %v1047, %v1045
    %v1808 = vpack.c.b16 %v1050, %v1048
    %v1809 = vpack.c.b16 %v1051, %v1049
    %v1810 = vpack.c.b16 %v1054, %v1052
    %v1811 = vpack.c.b16 %v1055, %v1053
    %v1812 = vpack.c.b16 %v1058, %v1056
    %v1813 = vpack.c.b16 %v1059, %v1057
    %v1814 = vpack.c.b16 %v1062, %v1060
    %v1815 = vpack.c.b16 %v1063, %v1061
    %v1816 = vpack.c.b16 %v1066, %v1064
    %v1817 = vpack.c.b16 %v1067, %v1065
    %v1818 = vpack.c.b16 %v1070, %v1068
    %v1819 = vpack.c.b16 %v1071, %v1069
    %v1820 = vpack.c.b16 %v1074, %v1072
    %v1821 = vpack.c.b16 %v1075, %v1073
    %v1822 = vpack.c.b16 %v1078, %v1076
    %v1823 = vpack.c.b16 %v1079, %v1077
    %v1824 = vpack.c.b16 %v1082, %v1080
    %v1825 = vpack.c.b16 %v1083, %v1081
    %v1826 = vpack.c.b16 %v1086, %v1084
    %v1827 = vpack.c.b16 %v1087, %v1085
    %v1828 = vpack.c.b16 %v1090, %v1088
    %v1829 = vpack.c.b16 %v1091, %v1089
    %v1830 = vpack.c.b16 %v1094, %v1092
    %v1831 = vpack.c.b16 %v1095, %v1093
    %v1832 = vpack.c.b16 %v1098, %v1096
    %v1833 = vpack.c.b16 %v1099, %v1097
    %v1834 = vpack.c.b16 %v1102, %v1100
    %v1835 = vpack.c.b16 %v1103, %v1101
    %v1836 = vpack.c.b16 %v1106, %v1104
    %v1837 = vpack.c.b16 %v1107, %v1105
    %v1838 = vpack.c.b16 %v1110, %v1108
    %v1839 = vpack.c.b16 %v1111, %v1109
    %v1840 = vpack.c.b16 %v1114, %v1112
    %v1841 = vpack.c.b16 %v1115, %v1113
    %v1842 = vpack.c.b16 %v1118, %v1116
    %v1843 = vpack.c.b16 %v1119, %v1117
    %v1844 = vpack.c.b16 %v1122, %v1120
    %v1845 = vpack.c.b16 %v1123, %v1121
    %v1846 = vpack.c.b16 %v1126, %v1124
    %v1847 = vpack.c.b16 %v1127, %v1125
    %v1848 = vpack.c.b16 %v1130, %v1128
    %v1849 = vpack.c.b16 %v1131, %v1129
    %v1850 = vpack.c.b16 %v1134, %v1132
    %v1851 = vpack.c.b16 %v1135, %v1133
    %v1852 = vpack.c.b16 %v1138, %v1136
    %v1853 = vpack.c.b16 %v1139, %v1137
    %v1854 = vpack.c.b16 %v1142, %v1140
    %v1855 = vpack.c.b16 %v1143, %v1141
    %v1856 = vpack.c.b16 %v1146, %v1144
    %v1857 = vpack.c.b16 %v1147, %v1145
    %v1858 = vpack.c.b16 %v1150, %v1148
    %v1859 = vpack.c.b16 %v1151, %v1149
    %v1860 = vpack.c.b16 %v1154, %v1152
    %v1861 = vpack.c.b16 %v1155, %v1153
    %v1862 = vpack.c.b16 %v1158, %v1156
    %v1863 = vpack.c.b16 %v1159, %v1157
    %v1864 = vpack.c.b16 %v1162, %v1160
    %v1865 = vpack.c.b16 %v1163, %v1161
    %v1866 = vpack.c.b16 %v1166, %v1164
    %v1867 = vpack.c.b16 %v1167, %v1165
    %v1868 = vpack.c.b16 %v1170, %v1168
    %v1869 = vpack.c.b16 %v1171, %v1169
    %v1870 = vpack.c.b16 %v1174, %v1172
    %v1871 = vpack.c.b16 %v1175, %v1173
    %v1872 = vpack.c.b16 %v1178, %v1176
    %v1873 = vpack.c.b16 %v1179, %v1177
    %v1874 = vpack.c.b16 %v1182, %v1180
    %v1875 = vpack.c.b16 %v1183, %v1181
    %v1876 = vpack.c.b16 %v1186, %v1184
    %v1877 = vpack.c.b16 %v1187, %v1185
    %v1878 = vpack.c.b16 %v1190, %v1188
    %v1879 = vpack.c.b16 %v1191, %v1189
    %v1880 = vpack.c.b16 %v1194, %v1192
    %v1881 = vpack.c.b16 %v1195, %v1193
    %v1882 = vpack.c.b16 %v1198, %v1196
    %v1883 = vpack.c.b16 %v1199, %v1197
    %v1884 = vpack.c.b16 %v1202, %v1200
    %v1885 = vpack.c.b16 %v1203, %v1201
    %v1886 = vpack.c.b16 %v1206, %v1204
    %v1887 = vpack.c.b16 %v1207, %v1205
    %v1888 = vpack.c.b16 %v1210, %v1208
    %v1889 = vpack.c.b16 %v1211, %v1209
    %v1890 = vpack.c.b16 %v1214, %v1212
    %v1891 = vpack.c.b16 %v1215, %v1213
    %v1892 = vpack.c.b16 %v1218, %v1216
    %v1893 = vpack.c.b16 %v1219, %v1217
    %v1894 = vpack.c.b16 %v1222, %v1220
    %v1895 = vpack.c.b16 %v1223, %v1221
    %v1896 = vpack.c.b16 %v1226, %v1224
    %v1897 = vpack.c.b16 %v1227, %v1225
    %v1898 = vpack.c.b16 %v1230, %v1228
    %v1899 = vpack.c.b16 %v1231, %v1229
    %v1900 = vpack.c.b16 %v1234, %v1232
    %v1901 = vpack.c.b16 %v1235, %v1233
    %v1902 = vpack.c.b16 %v1238, %v1236
    %v1903 = vpack.c.b16 %v1239, %v1237
    %v1904 = vpack.c.b16 %v1242, %v1240
    %v1905 = vpack.c.b16 %v1243, %v1241
    %v1906 = vpack.c.b16 %v1246, %v1244
    %v1907 = vpack.c.b16 %v1247, %v1245
    %v1908 = vpack.c.b16 %v1250, %v1248
    %v1909 = vpack.c.b16 %v1251, %v1249
    %v1910 = vpack.c.b16 %v1254, %v1252
    %v1911 = vpack.c.b16 %v1255, %v1253
    %v1912 = vpack.c.b16 %v1258, %v1256
    %v1913 = vpack.c.b16 %v1259, %v1257
    %v1914 = vpack.c.b16 %v1262, %v1260
    %v1915 = vpack.c.b16 %v1263, %v1261
    %v1916 = vpack.c.b16 %v1266, %v1264
    %v1917 = vpack.c.b16 %v1267, %v1265
    %v1918 = vpack.c.b16 %v1270, %v1268
    %v1919 = vpack.c.b16 %v1271, %v1269
    %v1920 = vpack.c.b16 %v1274, %v1272
    %v1921 = vpack.c.b16 %v1275, %v1273
    %v1922 = vpack.c.b16 %v1278, %v1276
    %v1923 = vpack.c.b16 %v1279, %v1277
    %v1924 = vpack.c.b16 %v1282, %v1280
    %v1925 = vpack.c.b16 %v1283, %v1281
    %v1926 = vpack.c.b16 %v1286, %v1284
    %v1927 = vpack.c.b16 %v1287, %v1285
    %v1928 = vpack.c.b16 %v1290, %v1288
    %v1929 = vpack.c.b16 %v1291, %v1289
    %v1930 = vpack.c.b16 %v1294, %v1292
    %v1931 = vpack.c.b16 %v1295, %v1293
    %v1932 = vpack.c.b16 %v1298, %v1296
    %v1933 = vpack.c.b16 %v1299, %v1297
    %v1934 = vpack.c.b16 %v1302, %v1300
    %v1935 = vpack.c.b16 %v1303, %v1301
    %v1936 = vpack.c.b16 %v1306, %v1304
    %v1937 = vpack.c.b16 %v1307, %v1305
    %v1938 = vpack.c.b16 %v1310, %v1308
    %v1939 = vpack.c.b16 %v1311, %v1309
    %v1940 = vpack.c.b16 %v1314, %v1312
    %v1941 = vpack.c.b16 %v1315, %v1313
    %v1942 = vpack.c.b16 %v1318, %v1316
    %v1943 = vpack.c.b16 %v1319, %v1317
    %v1944 = vpack.c.b16 %v1322, %v1320
    %v1945 = vpack.c.b16 %v1323, %v1321
    %v1946 = vpack.c.b16 %v1326, %v1324
    %v1947 = vpack.c.b16 %v1327, %v1325
    %v1948 = vpack.c.b16 %v1330, %v1328
    %v1949 = vpack.c.b16 %v1331, %v1329
    %v1950 = vpack.c.b16 %v1334, %v1332
    %v1951 = vpack.c.b16 %v1335, %v1333
    %v1952 = vpack.c.b16 %v1338, %v1336
    %v1953 = vpack.c.b16 %v1339, %v1337
    %v1954 = vpack.c.b16 %v1342, %v1340
    %v1955 = vpack.c.b16 %v1343, %v1341
    %v1956 = vpack.c.b16 %v1346, %v1344
    %v1957 = vpack.c.b16 %v1347, %v1345
    %v1958 = vpack.c.b16 %v1350, %v1348
    %v1959 = vpack.c.b16 %v1351, %v1349
    %v1960 = vpack.c.b16 %v1354, %v1352
    %v1961 = vpack.c.b16 %v1355, %v1353
    %v1962 = vpack.c.b16 %v1358, %v1356
    %v1963 = vpack.c.b16 %v1359, %v1357
    %v1964 = vpack.c.b16 %v1362, %v1360
    %v1965 = vpack.c.b16 %v1363, %v1361
    %v1966 = vpack.c.b16 %v1366, %v1364
    %v1967 = vpack.c.b16 %v1367, %v1365
    %v1968 = vpack.c.b16 %v1370, %v1368
    %v1969 = vpack.c.b16 %v1371, %v1369
    %v1970 = vpack.c.b16 %v1374, %v1372
    %v1971 = vpack.c.b16 %v1375, %v1373
    %v1972 = vpack.c.b16 %v1378, %v1376
    %v1973 = vpack.c.b16 %v1379, %v1377
    %v1974 = vpack.c.b16 %v1382, %v1380
    %v1975 = vpack.c.b16 %v1383, %v1381
    %v1976 = vpack.c.b16 %v1386, %v1384
    %v1977 = vpack.c.b16 %v1387, %v1385
    %v1978 = vpack.c.b16 %v1390, %v1388
    %v1979 = vpack.c.b16 %v1391, %v1389
    %v1980 = vpack.c.b16 %v1394, %v1392
    %v1981 = vpack.c.b16 %v1395, %v1393
    %v1982 = vpack.c.b16 %v1398, %v1396
    %v1983 = vpack.c.b16 %v1399, %v1397
    %v1984 = vpack.c.b16 %v1402, %v1400
    %v1985 = vpack.c.b16 %v1403, %v1401
    %v1986 = vpack.c.b16 %v1406, %v1404
    %v1987 = vpack.c.b16 %v1407, %v1405
    %v1988 = vpack.c.b16 %v1410, %v1408
    %v1989 = vpack.c.b16 %v1411, %v1409
    %v1990 = vpack.c.b16 %v1414, %v1412
    %v1991 = vpack.c.b16 %v1415, %v1413
    %v1992 = vpack.c.b16 %v1418, %v1416
    %v1993 = vpack.c.b16 %v1419, %v1417
    %v1994 = vpack.c.b16 %v1422, %v1420
    %v1995 = vpack.c.b16 %v1423, %v1421
    %v1996 = vpack.c.b16 %v1426, %v1424
    %v1997 = vpack.c.b16 %v1427, %v1425
    %v1998 = vpack.c.b16 %v1430, %v1428
    %v1999 = vpack.c.b16 %v1431, %v1429
    %v2000 = vpack.c.b16 %v1434, %v1432
    %v2001 = vpack.c.b16 %v1435, %v1433
    %v2002 = vpack.c.b16 %v1438, %v1436
    %v2003 = vpack.c.b16 %v1439, %v1437
    %v2004 = vpack.c.b16 %v1442, %v1440
    %v2005 = vpack.c.b16 %v1443, %v1441
    %v2006 = vpack.c.b16 %v1446, %v1444
    %v2007 = vpack.c.b16 %v1447, %v1445
    %v2008 = vpack.c.b16 %v1450, %v1448
    %v2009 = vpack.c.b16 %v1451, %v1449
    %v2010 = vpack.c.b16 %v1454, %v1452
    %v2011 = vpack.c.b16 %v1455, %v1453
    %v2012 = vpack.c.b16 %v1458, %v1456
    %v2013 = vpack.c.b16 %v1459, %v1457
    %v2014 = vpack.c.b16 %v1462, %v1460
    %v2015 = vpack.c.b16 %v1463, %v1461
    %v2016 = vpack.c.b16 %v1466, %v1464
    %v2017 = vpack.c.b16 %v1467, %v1465
    %v2018 = vpack.c.b16 %v1470, %v1468
    %v2019 = vpack.c.b16 %v1471, %v1469
    %v2020 = vpack.c.b16 %v1474, %v1472
    %v2021 = vpack.c.b16 %v1475, %v1473
    %v2022 = vpack.c.b16 %v1478, %v1476
    %v2023 = vpack.c.b16 %v1479, %v1477
    %v2024 = vpack.c.b16 %v1482, %v1480
    %v2025 = vpack.c.b16 %v1483, %v1481
    %v2026 = vpack.c.b16 %v1486, %v1484
    %v2027 = vpack.c.b16 %v1487, %v1485
    %v2028 = vpack.c.b16 %v1490, %v1488
    %v2029 = vpack.c.b16 %v1491, %v1489
    %v2030 = vpack.c.b16 %v1494, %v1492
    %v2031 = vpack.c.b16 %v1495, %v1493
    %v2032 = vpack.c.b16 %v1498, %v1496
    %v2033 = vpack.c.b16 %v1499, %v1497
    %v2034 = vpack.c.b16 %v1502, %v1500
    %v2035 = vpack.c.b16 %v1503, %v1501
    %v2036 = vpack.c.b16 %v1506, %v1504
    %v2037 = vpack.c.b16 %v1507, %v1505
    %v2038 = vpack.c.b16 %v1510, %v1508
    %v2039 = vpack.c.b16 %v1511, %v1509
    %v2040 = vpack.c.b16 %v1514, %v1512
    %v2041 = vpack.c.b16 %v1515, %v1513
    %v2042 = vpack.c.b16 %v1518, %v1516
    %v2043 = vpack.c.b16 %v1519, %v1517
    %v2044 = vpack.c.b16 %v1522, %v1520
    %v2045 = vpack.c.b16 %v1523, %v1521
    %v2046 = vpack.c.b16 %v1526, %v1524
    %v2047 = vpack.c.b16 %v1527, %v1525
    %v2048 = vpack.c.b16 %v1530, %v1528
    %v2049 = vpack.c.b16 %v1531, %v1529
    %v2050 = vpack.c.b16 %v1534, %v1532
    %v2051 = vpack.c.b16 %v1535, %v1533
    %v2052 = vpack.c.b16 %v1538, %v1536
    %v2053 = vpack.c.b16 %v1539, %v1537
    %v2054 = vpack.c.b16 %v1542, %v1540
    %v2055 = vpack.c.b16 %v1543, %v1541
    %v2056 = vpack.c.b16 %v1546, %v1544
    %v2057 = vpack.c.b16 %v1547, %v1545
    %v2058 = vpack.c.b16 %v1550, %v1548
    %v2059 = vpack.c.b16 %v1551, %v1549
    %v2060 = vpack.c.b16 %v1554, %v1552
    %v2061 = vpack.c.b16 %v1555, %v1553
    %v2062 = vpack.c.b16 %v1558, %v1556
    %v2063 = vpack.c.b16 %v1559, %v1557
    %v2064 = vpack.c.b16 %v1562, %v1560
    %v2065 = vpack.c.b16 %v1563, %v1561
    %v2066 = vpack.c.b16 %v1566, %v1564
    %v2067 = vpack.c.b16 %v1567, %v1565
    %v2068 = vpack.c.b16 %v1570, %v1568
    %v2069 = vpack.c.b16 %v1571, %v1569
    %v2070 = vpack.c.b16 %v1574, %v1572
    %v2071 = vpack.c.b16 %v1575, %v1573
    %v2072 = vpack.c.b16 %v1578, %v1576
    %v2073 = vpack.c.b16 %v1579, %v1577
    %v2074 = vpack.c.b16 %v1582, %v1580
    %v2075 = vpack.c.b16 %v1583, %v1581
    %v2076 = vpack.c.b16 %v1586, %v1584
    %v2077 = vpack.c.b16 %v1587, %v1585
    %v2078 = vpack.c.b16 %v1590, %v1588
    %v2079 = vpack.c.b16 %v1591, %v1589
    %v2080 = vpack.c.b16 %v1594, %v1592
    %v2081 = vpack.c.b16 %v1595, %v1593
    %v2082 = vpack.c.b16 %v1598, %v1596
    %v2083 = vpack.c.b16 %v1599, %v1597
    %v2084 = vpack.c.b16 %v1602, %v1600
    %v2085 = vpack.c.b16 %v1603, %v1601
    %v2086 = vpack.c.b16 %v1606, %v1604
    %v2087 = vpack.c.b16 %v1607, %v1605
    %v2088 = vpack.c.b16 %v1610, %v1608
    %v2089 = vpack.c.b16 %v1611, %v1609
    %v2090 = vpack.c.b16 %v1614, %v1612
    %v2091 = vpack.c.b16 %v1615, %v1613
    %v2092 = vpack.c.b16 %v1618, %v1616
    %v2093 = vpack.c.b16 %v1619, %v1617
    %v2094 = vpack.c.b16 %v1622, %v1620
    %v2095 = vpack.c.b16 %v1623, %v1621
    %v2096 = vpack.c.b16 %v1626, %v1624
    %v2097 = vpack.c.b16 %v1627, %v1625
    %v2098 = vpack.c.b16 %v1630, %v1628
    %v2099 = vpack.c.b16 %v1631, %v1629
    %v2100 = vpack.c.b16 %v1634, %v1632
    %v2101 = vpack.c.b16 %v1635, %v1633
    %v2102 = vpack.c.b16 %v1638, %v1636
    %v2103 = vpack.c.b16 %v1639, %v1637
    %v2104 = vpack.c.b16 %v1642, %v1640
    %v2105 = vpack.c.b16 %v1643, %v1641
    %v2106 = vpack.c.b16 %v1646, %v1644
    %v2107 = vpack.c.b16 %v1647, %v1645
    %v2108 = vpack.c.b16 %v1650, %v1648
    %v2109 = vpack.c.b16 %v1651, %v1649
    %v2110 = vpack.c.b16 %v1654, %v1652
    %v2111 = vpack.c.b16 %v1655, %v1653
    %v2112 = vpack.c.b16 %v1658, %v1656
    %v2113 = vpack.c.b16 %v1659, %v1657
    %v2114 = vpack.c.b16 %v1662, %v1660
    %v2115 = vpack.c.b16 %v1663, %v1661
    %v2116 = vpack.c.b16 %v1666, %v1664
    %v2117 = vpack.c.b16 %v1667, %v1665
    %v2118 = vpack.c.b16 %v1670, %v1668
    %v2119 = vpack.c.b16 %v1671, %v1669
    %v2120 = vpack.c.b16 %v1674, %v1672
    %v2121 = vpack.c.b16 %v1675, %v1673
    %v2122 = vpack.c.b16 %v1678, %v1676
    %v2123 = vpack.c.b16 %v1679, %v1677
    %v2124 = vpack.c.b16 %v1682, %v1680
    %v2125 = vpack.c.b16 %v1683, %v1681
    %v2126 = vpack.c.b16 %v1686, %v1684
    %v2127 = vpack.c.b16 %v1687, %v1685
    %v2128 = vpack.c.b16 %v1690, %v1688
    %v2129 = vpack.c.b16 %v1691, %v1689
    %v2130 = vpack.c.b16 %v1694, %v1692
    %v2131 = vpack.c.b16 %v1695, %v1693
    %v2132 = vpack.c.b16 %v1698, %v1696
    %v2133 = vpack.c.b16 %v1699, %v1697
    %v2134 = vpack.c.b16 %v1702, %v1700
    %v2135 = vpack.c.b16 %v1703, %v1701
    %v2136 = vpack.c.b16 %v1706, %v1704
    %v2137 = vpack.c.b16 %v1707, %v1705
    %v2138 = vpack.c.b16 %v1710, %v1708
    %v2139 = vpack.c.b16 %v1711, %v1709
    %v2140 = vpack.c.b16 %v1714, %v1712
    %v2141 = vpack.c.b16 %v1715, %v1713
    %v2142 = vpack.c.b16 %v1718, %v1716
    %v2143 = vpack.c.b16 %v1719, %v1717
    %v2144 = vpack.c.b16 %v1722, %v1720
    %v2145 = vpack.c.b16 %v1723, %v1721
    %v2146 = vpack.c.b16 %v1726, %v1724
    %v2147 = vpack.c.b16 %v1727, %v1725
    %v2148 = vpack.c.b16 %v1730, %v1728
    %v2149 = vpack.c.b16 %v1731, %v1729
    %v2150 = vpack.c.b16 %v1734, %v1732
    %v2151 = vpack.c.b16 %v1735, %v1733
    %v2152 = vpack.c.b16 %v1738, %v1736
    %v2153 = vpack.c.b16 %v1739, %v1737
    %v2154 = vpack.c.b16 %v1742, %v1740
    %v2155 = vpack.c.b16 %v1743, %v1741
    %v2156 = vpack.c.b16 %v1746, %v1744
    %v2157 = vpack.c.b16 %v1747, %v1745
    %v2158 = vpack.c.b16 %v1750, %v1748
    %v2159 = vpack.c.b16 %v1751, %v1749
    %v2160 = vpack.c.b16 %v1754, %v1752
    %v2161 = vpack.c.b16 %v1755, %v1753
    %v2162 = vpack.c.b16 %v1758, %v1756
    %v2163 = vpack.c.b16 %v1759, %v1757
    %v2164 = vpack.c.b16 %v1762, %v1760
    %v2165 = vpack.c.b16 %v1763, %v1761
    %v2166 = vpack.c.b16 %v1766, %v1764
    %v2167 = vpack.c.b16 %v1767, %v1765
    %v2168 = vpack.c.b16 %v1770, %v1768
    %v2169 = vpack.c.b16 %v1771, %v1769
    %v2170 = vpack.c.b16 %v1774, %v1772
    %v2171 = vpack.c.b16 %v1775, %v1773
    %v2172 = vpack.c.b16 %v1778, %v1776
    %v2173 = vpack.c.b16 %v1779, %v1777
    %v2174 = vpack.c.b16 %v1782, %v1780
    %v2175 = vpack.c.b16 %v1783, %v1781
    %v2176 = vpack.c.b16 %v1786, %v1784
    %v2177 = vpack.c.b16 %v1787, %v1785
    %v2178 = vpack.c.b16 %v1790, %v1788
    %v2179 = vpack.c.b16 %v1791, %v1789
    %v2180 = vpack.c.b16 %v1794, %v1792
    %v2181 = vpack.c.b16 %v1795, %v1793
    %v2182 = vpack.c.b16 %v1798, %v1796
    %v2183 = vpack.c.b16 %v1799, %v1797
    %2568 = vmatprep.subr.bf16.mxu0 %v1801
    %2569 = vmatpush1.bf16.msra.mxu0 %v1800
    %2570 = vmatprep.subr.bf16.mxu0 %v1803
    %2571 = vmatpush1.bf16.msra.mxu0 %v1802
    %2572 = vmatprep.subr.bf16.mxu0 %v1805
    %2573 = vmatpush1.bf16.msra.mxu0 %v1804
    %2574 = vmatprep.subr.bf16.mxu0 %v1807
    %2575 = vmatpush1.bf16.msra.mxu0 %v1806
    %2576 = vmatprep.subr.bf16.mxu0 %v1809
    %2577 = vmatpush1.bf16.msra.mxu0 %v1808
    %2578 = vmatprep.subr.bf16.mxu0 %v1811
    %2579 = vmatpush1.bf16.msra.mxu0 %v1810
    %2580 = vmatprep.subr.bf16.mxu0 %v1813
    %2581 = vmatpush1.bf16.msra.mxu0 %v1812
    %2582 = vmatprep.subr.bf16.mxu0 %v1815
    %2583 = vmatpush1.bf16.msra.mxu0 %v1814
    %2584 = vmatprep.subr.bf16.mxu0 %v1817
    %2585 = vmatpush1.bf16.msra.mxu0 %v1816
    %2586 = vmatprep.subr.bf16.mxu0 %v1819
    %2587 = vmatpush1.bf16.msra.mxu0 %v1818
    %2588 = vmatprep.subr.bf16.mxu0 %v1821
    %2589 = vmatpush1.bf16.msra.mxu0 %v1820
    %2590 = vmatprep.subr.bf16.mxu0 %v1823
    %2591 = vmatpush1.bf16.msra.mxu0 %v1822
    %2592 = vmatprep.subr.bf16.mxu0 %v1825
    %2593 = vmatpush1.bf16.msra.mxu0 %v1824
    %2594 = vmatprep.subr.bf16.mxu0 %v1827
    %2595 = vmatpush1.bf16.msra.mxu0 %v1826
    %2596 = vmatprep.subr.bf16.mxu0 %v1829
    %2597 = vmatpush1.bf16.msra.mxu0 %v1828
    %2598 = vmatprep.subr.bf16.mxu0 %v1831
    %2599 = vmatpush1.bf16.msra.mxu0 %v1830
    %2600 = vmatprep.mubr.bf16.mxu0 %v229
    %2601 = vmatmul.mubr.bf16.gmra.mrb[0].mxu0 %v228
    %v2602 = vpop.f32.mrb[0].mxu0
    %v2603 = vadd.f32 %v641, %v2602
    %v2604 = vpop.f32.mrb[0].mxu0
    %v2605 = vadd.f32 %v645, %v2604
    %v2606 = vpop.f32.mrb[0].mxu0
    %v2607 = vpop.f32.mrb[0].mxu0
    %2608 = vdwg.mxu0
    %2609 = vmatprep.subr.bf16.mxu0 %v1833
    %2610 = vmatpush1.bf16.msra.mxu0 %v1832
    %2611 = vmatprep.subr.bf16.mxu0 %v1835
    %2612 = vmatpush1.bf16.msra.mxu0 %v1834
    %2613 = vmatprep.subr.bf16.mxu0 %v1837
    %2614 = vmatpush1.bf16.msra.mxu0 %v1836
    %2615 = vmatprep.subr.bf16.mxu0 %v1839
    %2616 = vmatpush1.bf16.msra.mxu0 %v1838
    %2617 = vmatprep.subr.bf16.mxu0 %v1841
    %2618 = vmatpush1.bf16.msra.mxu0 %v1840
    %2619 = vmatprep.subr.bf16.mxu0 %v1843
    %2620 = vmatpush1.bf16.msra.mxu0 %v1842
    %2621 = vmatprep.subr.bf16.mxu0 %v1845
    %2622 = vmatpush1.bf16.msra.mxu0 %v1844
    %2623 = vmatprep.subr.bf16.mxu0 %v1847
    %2624 = vmatpush1.bf16.msra.mxu0 %v1846
    %2625 = vmatprep.subr.bf16.mxu0 %v1849
    %2626 = vmatpush1.bf16.msra.mxu0 %v1848
    %2627 = vmatprep.subr.bf16.mxu0 %v1851
    %2628 = vmatpush1.bf16.msra.mxu0 %v1850
    %2629 = vmatprep.subr.bf16.mxu0 %v1853
    %2630 = vmatpush1.bf16.msra.mxu0 %v1852
    %2631 = vmatprep.subr.bf16.mxu0 %v1855
    %2632 = vmatpush1.bf16.msra.mxu0 %v1854
    %2633 = vmatprep.subr.bf16.mxu0 %v1857
    %2634 = vmatpush1.bf16.msra.mxu0 %v1856
    %2635 = vmatprep.subr.bf16.mxu0 %v1859
    %2636 = vmatpush1.bf16.msra.mxu0 %v1858
    %2637 = vmatprep.subr.bf16.mxu0 %v1861
    %2638 = vmatpush1.bf16.msra.mxu0 %v1860
    %2639 = vmatprep.subr.bf16.mxu0 %v1863
    %2640 = vmatpush1.bf16.msra.mxu0 %v1862
    %2641 = vmatprep.mubr.bf16.mxu0 %v231
    %2642 = vmatmul.mubr.bf16.gmra.mrb[0].mxu0 %v230
    %v2643 = vpop.f32.mrb[0].mxu0
    %v2644 = vadd.f32 %v2603, %v2643
    %v2645 = vpop.f32.mrb[0].mxu0
    %v2646 = vadd.f32 %v2605, %v2645
    %v2647 = vpop.f32.mrb[0].mxu0
    %v2648 = vpop.f32.mrb[0].mxu0
    %2649 = vdwg.mxu0
    %2650 = vmatprep.subr.bf16.mxu0 %v1865
    %2651 = vmatpush1.bf16.msra.mxu0 %v1864
    %2652 = vmatprep.subr.bf16.mxu0 %v1867
    %2653 = vmatpush1.bf16.msra.mxu0 %v1866
    %2654 = vmatprep.subr.bf16.mxu0 %v1869
    %2655 = vmatpush1.bf16.msra.mxu0 %v1868
    %2656 = vmatprep.subr.bf16.mxu0 %v1871
    %2657 = vmatpush1.bf16.msra.mxu0 %v1870
    %2658 = vmatprep.subr.bf16.mxu0 %v1873
    %2659 = vmatpush1.bf16.msra.mxu0 %v1872
    %2660 = vmatprep.subr.bf16.mxu0 %v1875
    %2661 = vmatpush1.bf16.msra.mxu0 %v1874
    %2662 = vmatprep.subr.bf16.mxu0 %v1877
    %2663 = vmatpush1.bf16.msra.mxu0 %v1876
    %2664 = vmatprep.subr.bf16.mxu0 %v1879
    %2665 = vmatpush1.bf16.msra.mxu0 %v1878
    %2666 = vmatprep.subr.bf16.mxu0 %v1881
    %2667 = vmatpush1.bf16.msra.mxu0 %v1880
    %2668 = vmatprep.subr.bf16.mxu0 %v1883
    %2669 = vmatpush1.bf16.msra.mxu0 %v1882
    %2670 = vmatprep.subr.bf16.mxu0 %v1885
    %2671 = vmatpush1.bf16.msra.mxu0 %v1884
    %2672 = vmatprep.subr.bf16.mxu0 %v1887
    %2673 = vmatpush1.bf16.msra.mxu0 %v1886
    %2674 = vmatprep.subr.bf16.mxu0 %v1889
    %2675 = vmatpush1.bf16.msra.mxu0 %v1888
    %2676 = vmatprep.subr.bf16.mxu0 %v1891
    %2677 = vmatpush1.bf16.msra.mxu0 %v1890
    %2678 = vmatprep.subr.bf16.mxu0 %v1893
    %2679 = vmatpush1.bf16.msra.mxu0 %v1892
    %2680 = vmatprep.subr.bf16.mxu0 %v1895
    %2681 = vmatpush1.bf16.msra.mxu0 %v1894
    %2682 = vmatprep.mubr.bf16.mxu0 %v233
    %2683 = vmatmul.mubr.bf16.gmra.mrb[0].mxu0 %v232
    %v2684 = vpop.f32.mrb[0].mxu0
    %v2685 = vadd.f32 %v2644, %v2684
    %v2686 = vpop.f32.mrb[0].mxu0
    %v2687 = vadd.f32 %v2646, %v2686
    %v2688 = vpop.f32.mrb[0].mxu0
    %v2689 = vpop.f32.mrb[0].mxu0
    %2690 = vdwg.mxu0
    %2691 = vmatprep.subr.bf16.mxu0 %v1897
    %2692 = vmatpush1.bf16.msra.mxu0 %v1896
    %2693 = vmatprep.subr.bf16.mxu0 %v1899
    %2694 = vmatpush1.bf16.msra.mxu0 %v1898
    %2695 = vmatprep.subr.bf16.mxu0 %v1901
    %2696 = vmatpush1.bf16.msra.mxu0 %v1900
    %2697 = vmatprep.subr.bf16.mxu0 %v1903
    %2698 = vmatpush1.bf16.msra.mxu0 %v1902
    %2699 = vmatprep.subr.bf16.mxu0 %v1905
    %2700 = vmatpush1.bf16.msra.mxu0 %v1904
    %2701 = vmatprep.subr.bf16.mxu0 %v1907
    %2702 = vmatpush1.bf16.msra.mxu0 %v1906
    %2703 = vmatprep.subr.bf16.mxu0 %v1909
    %2704 = vmatpush1.bf16.msra.mxu0 %v1908
    %2705 = vmatprep.subr.bf16.mxu0 %v1911
    %2706 = vmatpush1.bf16.msra.mxu0 %v1910
    %2707 = vmatprep.subr.bf16.mxu0 %v1913
    %2708 = vmatpush1.bf16.msra.mxu0 %v1912
    %2709 = vmatprep.subr.bf16.mxu0 %v1915
    %2710 = vmatpush1.bf16.msra.mxu0 %v1914
    %2711 = vmatprep.subr.bf16.mxu0 %v1917
    %2712 = vmatpush1.bf16.msra.mxu0 %v1916
    %2713 = vmatprep.subr.bf16.mxu0 %v1919
    %2714 = vmatpush1.bf16.msra.mxu0 %v1918
    %2715 = vmatprep.subr.bf16.mxu0 %v1921
    %2716 = vmatpush1.bf16.msra.mxu0 %v1920
    %2717 = vmatprep.subr.bf16.mxu0 %v1923
    %2718 = vmatpush1.bf16.msra.mxu0 %v1922
    %2719 = vmatprep.subr.bf16.mxu0 %v1925
    %2720 = vmatpush1.bf16.msra.mxu0 %v1924
    %2721 = vmatprep.subr.bf16.mxu0 %v1927
    %2722 = vmatpush1.bf16.msra.mxu0 %v1926
    %2723 = vmatprep.mubr.bf16.mxu0 %v235
    %2724 = vmatmul.mubr.bf16.gmra.mrb[0].mxu0 %v234
    %v2725 = vpop.f32.mrb[0].mxu0
    %v2726 = vadd.f32 %v2685, %v2725
    %v2727 = vpop.f32.mrb[0].mxu0
    %v2728 = vadd.f32 %v2687, %v2727
    %v2729 = vpop.f32.mrb[0].mxu0
    %v2730 = vpop.f32.mrb[0].mxu0
    %2731 = vdwg.mxu0
    %2732 = vmatprep.subr.bf16.mxu0 %v1929
    %2733 = vmatpush1.bf16.msra.mxu0 %v1928
    %2734 = vmatprep.subr.bf16.mxu0 %v1931
    %2735 = vmatpush1.bf16.msra.mxu0 %v1930
    %2736 = vmatprep.subr.bf16.mxu0 %v1933
    %2737 = vmatpush1.bf16.msra.mxu0 %v1932
    %2738 = vmatprep.subr.bf16.mxu0 %v1935
    %2739 = vmatpush1.bf16.msra.mxu0 %v1934
    %2740 = vmatprep.subr.bf16.mxu0 %v1937
    %2741 = vmatpush1.bf16.msra.mxu0 %v1936
    %2742 = vmatprep.subr.bf16.mxu0 %v1939
    %2743 = vmatpush1.bf16.msra.mxu0 %v1938
    %2744 = vmatprep.subr.bf16.mxu0 %v1941
    %2745 = vmatpush1.bf16.msra.mxu0 %v1940
    %2746 = vmatprep.subr.bf16.mxu0 %v1943
    %2747 = vmatpush1.bf16.msra.mxu0 %v1942
    %2748 = vmatprep.subr.bf16.mxu0 %v1945
    %2749 = vmatpush1.bf16.msra.mxu0 %v1944
    %2750 = vmatprep.subr.bf16.mxu0 %v1947
    %2751 = vmatpush1.bf16.msra.mxu0 %v1946
    %2752 = vmatprep.subr.bf16.mxu0 %v1949
    %2753 = vmatpush1.bf16.msra.mxu0 %v1948
    %2754 = vmatprep.subr.bf16.mxu0 %v1951
    %2755 = vmatpush1.bf16.msra.mxu0 %v1950
    %2756 = vmatprep.subr.bf16.mxu0 %v1953
    %2757 = vmatpush1.bf16.msra.mxu0 %v1952
    %2758 = vmatprep.subr.bf16.mxu0 %v1955
    %2759 = vmatpush1.bf16.msra.mxu0 %v1954
    %2760 = vmatprep.subr.bf16.mxu0 %v1957
    %2761 = vmatpush1.bf16.msra.mxu0 %v1956
    %2762 = vmatprep.subr.bf16.mxu0 %v1959
    %2763 = vmatpush1.bf16.msra.mxu0 %v1958
    %2764 = vmatprep.mubr.bf16.mxu0 %v237
    %2765 = vmatmul.mubr.bf16.gmra.mrb[0].mxu0 %v236
    %v2766 = vpop.f32.mrb[0].mxu0
    %v2767 = vadd.f32 %v2726, %v2766
    %v2768 = vpop.f32.mrb[0].mxu0
    %v2769 = vadd.f32 %v2728, %v2768
    %v2770 = vpop.f32.mrb[0].mxu0
    %v2771 = vpop.f32.mrb[0].mxu0
    %2772 = vdwg.mxu0
    %2773 = vmatprep.subr.bf16.mxu0 %v1961
    %2774 = vmatpush1.bf16.msra.mxu0 %v1960
    %2775 = vmatprep.subr.bf16.mxu0 %v1963
    %2776 = vmatpush1.bf16.msra.mxu0 %v1962
    %2777 = vmatprep.subr.bf16.mxu0 %v1965
    %2778 = vmatpush1.bf16.msra.mxu0 %v1964
    %2779 = vmatprep.subr.bf16.mxu0 %v1967
    %2780 = vmatpush1.bf16.msra.mxu0 %v1966
    %2781 = vmatprep.subr.bf16.mxu0 %v1969
    %2782 = vmatpush1.bf16.msra.mxu0 %v1968
    %2783 = vmatprep.subr.bf16.mxu0 %v1971
    %2784 = vmatpush1.bf16.msra.mxu0 %v1970
    %2785 = vmatprep.subr.bf16.mxu0 %v1973
    %2786 = vmatpush1.bf16.msra.mxu0 %v1972
    %2787 = vmatprep.subr.bf16.mxu0 %v1975
    %2788 = vmatpush1.bf16.msra.mxu0 %v1974
    %2789 = vmatprep.subr.bf16.mxu0 %v1977
    %2790 = vmatpush1.bf16.msra.mxu0 %v1976
    %2791 = vmatprep.subr.bf16.mxu0 %v1979
    %2792 = vmatpush1.bf16.msra.mxu0 %v1978
    %2793 = vmatprep.subr.bf16.mxu0 %v1981
    %2794 = vmatpush1.bf16.msra.mxu0 %v1980
    %2795 = vmatprep.subr.bf16.mxu0 %v1983
    %2796 = vmatpush1.bf16.msra.mxu0 %v1982
    %2797 = vmatprep.subr.bf16.mxu0 %v1985
    %2798 = vmatpush1.bf16.msra.mxu0 %v1984
    %2799 = vmatprep.subr.bf16.mxu0 %v1987
    %2800 = vmatpush1.bf16.msra.mxu0 %v1986
    %2801 = vmatprep.subr.bf16.mxu0 %v1989
    %2802 = vmatpush1.bf16.msra.mxu0 %v1988
    %2803 = vmatprep.subr.bf16.mxu0 %v1991
    %2804 = vmatpush1.bf16.msra.mxu0 %v1990
    %2805 = vmatprep.mubr.bf16.mxu0 %v239
    %2806 = vmatmul.mubr.bf16.gmra.mrb[0].mxu0 %v238
    %v2807 = vpop.f32.mrb[0].mxu0
    %v2808 = vadd.f32 %v2767, %v2807
    %v2809 = vpop.f32.mrb[0].mxu0
    %v2810 = vadd.f32 %v2769, %v2809
    %v2811 = vpop.f32.mrb[0].mxu0
    %v2812 = vpop.f32.mrb[0].mxu0
    %2813 = vdwg.mxu0
    %2814 = vmatprep.subr.bf16.mxu0 %v1993
    %2815 = vmatpush1.bf16.msra.mxu0 %v1992
    %2816 = vmatprep.subr.bf16.mxu0 %v1995
    %2817 = vmatpush1.bf16.msra.mxu0 %v1994
    %2818 = vmatprep.subr.bf16.mxu0 %v1997
    %2819 = vmatpush1.bf16.msra.mxu0 %v1996
    %2820 = vmatprep.subr.bf16.mxu0 %v1999
    %2821 = vmatpush1.bf16.msra.mxu0 %v1998
    %2822 = vmatprep.subr.bf16.mxu0 %v2001
    %2823 = vmatpush1.bf16.msra.mxu0 %v2000
    %2824 = vmatprep.subr.bf16.mxu0 %v2003
    %2825 = vmatpush1.bf16.msra.mxu0 %v2002
    %2826 = vmatprep.subr.bf16.mxu0 %v2005
    %2827 = vmatpush1.bf16.msra.mxu0 %v2004
    %2828 = vmatprep.subr.bf16.mxu0 %v2007
    %2829 = vmatpush1.bf16.msra.mxu0 %v2006
    %2830 = vmatprep.subr.bf16.mxu0 %v2009
    %2831 = vmatpush1.bf16.msra.mxu0 %v2008
    %2832 = vmatprep.subr.bf16.mxu0 %v2011
    %2833 = vmatpush1.bf16.msra.mxu0 %v2010
    %2834 = vmatprep.subr.bf16.mxu0 %v2013
    %2835 = vmatpush1.bf16.msra.mxu0 %v2012
    %2836 = vmatprep.subr.bf16.mxu0 %v2015
    %2837 = vmatpush1.bf16.msra.mxu0 %v2014
    %2838 = vmatprep.subr.bf16.mxu0 %v2017
    %2839 = vmatpush1.bf16.msra.mxu0 %v2016
    %2840 = vmatprep.subr.bf16.mxu0 %v2019
    %2841 = vmatpush1.bf16.msra.mxu0 %v2018
    %2842 = vmatprep.subr.bf16.mxu0 %v2021
    %2843 = vmatpush1.bf16.msra.mxu0 %v2020
    %2844 = vmatprep.subr.bf16.mxu0 %v2023
    %2845 = vmatpush1.bf16.msra.mxu0 %v2022
    %2846 = vmatprep.mubr.bf16.mxu0 %v241
    %2847 = vmatmul.mubr.bf16.gmra.mrb[0].mxu0 %v240
    %v2848 = vpop.f32.mrb[0].mxu0
    %v2849 = vadd.f32 %v2808, %v2848
    %v2850 = vpop.f32.mrb[0].mxu0
    %v2851 = vadd.f32 %v2810, %v2850
    %v2852 = vpop.f32.mrb[0].mxu0
    %v2853 = vpop.f32.mrb[0].mxu0
    %2854 = vdwg.mxu0
    %2855 = vmatprep.subr.bf16.mxu0 %v2025
    %2856 = vmatpush1.bf16.msra.mxu0 %v2024
    %2857 = vmatprep.subr.bf16.mxu0 %v2027
    %2858 = vmatpush1.bf16.msra.mxu0 %v2026
    %2859 = vmatprep.subr.bf16.mxu0 %v2029
    %2860 = vmatpush1.bf16.msra.mxu0 %v2028
    %2861 = vmatprep.subr.bf16.mxu0 %v2031
    %2862 = vmatpush1.bf16.msra.mxu0 %v2030
    %2863 = vmatprep.subr.bf16.mxu0 %v2033
    %2864 = vmatpush1.bf16.msra.mxu0 %v2032
    %2865 = vmatprep.subr.bf16.mxu0 %v2035
    %2866 = vmatpush1.bf16.msra.mxu0 %v2034
    %2867 = vmatprep.subr.bf16.mxu0 %v2037
    %2868 = vmatpush1.bf16.msra.mxu0 %v2036
    %2869 = vmatprep.subr.bf16.mxu0 %v2039
    %2870 = vmatpush1.bf16.msra.mxu0 %v2038
    %2871 = vmatprep.subr.bf16.mxu0 %v2041
    %2872 = vmatpush1.bf16.msra.mxu0 %v2040
    %2873 = vmatprep.subr.bf16.mxu0 %v2043
    %2874 = vmatpush1.bf16.msra.mxu0 %v2042
    %2875 = vmatprep.subr.bf16.mxu0 %v2045
    %2876 = vmatpush1.bf16.msra.mxu0 %v2044
    %2877 = vmatprep.subr.bf16.mxu0 %v2047
    %2878 = vmatpush1.bf16.msra.mxu0 %v2046
    %2879 = vmatprep.subr.bf16.mxu0 %v2049
    %2880 = vmatpush1.bf16.msra.mxu0 %v2048
    %2881 = vmatprep.subr.bf16.mxu0 %v2051
    %2882 = vmatpush1.bf16.msra.mxu0 %v2050
    %2883 = vmatprep.subr.bf16.mxu0 %v2053
    %2884 = vmatpush1.bf16.msra.mxu0 %v2052
    %2885 = vmatprep.subr.bf16.mxu0 %v2055
    %2886 = vmatpush1.bf16.msra.mxu0 %v2054
    %2887 = vmatprep.mubr.bf16.mxu0 %v243
    %2888 = vmatmul.mubr.bf16.gmra.mrb[0].mxu0 %v242
    %v2889 = vpop.f32.mrb[0].mxu0
    %v2890 = vadd.f32 %v2849, %v2889
    %v2891 = vpop.f32.mrb[0].mxu0
    %v2892 = vadd.f32 %v2851, %v2891
    %v2893 = vpop.f32.mrb[0].mxu0
    %v2894 = vpop.f32.mrb[0].mxu0
    %2895 = vdwg.mxu0
    %2896 = vmatprep.subr.bf16.mxu0 %v2057
    %2897 = vmatpush1.bf16.msra.mxu0 %v2056
    %2898 = vmatprep.subr.bf16.mxu0 %v2059
    %2899 = vmatpush1.bf16.msra.mxu0 %v2058
    %2900 = vmatprep.subr.bf16.mxu0 %v2061
    %2901 = vmatpush1.bf16.msra.mxu0 %v2060
    %2902 = vmatprep.subr.bf16.mxu0 %v2063
    %2903 = vmatpush1.bf16.msra.mxu0 %v2062
    %2904 = vmatprep.subr.bf16.mxu0 %v2065
    %2905 = vmatpush1.bf16.msra.mxu0 %v2064
    %2906 = vmatprep.subr.bf16.mxu0 %v2067
    %2907 = vmatpush1.bf16.msra.mxu0 %v2066
    %2908 = vmatprep.subr.bf16.mxu0 %v2069
    %2909 = vmatpush1.bf16.msra.mxu0 %v2068
    %2910 = vmatprep.subr.bf16.mxu0 %v2071
    %2911 = vmatpush1.bf16.msra.mxu0 %v2070
    %2912 = vmatprep.subr.bf16.mxu0 %v2073
    %2913 = vmatpush1.bf16.msra.mxu0 %v2072
    %2914 = vmatprep.subr.bf16.mxu0 %v2075
    %2915 = vmatpush1.bf16.msra.mxu0 %v2074
    %2916 = vmatprep.subr.bf16.mxu0 %v2077
    %2917 = vmatpush1.bf16.msra.mxu0 %v2076
    %2918 = vmatprep.subr.bf16.mxu0 %v2079
    %2919 = vmatpush1.bf16.msra.mxu0 %v2078
    %2920 = vmatprep.subr.bf16.mxu0 %v2081
    %2921 = vmatpush1.bf16.msra.mxu0 %v2080
    %2922 = vmatprep.subr.bf16.mxu0 %v2083
    %2923 = vmatpush1.bf16.msra.mxu0 %v2082
    %2924 = vmatprep.subr.bf16.mxu0 %v2085
    %2925 = vmatpush1.bf16.msra.mxu0 %v2084
    %2926 = vmatprep.subr.bf16.mxu0 %v2087
    %2927 = vmatpush1.bf16.msra.mxu0 %v2086
    %2928 = vmatprep.mubr.bf16.mxu0 %v245
    %2929 = vmatmul.mubr.bf16.gmra.mrb[0].mxu0 %v244
    %v2930 = vpop.f32.mrb[0].mxu0
    %v2931 = vadd.f32 %v2890, %v2930
    %v2932 = vpop.f32.mrb[0].mxu0
    %v2933 = vadd.f32 %v2892, %v2932
    %v2934 = vpop.f32.mrb[0].mxu0
    %v2935 = vpop.f32.mrb[0].mxu0
    %2936 = vdwg.mxu0
    %2937 = vmatprep.subr.bf16.mxu0 %v2089
    %2938 = vmatpush1.bf16.msra.mxu0 %v2088
    %2939 = vmatprep.subr.bf16.mxu0 %v2091
    %2940 = vmatpush1.bf16.msra.mxu0 %v2090
    %2941 = vmatprep.subr.bf16.mxu0 %v2093
    %2942 = vmatpush1.bf16.msra.mxu0 %v2092
    %2943 = vmatprep.subr.bf16.mxu0 %v2095
    %2944 = vmatpush1.bf16.msra.mxu0 %v2094
    %2945 = vmatprep.subr.bf16.mxu0 %v2097
    %2946 = vmatpush1.bf16.msra.mxu0 %v2096
    %2947 = vmatprep.subr.bf16.mxu0 %v2099
    %2948 = vmatpush1.bf16.msra.mxu0 %v2098
    %2949 = vmatprep.subr.bf16.mxu0 %v2101
    %2950 = vmatpush1.bf16.msra.mxu0 %v2100
    %2951 = vmatprep.subr.bf16.mxu0 %v2103
    %2952 = vmatpush1.bf16.msra.mxu0 %v2102
    %2953 = vmatprep.subr.bf16.mxu0 %v2105
    %2954 = vmatpush1.bf16.msra.mxu0 %v2104
    %2955 = vmatprep.subr.bf16.mxu0 %v2107
    %2956 = vmatpush1.bf16.msra.mxu0 %v2106
    %2957 = vmatprep.subr.bf16.mxu0 %v2109
    %2958 = vmatpush1.bf16.msra.mxu0 %v2108
    %2959 = vmatprep.subr.bf16.mxu0 %v2111
    %2960 = vmatpush1.bf16.msra.mxu0 %v2110
    %2961 = vmatprep.subr.bf16.mxu0 %v2113
    %2962 = vmatpush1.bf16.msra.mxu0 %v2112
    %2963 = vmatprep.subr.bf16.mxu0 %v2115
    %2964 = vmatpush1.bf16.msra.mxu0 %v2114
    %2965 = vmatprep.subr.bf16.mxu0 %v2117
    %2966 = vmatpush1.bf16.msra.mxu0 %v2116
    %2967 = vmatprep.subr.bf16.mxu0 %v2119
    %2968 = vmatpush1.bf16.msra.mxu0 %v2118
    %2969 = vmatprep.mubr.bf16.mxu0 %v247
    %2970 = vmatmul.mubr.bf16.gmra.mrb[0].mxu0 %v246
    %v2971 = vpop.f32.mrb[0].mxu0
    %v2972 = vadd.f32 %v2931, %v2971
    %v2973 = vpop.f32.mrb[0].mxu0
    %v2974 = vadd.f32 %v2933, %v2973
    %v2975 = vpop.f32.mrb[0].mxu0
    %v2976 = vpop.f32.mrb[0].mxu0
    %2977 = vdwg.mxu0
    %2978 = vmatprep.subr.bf16.mxu0 %v2121
    %2979 = vmatpush1.bf16.msra.mxu0 %v2120
    %2980 = vmatprep.subr.bf16.mxu0 %v2123
    %2981 = vmatpush1.bf16.msra.mxu0 %v2122
    %2982 = vmatprep.subr.bf16.mxu0 %v2125
    %2983 = vmatpush1.bf16.msra.mxu0 %v2124
    %2984 = vmatprep.subr.bf16.mxu0 %v2127
    %2985 = vmatpush1.bf16.msra.mxu0 %v2126
    %2986 = vmatprep.subr.bf16.mxu0 %v2129
    %2987 = vmatpush1.bf16.msra.mxu0 %v2128
    %2988 = vmatprep.subr.bf16.mxu0 %v2131
    %2989 = vmatpush1.bf16.msra.mxu0 %v2130
    %2990 = vmatprep.subr.bf16.mxu0 %v2133
    %2991 = vmatpush1.bf16.msra.mxu0 %v2132
    %2992 = vmatprep.subr.bf16.mxu0 %v2135
    %2993 = vmatpush1.bf16.msra.mxu0 %v2134
    %2994 = vmatprep.subr.bf16.mxu0 %v2137
    %2995 = vmatpush1.bf16.msra.mxu0 %v2136
    %2996 = vmatprep.subr.bf16.mxu0 %v2139
    %2997 = vmatpush1.bf16.msra.mxu0 %v2138
    %2998 = vmatprep.subr.bf16.mxu0 %v2141
    %2999 = vmatpush1.bf16.msra.mxu0 %v2140
    %3000 = vmatprep.subr.bf16.mxu0 %v2143
    %3001 = vmatpush1.bf16.msra.mxu0 %v2142
    %3002 = vmatprep.subr.bf16.mxu0 %v2145
    %3003 = vmatpush1.bf16.msra.mxu0 %v2144
    %3004 = vmatprep.subr.bf16.mxu0 %v2147
    %3005 = vmatpush1.bf16.msra.mxu0 %v2146
    %3006 = vmatprep.subr.bf16.mxu0 %v2149
    %3007 = vmatpush1.bf16.msra.mxu0 %v2148
    %3008 = vmatprep.subr.bf16.mxu0 %v2151
    %3009 = vmatpush1.bf16.msra.mxu0 %v2150
    %3010 = vmatprep.mubr.bf16.mxu0 %v249
    %3011 = vmatmul.mubr.bf16.gmra.mrb[0].mxu0 %v248
    %v3012 = vpop.f32.mrb[0].mxu0
    %v3013 = vadd.f32 %v2972, %v3012
    %v3014 = vpop.f32.mrb[0].mxu0
    %v3015 = vadd.f32 %v2974, %v3014
    %v3016 = vpop.f32.mrb[0].mxu0
    %v3017 = vpop.f32.mrb[0].mxu0
    %3018 = vdwg.mxu0
    %3019 = vmatprep.subr.bf16.mxu0 %v2153
    %3020 = vmatpush1.bf16.msra.mxu0 %v2152
    %3021 = vmatprep.subr.bf16.mxu0 %v2155
    %3022 = vmatpush1.bf16.msra.mxu0 %v2154
    %3023 = vmatprep.subr.bf16.mxu0 %v2157
    %3024 = vmatpush1.bf16.msra.mxu0 %v2156
    %3025 = vmatprep.subr.bf16.mxu0 %v2159
    %3026 = vmatpush1.bf16.msra.mxu0 %v2158
    %3027 = vmatprep.subr.bf16.mxu0 %v2161
    %3028 = vmatpush1.bf16.msra.mxu0 %v2160
    %3029 = vmatprep.subr.bf16.mxu0 %v2163
    %3030 = vmatpush1.bf16.msra.mxu0 %v2162
    %3031 = vmatprep.subr.bf16.mxu0 %v2165
    %3032 = vmatpush1.bf16.msra.mxu0 %v2164
    %3033 = vmatprep.subr.bf16.mxu0 %v2167
    %3034 = vmatpush1.bf16.msra.mxu0 %v2166
    %3035 = vmatprep.subr.bf16.mxu0 %v2169
    %3036 = vmatpush1.bf16.msra.mxu0 %v2168
    %3037 = vmatprep.subr.bf16.mxu0 %v2171
    %3038 = vmatpush1.bf16.msra.mxu0 %v2170
    %3039 = vmatprep.subr.bf16.mxu0 %v2173
    %3040 = vmatpush1.bf16.msra.mxu0 %v2172
    %3041 = vmatprep.subr.bf16.mxu0 %v2175
    %3042 = vmatpush1.bf16.msra.mxu0 %v2174
    %3043 = vmatprep.subr.bf16.mxu0 %v2177
    %3044 = vmatpush1.bf16.msra.mxu0 %v2176
    %3045 = vmatprep.subr.bf16.mxu0 %v2179
    %3046 = vmatpush1.bf16.msra.mxu0 %v2178
    %3047 = vmatprep.subr.bf16.mxu0 %v2181
    %3048 = vmatpush1.bf16.msra.mxu0 %v2180
    %3049 = vmatprep.subr.bf16.mxu0 %v2183
    %3050 = vmatpush1.bf16.msra.mxu0 %v2182
    %3051 = vmatprep.mubr.bf16.mxu0 %v251
    %3052 = vmatmul.mubr.bf16.gmra.mrb[0].mxu0 %v250
    %v3053 = vpop.f32.mrb[0].mxu0
    %v3054 = vadd.f32 %v3013, %v3053
    %v3055 = vpop.f32.mrb[0].mxu0
    %v3056 = vadd.f32 %v3015, %v3055
    %v3057 = vpop.f32.mrb[0].mxu0
    %v3058 = vpop.f32.mrb[0].mxu0
    %3059 = vdwg.mxu0
    %v3060 = vmax.f32 %v3054, 0.0
    %v3061 = vmax.f32 %v3056, 0.0
    %v3062 = vpack.c.bf16 %v3060, %v3060
    %v3063 = vpack.c.bf16 %v3061, %v3061
    %v3064 = vld [vmem:[#allocation7] sm:$0xff]
    %v3065 = vld [vmem:[#allocation7 + $0x8] sm:$0xff]
    %v3066 = vld [vmem:[#allocation7 + $0x10] sm:$0xff]
    %v3067 = vld [vmem:[#allocation7 + $0x18] sm:$0xff]
    %v3068 = vld [vmem:[#allocation7 + $0x20] sm:$0xff]
    %v3069 = vld [vmem:[#allocation7 + $0x28] sm:$0xff]
    %v3070 = vld [vmem:[#allocation7 + $0x30] sm:$0xff]
    %v3071 = vld [vmem:[#allocation7 + $0x38] sm:$0xff]
    %v3072 = vld [vmem:[#allocation7 + $0x40] sm:$0xff]
    %v3073 = vld [vmem:[#allocation7 + $0x48] sm:$0xff]
    %v3074 = vld [vmem:[#allocation7 + $0x50] sm:$0xff]
    %v3075 = vld [vmem:[#allocation7 + $0x58] sm:$0xff]
    %v3076 = vld [vmem:[#allocation7 + $0x60] sm:$0xff]
    %v3077 = vld [vmem:[#allocation7 + $0x68] sm:$0xff]
    %v3078 = vld [vmem:[#allocation7 + $0x70] sm:$0xff]
    %v3079 = vld [vmem:[#allocation7 + $0x78] sm:$0xff]
    %v3080 = vld [vmem:[#allocation7 + $0x80] sm:$0xff]
    %v3081 = vld [vmem:[#allocation7 + $0x88] sm:$0xff]
    %v3082 = vld [vmem:[#allocation7 + $0x90] sm:$0xff]
    %v3083 = vld [vmem:[#allocation7 + $0x98] sm:$0xff]
    %v3084 = vld [vmem:[#allocation7 + $0xa0] sm:$0xff]
    %v3085 = vld [vmem:[#allocation7 + $0xa8] sm:$0xff]
    %v3086 = vld [vmem:[#allocation7 + $0xb0] sm:$0xff]
    %v3087 = vld [vmem:[#allocation7 + $0xb8] sm:$0xff]
    %v3088 = vld [vmem:[#allocation7 + $0xc0] sm:$0xff]
    %v3089 = vld [vmem:[#allocation7 + $0xc8] sm:$0xff]
    %v3090 = vld [vmem:[#allocation7 + $0xd0] sm:$0xff]
    %v3091 = vld [vmem:[#allocation7 + $0xd8] sm:$0xff]
    %v3092 = vld [vmem:[#allocation7 + $0xe0] sm:$0xff]
    %v3093 = vld [vmem:[#allocation7 + $0xe8] sm:$0xff]
    %v3094 = vld [vmem:[#allocation7 + $0xf0] sm:$0xff]
    %v3095 = vld [vmem:[#allocation7 + $0xf8] sm:$0xff]
    %v3096 = vld [vmem:[#allocation7 + $0x100] sm:$0xff]
    %v3097 = vld [vmem:[#allocation7 + $0x108] sm:$0xff]
    %v3098 = vld [vmem:[#allocation7 + $0x110] sm:$0xff]
    %v3099 = vld [vmem:[#allocation7 + $0x118] sm:$0xff]
    %v3100 = vld [vmem:[#allocation7 + $0x120] sm:$0xff]
    %v3101 = vld [vmem:[#allocation7 + $0x128] sm:$0xff]
    %v3102 = vld [vmem:[#allocation7 + $0x130] sm:$0xff]
    %v3103 = vld [vmem:[#allocation7 + $0x138] sm:$0xff]
    %v3104 = vld [vmem:[#allocation7 + $0x140] sm:$0xff]
    %v3105 = vld [vmem:[#allocation7 + $0x148] sm:$0xff]
    %v3106 = vld [vmem:[#allocation7 + $0x150] sm:$0xff]
    %v3107 = vld [vmem:[#allocation7 + $0x158] sm:$0xff]
    %v3108 = vld [vmem:[#allocation7 + $0x160] sm:$0xff]
    %v3109 = vld [vmem:[#allocation7 + $0x168] sm:$0xff]
    %v3110 = vld [vmem:[#allocation7 + $0x170] sm:$0xff]
    %v3111 = vld [vmem:[#allocation7 + $0x178] sm:$0xff]
    %v3112 = vld [vmem:[#allocation7 + $0x180] sm:$0xff]
    %v3113 = vld [vmem:[#allocation7 + $0x188] sm:$0xff]
    %v3114 = vld [vmem:[#allocation7 + $0x190] sm:$0xff]
    %v3115 = vld [vmem:[#allocation7 + $0x198] sm:$0xff]
    %v3116 = vld [vmem:[#allocation7 + $0x1a0] sm:$0xff]
    %v3117 = vld [vmem:[#allocation7 + $0x1a8] sm:$0xff]
    %v3118 = vld [vmem:[#allocation7 + $0x1b0] sm:$0xff]
    %v3119 = vld [vmem:[#allocation7 + $0x1b8] sm:$0xff]
    %v3120 = vld [vmem:[#allocation7 + $0x1c0] sm:$0xff]
    %v3121 = vld [vmem:[#allocation7 + $0x1c8] sm:$0xff]
    %v3122 = vld [vmem:[#allocation7 + $0x1d0] sm:$0xff]
    %v3123 = vld [vmem:[#allocation7 + $0x1d8] sm:$0xff]
    %v3124 = vld [vmem:[#allocation7 + $0x1e0] sm:$0xff]
    %v3125 = vld [vmem:[#allocation7 + $0x1e8] sm:$0xff]
    %v3126 = vld [vmem:[#allocation7 + $0x1f0] sm:$0xff]
    %v3127 = vld [vmem:[#allocation7 + $0x1f8] sm:$0xff]
    %v3128 = vld [vmem:[#allocation7 + $0x200] sm:$0xff]
    %v3129 = vld [vmem:[#allocation7 + $0x208] sm:$0xff]
    %v3130 = vld [vmem:[#allocation7 + $0x210] sm:$0xff]
    %v3131 = vld [vmem:[#allocation7 + $0x218] sm:$0xff]
    %v3132 = vld [vmem:[#allocation7 + $0x220] sm:$0xff]
    %v3133 = vld [vmem:[#allocation7 + $0x228] sm:$0xff]
    %v3134 = vld [vmem:[#allocation7 + $0x230] sm:$0xff]
    %v3135 = vld [vmem:[#allocation7 + $0x238] sm:$0xff]
    %v3136 = vld [vmem:[#allocation7 + $0x240] sm:$0xff]
    %v3137 = vld [vmem:[#allocation7 + $0x248] sm:$0xff]
    %v3138 = vld [vmem:[#allocation7 + $0x250] sm:$0xff]
    %v3139 = vld [vmem:[#allocation7 + $0x258] sm:$0xff]
    %v3140 = vld [vmem:[#allocation7 + $0x260] sm:$0xff]
    %v3141 = vld [vmem:[#allocation7 + $0x268] sm:$0xff]
    %v3142 = vld [vmem:[#allocation7 + $0x270] sm:$0xff]
    %v3143 = vld [vmem:[#allocation7 + $0x278] sm:$0xff]
    %v3144 = vld [vmem:[#allocation7 + $0x280] sm:$0xff]
    %v3145 = vld [vmem:[#allocation7 + $0x288] sm:$0xff]
    %v3146 = vld [vmem:[#allocation7 + $0x290] sm:$0xff]
    %v3147 = vld [vmem:[#allocation7 + $0x298] sm:$0xff]
    %v3148 = vld [vmem:[#allocation7 + $0x2a0] sm:$0xff]
    %v3149 = vld [vmem:[#allocation7 + $0x2a8] sm:$0xff]
    %v3150 = vld [vmem:[#allocation7 + $0x2b0] sm:$0xff]
    %v3151 = vld [vmem:[#allocation7 + $0x2b8] sm:$0xff]
    %v3152 = vld [vmem:[#allocation7 + $0x2c0] sm:$0xff]
    %v3153 = vld [vmem:[#allocation7 + $0x2c8] sm:$0xff]
    %v3154 = vld [vmem:[#allocation7 + $0x2d0] sm:$0xff]
    %v3155 = vld [vmem:[#allocation7 + $0x2d8] sm:$0xff]
    %v3156 = vld [vmem:[#allocation7 + $0x2e0] sm:$0xff]
    %v3157 = vld [vmem:[#allocation7 + $0x2e8] sm:$0xff]
    %v3158 = vld [vmem:[#allocation7 + $0x2f0] sm:$0xff]
    %v3159 = vld [vmem:[#allocation7 + $0x2f8] sm:$0xff]
    %v3160 = vld [vmem:[#allocation7 + $0x300] sm:$0xff]
    %v3161 = vld [vmem:[#allocation7 + $0x308] sm:$0xff]
    %v3162 = vld [vmem:[#allocation7 + $0x310] sm:$0xff]
    %v3163 = vld [vmem:[#allocation7 + $0x318] sm:$0xff]
    %v3164 = vld [vmem:[#allocation7 + $0x320] sm:$0xff]
    %v3165 = vld [vmem:[#allocation7 + $0x328] sm:$0xff]
    %v3166 = vld [vmem:[#allocation7 + $0x330] sm:$0xff]
    %v3167 = vld [vmem:[#allocation7 + $0x338] sm:$0xff]
    %v3168 = vld [vmem:[#allocation7 + $0x340] sm:$0xff]
    %v3169 = vld [vmem:[#allocation7 + $0x348] sm:$0xff]
    %v3170 = vld [vmem:[#allocation7 + $0x350] sm:$0xff]
    %v3171 = vld [vmem:[#allocation7 + $0x358] sm:$0xff]
    %v3172 = vld [vmem:[#allocation7 + $0x360] sm:$0xff]
    %v3173 = vld [vmem:[#allocation7 + $0x368] sm:$0xff]
    %v3174 = vld [vmem:[#allocation7 + $0x370] sm:$0xff]
    %v3175 = vld [vmem:[#allocation7 + $0x378] sm:$0xff]
    %v3176 = vld [vmem:[#allocation7 + $0x380] sm:$0xff]
    %v3177 = vld [vmem:[#allocation7 + $0x388] sm:$0xff]
    %v3178 = vld [vmem:[#allocation7 + $0x390] sm:$0xff]
    %v3179 = vld [vmem:[#allocation7 + $0x398] sm:$0xff]
    %v3180 = vld [vmem:[#allocation7 + $0x3a0] sm:$0xff]
    %v3181 = vld [vmem:[#allocation7 + $0x3a8] sm:$0xff]
    %v3182 = vld [vmem:[#allocation7 + $0x3b0] sm:$0xff]
    %v3183 = vld [vmem:[#allocation7 + $0x3b8] sm:$0xff]
    %v3184 = vld [vmem:[#allocation7 + $0x3c0] sm:$0xff]
    %v3185 = vld [vmem:[#allocation7 + $0x3c8] sm:$0xff]
    %v3186 = vld [vmem:[#allocation7 + $0x3d0] sm:$0xff]
    %v3187 = vld [vmem:[#allocation7 + $0x3d8] sm:$0xff]
    %v3188 = vld [vmem:[#allocation7 + $0x3e0] sm:$0xff]
    %v3189 = vld [vmem:[#allocation7 + $0x3e8] sm:$0xff]
    %v3190 = vld [vmem:[#allocation7 + $0x3f0] sm:$0xff]
    %v3191 = vld [vmem:[#allocation7 + $0x3f8] sm:$0xff]
    %v3192 = vld [vmem:[#allocation8] sm:$0xff]
    %v3193 = vunpack.c.l.bf16 %v3192
    %v3194 = vunpack.c.h.bf16 %v3192
    %v3197 = vlaneseq
    %v3198 = vshrl.u32 %v3197, 7
    %v3199 = vsub.s32 0, %v3198
    %v3200 = vrot.slane %v3193, %v3199
    %v3201 = vlaneseq
    %v3202 = vshrl.u32 %v3201, 7
    %v3203 = vsub.s32 2, %v3202
    %v3204 = vrot.slane %v3193, %v3203
    %v3205 = vlaneseq
    %v3206 = vshrl.u32 %v3205, 7
    %v3207 = vsub.s32 4, %v3206
    %v3208 = vrot.slane %v3193, %v3207
    %v3209 = vlaneseq
    %v3210 = vshrl.u32 %v3209, 7
    %v3211 = vsub.s32 6, %v3210
    %v3212 = vrot.slane %v3193, %v3211
    %v3213 = vlaneseq
    %v3214 = vshrl.u32 %v3213, 7
    %v3215 = vsub.s32 0, %v3214
    %v3216 = vrot.slane %v3194, %v3215
    %v3217 = vlaneseq
    %v3218 = vshrl.u32 %v3217, 7
    %v3219 = vsub.s32 2, %v3218
    %v3220 = vrot.slane %v3194, %v3219
    %v3221 = vlaneseq
    %v3222 = vshrl.u32 %v3221, 7
    %v3223 = vsub.s32 4, %v3222
    %v3224 = vrot.slane %v3194, %v3223
    %v3225 = vlaneseq
    %v3226 = vshrl.u32 %v3225, 7
    %v3227 = vsub.s32 6, %v3226
    %v3228 = vrot.slane %v3194, %v3227
    %v3237 = vlaneseq
    %v3238 = vshrl.u32 %v3237, 7
    %v3239 = vsub.s32 0, %v3238
    %v3240 = vrot.slane %v3200, %v3239
    %v3241 = vlaneseq
    %v3242 = vshrl.u32 %v3241, 7
    %v3243 = vsub.s32 0, %v3242
    %v3244 = vrot.slane %v3204, %v3243
    %v3245 = vlaneseq
    %v3246 = vshrl.u32 %v3245, 7
    %v3247 = vsub.s32 0, %v3246
    %v3248 = vrot.slane %v3208, %v3247
    %v3249 = vlaneseq
    %v3250 = vshrl.u32 %v3249, 7
    %v3251 = vsub.s32 0, %v3250
    %v3252 = vrot.slane %v3212, %v3251
    %v3253 = vlaneseq
    %v3254 = vshrl.u32 %v3253, 7
    %v3255 = vsub.s32 0, %v3254
    %v3256 = vrot.slane %v3216, %v3255
    %v3257 = vlaneseq
    %v3258 = vshrl.u32 %v3257, 7
    %v3259 = vsub.s32 0, %v3258
    %v3260 = vrot.slane %v3220, %v3259
    %v3261 = vlaneseq
    %v3262 = vshrl.u32 %v3261, 7
    %v3263 = vsub.s32 0, %v3262
    %v3264 = vrot.slane %v3224, %v3263
    %v3265 = vlaneseq
    %v3266 = vshrl.u32 %v3265, 7
    %v3267 = vsub.s32 0, %v3266
    %v3268 = vrot.slane %v3228, %v3267
    %v3397 = vunpack.c.l.b16 %v3064
    %v3398 = vunpack.c.h.b16 %v3064
    %v3399 = vunpack.c.l.b16 %v3065
    %v3400 = vunpack.c.h.b16 %v3065
    %v3401 = vunpack.c.l.b16 %v3066
    %v3402 = vunpack.c.h.b16 %v3066
    %v3403 = vunpack.c.l.b16 %v3067
    %v3404 = vunpack.c.h.b16 %v3067
    %v3405 = vunpack.c.l.b16 %v3068
    %v3406 = vunpack.c.h.b16 %v3068
    %v3407 = vunpack.c.l.b16 %v3069
    %v3408 = vunpack.c.h.b16 %v3069
    %v3409 = vunpack.c.l.b16 %v3070
    %v3410 = vunpack.c.h.b16 %v3070
    %v3411 = vunpack.c.l.b16 %v3071
    %v3412 = vunpack.c.h.b16 %v3071
    %v3413 = vunpack.c.l.b16 %v3072
    %v3414 = vunpack.c.h.b16 %v3072
    %v3415 = vunpack.c.l.b16 %v3073
    %v3416 = vunpack.c.h.b16 %v3073
    %v3417 = vunpack.c.l.b16 %v3074
    %v3418 = vunpack.c.h.b16 %v3074
    %v3419 = vunpack.c.l.b16 %v3075
    %v3420 = vunpack.c.h.b16 %v3075
    %v3421 = vunpack.c.l.b16 %v3076
    %v3422 = vunpack.c.h.b16 %v3076
    %v3423 = vunpack.c.l.b16 %v3077
    %v3424 = vunpack.c.h.b16 %v3077
    %v3425 = vunpack.c.l.b16 %v3078
    %v3426 = vunpack.c.h.b16 %v3078
    %v3427 = vunpack.c.l.b16 %v3079
    %v3428 = vunpack.c.h.b16 %v3079
    %v3429 = vunpack.c.l.b16 %v3080
    %v3430 = vunpack.c.h.b16 %v3080
    %v3431 = vunpack.c.l.b16 %v3081
    %v3432 = vunpack.c.h.b16 %v3081
    %v3433 = vunpack.c.l.b16 %v3082
    %v3434 = vunpack.c.h.b16 %v3082
    %v3435 = vunpack.c.l.b16 %v3083
    %v3436 = vunpack.c.h.b16 %v3083
    %v3437 = vunpack.c.l.b16 %v3084
    %v3438 = vunpack.c.h.b16 %v3084
    %v3439 = vunpack.c.l.b16 %v3085
    %v3440 = vunpack.c.h.b16 %v3085
    %v3441 = vunpack.c.l.b16 %v3086
    %v3442 = vunpack.c.h.b16 %v3086
    %v3443 = vunpack.c.l.b16 %v3087
    %v3444 = vunpack.c.h.b16 %v3087
    %v3445 = vunpack.c.l.b16 %v3088
    %v3446 = vunpack.c.h.b16 %v3088
    %v3447 = vunpack.c.l.b16 %v3089
    %v3448 = vunpack.c.h.b16 %v3089
    %v3449 = vunpack.c.l.b16 %v3090
    %v3450 = vunpack.c.h.b16 %v3090
    %v3451 = vunpack.c.l.b16 %v3091
    %v3452 = vunpack.c.h.b16 %v3091
    %v3453 = vunpack.c.l.b16 %v3092
    %v3454 = vunpack.c.h.b16 %v3092
    %v3455 = vunpack.c.l.b16 %v3093
    %v3456 = vunpack.c.h.b16 %v3093
    %v3457 = vunpack.c.l.b16 %v3094
    %v3458 = vunpack.c.h.b16 %v3094
    %v3459 = vunpack.c.l.b16 %v3095
    %v3460 = vunpack.c.h.b16 %v3095
    %v3461 = vunpack.c.l.b16 %v3096
    %v3462 = vunpack.c.h.b16 %v3096
    %v3463 = vunpack.c.l.b16 %v3097
    %v3464 = vunpack.c.h.b16 %v3097
    %v3465 = vunpack.c.l.b16 %v3098
    %v3466 = vunpack.c.h.b16 %v3098
    %v3467 = vunpack.c.l.b16 %v3099
    %v3468 = vunpack.c.h.b16 %v3099
    %v3469 = vunpack.c.l.b16 %v3100
    %v3470 = vunpack.c.h.b16 %v3100
    %v3471 = vunpack.c.l.b16 %v3101
    %v3472 = vunpack.c.h.b16 %v3101
    %v3473 = vunpack.c.l.b16 %v3102
    %v3474 = vunpack.c.h.b16 %v3102
    %v3475 = vunpack.c.l.b16 %v3103
    %v3476 = vunpack.c.h.b16 %v3103
    %v3477 = vunpack.c.l.b16 %v3104
    %v3478 = vunpack.c.h.b16 %v3104
    %v3479 = vunpack.c.l.b16 %v3105
    %v3480 = vunpack.c.h.b16 %v3105
    %v3481 = vunpack.c.l.b16 %v3106
    %v3482 = vunpack.c.h.b16 %v3106
    %v3483 = vunpack.c.l.b16 %v3107
    %v3484 = vunpack.c.h.b16 %v3107
    %v3485 = vunpack.c.l.b16 %v3108
    %v3486 = vunpack.c.h.b16 %v3108
    %v3487 = vunpack.c.l.b16 %v3109
    %v3488 = vunpack.c.h.b16 %v3109
    %v3489 = vunpack.c.l.b16 %v3110
    %v3490 = vunpack.c.h.b16 %v3110
    %v3491 = vunpack.c.l.b16 %v3111
    %v3492 = vunpack.c.h.b16 %v3111
    %v3493 = vunpack.c.l.b16 %v3112
    %v3494 = vunpack.c.h.b16 %v3112
    %v3495 = vunpack.c.l.b16 %v3113
    %v3496 = vunpack.c.h.b16 %v3113
    %v3497 = vunpack.c.l.b16 %v3114
    %v3498 = vunpack.c.h.b16 %v3114
    %v3499 = vunpack.c.l.b16 %v3115
    %v3500 = vunpack.c.h.b16 %v3115
    %v3501 = vunpack.c.l.b16 %v3116
    %v3502 = vunpack.c.h.b16 %v3116
    %v3503 = vunpack.c.l.b16 %v3117
    %v3504 = vunpack.c.h.b16 %v3117
    %v3505 = vunpack.c.l.b16 %v3118
    %v3506 = vunpack.c.h.b16 %v3118
    %v3507 = vunpack.c.l.b16 %v3119
    %v3508 = vunpack.c.h.b16 %v3119
    %v3509 = vunpack.c.l.b16 %v3120
    %v3510 = vunpack.c.h.b16 %v3120
    %v3511 = vunpack.c.l.b16 %v3121
    %v3512 = vunpack.c.h.b16 %v3121
    %v3513 = vunpack.c.l.b16 %v3122
    %v3514 = vunpack.c.h.b16 %v3122
    %v3515 = vunpack.c.l.b16 %v3123
    %v3516 = vunpack.c.h.b16 %v3123
    %v3517 = vunpack.c.l.b16 %v3124
    %v3518 = vunpack.c.h.b16 %v3124
    %v3519 = vunpack.c.l.b16 %v3125
    %v3520 = vunpack.c.h.b16 %v3125
    %v3521 = vunpack.c.l.b16 %v3126
    %v3522 = vunpack.c.h.b16 %v3126
    %v3523 = vunpack.c.l.b16 %v3127
    %v3524 = vunpack.c.h.b16 %v3127
    %v3525 = vunpack.c.l.b16 %v3128
    %v3526 = vunpack.c.h.b16 %v3128
    %v3527 = vunpack.c.l.b16 %v3129
    %v3528 = vunpack.c.h.b16 %v3129
    %v3529 = vunpack.c.l.b16 %v3130
    %v3530 = vunpack.c.h.b16 %v3130
    %v3531 = vunpack.c.l.b16 %v3131
    %v3532 = vunpack.c.h.b16 %v3131
    %v3533 = vunpack.c.l.b16 %v3132
    %v3534 = vunpack.c.h.b16 %v3132
    %v3535 = vunpack.c.l.b16 %v3133
    %v3536 = vunpack.c.h.b16 %v3133
    %v3537 = vunpack.c.l.b16 %v3134
    %v3538 = vunpack.c.h.b16 %v3134
    %v3539 = vunpack.c.l.b16 %v3135
    %v3540 = vunpack.c.h.b16 %v3135
    %v3541 = vunpack.c.l.b16 %v3136
    %v3542 = vunpack.c.h.b16 %v3136
    %v3543 = vunpack.c.l.b16 %v3137
    %v3544 = vunpack.c.h.b16 %v3137
    %v3545 = vunpack.c.l.b16 %v3138
    %v3546 = vunpack.c.h.b16 %v3138
    %v3547 = vunpack.c.l.b16 %v3139
    %v3548 = vunpack.c.h.b16 %v3139
    %v3549 = vunpack.c.l.b16 %v3140
    %v3550 = vunpack.c.h.b16 %v3140
    %v3551 = vunpack.c.l.b16 %v3141
    %v3552 = vunpack.c.h.b16 %v3141
    %v3553 = vunpack.c.l.b16 %v3142
    %v3554 = vunpack.c.h.b16 %v3142
    %v3555 = vunpack.c.l.b16 %v3143
    %v3556 = vunpack.c.h.b16 %v3143
    %v3557 = vunpack.c.l.b16 %v3144
    %v3558 = vunpack.c.h.b16 %v3144
    %v3559 = vunpack.c.l.b16 %v3145
    %v3560 = vunpack.c.h.b16 %v3145
    %v3561 = vunpack.c.l.b16 %v3146
    %v3562 = vunpack.c.h.b16 %v3146
    %v3563 = vunpack.c.l.b16 %v3147
    %v3564 = vunpack.c.h.b16 %v3147
    %v3565 = vunpack.c.l.b16 %v3148
    %v3566 = vunpack.c.h.b16 %v3148
    %v3567 = vunpack.c.l.b16 %v3149
    %v3568 = vunpack.c.h.b16 %v3149
    %v3569 = vunpack.c.l.b16 %v3150
    %v3570 = vunpack.c.h.b16 %v3150
    %v3571 = vunpack.c.l.b16 %v3151
    %v3572 = vunpack.c.h.b16 %v3151
    %v3573 = vunpack.c.l.b16 %v3152
    %v3574 = vunpack.c.h.b16 %v3152
    %v3575 = vunpack.c.l.b16 %v3153
    %v3576 = vunpack.c.h.b16 %v3153
    %v3577 = vunpack.c.l.b16 %v3154
    %v3578 = vunpack.c.h.b16 %v3154
    %v3579 = vunpack.c.l.b16 %v3155
    %v3580 = vunpack.c.h.b16 %v3155
    %v3581 = vunpack.c.l.b16 %v3156
    %v3582 = vunpack.c.h.b16 %v3156
    %v3583 = vunpack.c.l.b16 %v3157
    %v3584 = vunpack.c.h.b16 %v3157
    %v3585 = vunpack.c.l.b16 %v3158
    %v3586 = vunpack.c.h.b16 %v3158
    %v3587 = vunpack.c.l.b16 %v3159
    %v3588 = vunpack.c.h.b16 %v3159
    %v3589 = vunpack.c.l.b16 %v3160
    %v3590 = vunpack.c.h.b16 %v3160
    %v3591 = vunpack.c.l.b16 %v3161
    %v3592 = vunpack.c.h.b16 %v3161
    %v3593 = vunpack.c.l.b16 %v3162
    %v3594 = vunpack.c.h.b16 %v3162
    %v3595 = vunpack.c.l.b16 %v3163
    %v3596 = vunpack.c.h.b16 %v3163
    %v3597 = vunpack.c.l.b16 %v3164
    %v3598 = vunpack.c.h.b16 %v3164
    %v3599 = vunpack.c.l.b16 %v3165
    %v3600 = vunpack.c.h.b16 %v3165
    %v3601 = vunpack.c.l.b16 %v3166
    %v3602 = vunpack.c.h.b16 %v3166
    %v3603 = vunpack.c.l.b16 %v3167
    %v3604 = vunpack.c.h.b16 %v3167
    %v3605 = vunpack.c.l.b16 %v3168
    %v3606 = vunpack.c.h.b16 %v3168
    %v3607 = vunpack.c.l.b16 %v3169
    %v3608 = vunpack.c.h.b16 %v3169
    %v3609 = vunpack.c.l.b16 %v3170
    %v3610 = vunpack.c.h.b16 %v3170
    %v3611 = vunpack.c.l.b16 %v3171
    %v3612 = vunpack.c.h.b16 %v3171
    %v3613 = vunpack.c.l.b16 %v3172
    %v3614 = vunpack.c.h.b16 %v3172
    %v3615 = vunpack.c.l.b16 %v3173
    %v3616 = vunpack.c.h.b16 %v3173
    %v3617 = vunpack.c.l.b16 %v3174
    %v3618 = vunpack.c.h.b16 %v3174
    %v3619 = vunpack.c.l.b16 %v3175
    %v3620 = vunpack.c.h.b16 %v3175
    %v3621 = vunpack.c.l.b16 %v3176
    %v3622 = vunpack.c.h.b16 %v3176
    %v3623 = vunpack.c.l.b16 %v3177
    %v3624 = vunpack.c.h.b16 %v3177
    %v3625 = vunpack.c.l.b16 %v3178
    %v3626 = vunpack.c.h.b16 %v3178
    %v3627 = vunpack.c.l.b16 %v3179
    %v3628 = vunpack.c.h.b16 %v3179
    %v3629 = vunpack.c.l.b16 %v3180
    %v3630 = vunpack.c.h.b16 %v3180
    %v3631 = vunpack.c.l.b16 %v3181
    %v3632 = vunpack.c.h.b16 %v3181
    %v3633 = vunpack.c.l.b16 %v3182
    %v3634 = vunpack.c.h.b16 %v3182
    %v3635 = vunpack.c.l.b16 %v3183
    %v3636 = vunpack.c.h.b16 %v3183
    %v3637 = vunpack.c.l.b16 %v3184
    %v3638 = vunpack.c.h.b16 %v3184
    %v3639 = vunpack.c.l.b16 %v3185
    %v3640 = vunpack.c.h.b16 %v3185
    %v3641 = vunpack.c.l.b16 %v3186
    %v3642 = vunpack.c.h.b16 %v3186
    %v3643 = vunpack.c.l.b16 %v3187
    %v3644 = vunpack.c.h.b16 %v3187
    %v3645 = vunpack.c.l.b16 %v3188
    %v3646 = vunpack.c.h.b16 %v3188
    %v3647 = vunpack.c.l.b16 %v3189
    %v3648 = vunpack.c.h.b16 %v3189
    %v3649 = vunpack.c.l.b16 %v3190
    %v3650 = vunpack.c.h.b16 %v3190
    %v3651 = vunpack.c.l.b16 %v3191
    %v3652 = vunpack.c.h.b16 %v3191
    %v3653 = vpack.c.b16 %v3405, %v3397
    %v3654 = vpack.c.b16 %v3406, %v3398
    %v3655 = vpack.c.b16 %v3407, %v3399
    %v3656 = vpack.c.b16 %v3408, %v3400
    %v3657 = vpack.c.b16 %v3409, %v3401
    %v3658 = vpack.c.b16 %v3410, %v3402
    %v3659 = vpack.c.b16 %v3411, %v3403
    %v3660 = vpack.c.b16 %v3412, %v3404
    %v3661 = vpack.c.b16 %v3421, %v3413
    %v3662 = vpack.c.b16 %v3422, %v3414
    %v3663 = vpack.c.b16 %v3423, %v3415
    %v3664 = vpack.c.b16 %v3424, %v3416
    %v3665 = vpack.c.b16 %v3425, %v3417
    %v3666 = vpack.c.b16 %v3426, %v3418
    %v3667 = vpack.c.b16 %v3427, %v3419
    %v3668 = vpack.c.b16 %v3428, %v3420
    %v3669 = vpack.c.b16 %v3437, %v3429
    %v3670 = vpack.c.b16 %v3438, %v3430
    %v3671 = vpack.c.b16 %v3439, %v3431
    %v3672 = vpack.c.b16 %v3440, %v3432
    %v3673 = vpack.c.b16 %v3441, %v3433
    %v3674 = vpack.c.b16 %v3442, %v3434
    %v3675 = vpack.c.b16 %v3443, %v3435
    %v3676 = vpack.c.b16 %v3444, %v3436
    %v3677 = vpack.c.b16 %v3453, %v3445
    %v3678 = vpack.c.b16 %v3454, %v3446
    %v3679 = vpack.c.b16 %v3455, %v3447
    %v3680 = vpack.c.b16 %v3456, %v3448
    %v3681 = vpack.c.b16 %v3457, %v3449
    %v3682 = vpack.c.b16 %v3458, %v3450
    %v3683 = vpack.c.b16 %v3459, %v3451
    %v3684 = vpack.c.b16 %v3460, %v3452
    %v3685 = vpack.c.b16 %v3469, %v3461
    %v3686 = vpack.c.b16 %v3470, %v3462
    %v3687 = vpack.c.b16 %v3471, %v3463
    %v3688 = vpack.c.b16 %v3472, %v3464
    %v3689 = vpack.c.b16 %v3473, %v3465
    %v3690 = vpack.c.b16 %v3474, %v3466
    %v3691 = vpack.c.b16 %v3475, %v3467
    %v3692 = vpack.c.b16 %v3476, %v3468
    %v3693 = vpack.c.b16 %v3485, %v3477
    %v3694 = vpack.c.b16 %v3486, %v3478
    %v3695 = vpack.c.b16 %v3487, %v3479
    %v3696 = vpack.c.b16 %v3488, %v3480
    %v3697 = vpack.c.b16 %v3489, %v3481
    %v3698 = vpack.c.b16 %v3490, %v3482
    %v3699 = vpack.c.b16 %v3491, %v3483
    %v3700 = vpack.c.b16 %v3492, %v3484
    %v3701 = vpack.c.b16 %v3501, %v3493
    %v3702 = vpack.c.b16 %v3502, %v3494
    %v3703 = vpack.c.b16 %v3503, %v3495
    %v3704 = vpack.c.b16 %v3504, %v3496
    %v3705 = vpack.c.b16 %v3505, %v3497
    %v3706 = vpack.c.b16 %v3506, %v3498
    %v3707 = vpack.c.b16 %v3507, %v3499
    %v3708 = vpack.c.b16 %v3508, %v3500
    %v3709 = vpack.c.b16 %v3517, %v3509
    %v3710 = vpack.c.b16 %v3518, %v3510
    %v3711 = vpack.c.b16 %v3519, %v3511
    %v3712 = vpack.c.b16 %v3520, %v3512
    %v3713 = vpack.c.b16 %v3521, %v3513
    %v3714 = vpack.c.b16 %v3522, %v3514
    %v3715 = vpack.c.b16 %v3523, %v3515
    %v3716 = vpack.c.b16 %v3524, %v3516
    %v3717 = vpack.c.b16 %v3533, %v3525
    %v3718 = vpack.c.b16 %v3534, %v3526
    %v3719 = vpack.c.b16 %v3535, %v3527
    %v3720 = vpack.c.b16 %v3536, %v3528
    %v3721 = vpack.c.b16 %v3537, %v3529
    %v3722 = vpack.c.b16 %v3538, %v3530
    %v3723 = vpack.c.b16 %v3539, %v3531
    %v3724 = vpack.c.b16 %v3540, %v3532
    %v3725 = vpack.c.b16 %v3549, %v3541
    %v3726 = vpack.c.b16 %v3550, %v3542
    %v3727 = vpack.c.b16 %v3551, %v3543
    %v3728 = vpack.c.b16 %v3552, %v3544
    %v3729 = vpack.c.b16 %v3553, %v3545
    %v3730 = vpack.c.b16 %v3554, %v3546
    %v3731 = vpack.c.b16 %v3555, %v3547
    %v3732 = vpack.c.b16 %v3556, %v3548
    %v3733 = vpack.c.b16 %v3565, %v3557
    %v3734 = vpack.c.b16 %v3566, %v3558
    %v3735 = vpack.c.b16 %v3567, %v3559
    %v3736 = vpack.c.b16 %v3568, %v3560
    %v3737 = vpack.c.b16 %v3569, %v3561
    %v3738 = vpack.c.b16 %v3570, %v3562
    %v3739 = vpack.c.b16 %v3571, %v3563
    %v3740 = vpack.c.b16 %v3572, %v3564
    %v3741 = vpack.c.b16 %v3581, %v3573
    %v3742 = vpack.c.b16 %v3582, %v3574
    %v3743 = vpack.c.b16 %v3583, %v3575
    %v3744 = vpack.c.b16 %v3584, %v3576
    %v3745 = vpack.c.b16 %v3585, %v3577
    %v3746 = vpack.c.b16 %v3586, %v3578
    %v3747 = vpack.c.b16 %v3587, %v3579
    %v3748 = vpack.c.b16 %v3588, %v3580
    %v3749 = vpack.c.b16 %v3597, %v3589
    %v3750 = vpack.c.b16 %v3598, %v3590
    %v3751 = vpack.c.b16 %v3599, %v3591
    %v3752 = vpack.c.b16 %v3600, %v3592
    %v3753 = vpack.c.b16 %v3601, %v3593
    %v3754 = vpack.c.b16 %v3602, %v3594
    %v3755 = vpack.c.b16 %v3603, %v3595
    %v3756 = vpack.c.b16 %v3604, %v3596
    %v3757 = vpack.c.b16 %v3613, %v3605
    %v3758 = vpack.c.b16 %v3614, %v3606
    %v3759 = vpack.c.b16 %v3615, %v3607
    %v3760 = vpack.c.b16 %v3616, %v3608
    %v3761 = vpack.c.b16 %v3617, %v3609
    %v3762 = vpack.c.b16 %v3618, %v3610
    %v3763 = vpack.c.b16 %v3619, %v3611
    %v3764 = vpack.c.b16 %v3620, %v3612
    %v3765 = vpack.c.b16 %v3629, %v3621
    %v3766 = vpack.c.b16 %v3630, %v3622
    %v3767 = vpack.c.b16 %v3631, %v3623
    %v3768 = vpack.c.b16 %v3632, %v3624
    %v3769 = vpack.c.b16 %v3633, %v3625
    %v3770 = vpack.c.b16 %v3634, %v3626
    %v3771 = vpack.c.b16 %v3635, %v3627
    %v3772 = vpack.c.b16 %v3636, %v3628
    %v3773 = vpack.c.b16 %v3645, %v3637
    %v3774 = vpack.c.b16 %v3646, %v3638
    %v3775 = vpack.c.b16 %v3647, %v3639
    %v3776 = vpack.c.b16 %v3648, %v3640
    %v3777 = vpack.c.b16 %v3649, %v3641
    %v3778 = vpack.c.b16 %v3650, %v3642
    %v3779 = vpack.c.b16 %v3651, %v3643
    %v3780 = vpack.c.b16 %v3652, %v3644
    %3909 = vmatprep.subr.bf16.mxu0 %v3654
    %3910 = vmatpush1.bf16.msra.mxu0 %v3653
    %3911 = vmatprep.subr.bf16.mxu0 %v3662
    %3912 = vmatpush1.bf16.msra.mxu0 %v3661
    %3913 = vmatprep.subr.bf16.mxu0 %v3670
    %3914 = vmatpush1.bf16.msra.mxu0 %v3669
    %3915 = vmatprep.subr.bf16.mxu0 %v3678
    %3916 = vmatpush1.bf16.msra.mxu0 %v3677
    %3917 = vmatprep.subr.bf16.mxu0 %v3686
    %3918 = vmatpush1.bf16.msra.mxu0 %v3685
    %3919 = vmatprep.subr.bf16.mxu0 %v3694
    %3920 = vmatpush1.bf16.msra.mxu0 %v3693
    %3921 = vmatprep.subr.bf16.mxu0 %v3702
    %3922 = vmatpush1.bf16.msra.mxu0 %v3701
    %3923 = vmatprep.subr.bf16.mxu0 %v3710
    %3924 = vmatpush1.bf16.msra.mxu0 %v3709
    %3925 = vmatprep.subr.bf16.mxu0 %v3718
    %3926 = vmatpush1.bf16.msra.mxu0 %v3717
    %3927 = vmatprep.subr.bf16.mxu0 %v3726
    %3928 = vmatpush1.bf16.msra.mxu0 %v3725
    %3929 = vmatprep.subr.bf16.mxu0 %v3734
    %3930 = vmatpush1.bf16.msra.mxu0 %v3733
    %3931 = vmatprep.subr.bf16.mxu0 %v3742
    %3932 = vmatpush1.bf16.msra.mxu0 %v3741
    %3933 = vmatprep.subr.bf16.mxu0 %v3750
    %3934 = vmatpush1.bf16.msra.mxu0 %v3749
    %3935 = vmatprep.subr.bf16.mxu0 %v3758
    %3936 = vmatpush1.bf16.msra.mxu0 %v3757
    %3937 = vmatprep.subr.bf16.mxu0 %v3766
    %3938 = vmatpush1.bf16.msra.mxu0 %v3765
    %3939 = vmatprep.subr.bf16.mxu0 %v3774
    %3940 = vmatpush1.bf16.msra.mxu0 %v3773
    %3941 = vmatprep.mubr.bf16.mxu0 %v3063
    %3942 = vmatmul.mubr.bf16.gmra.mrb[0].mxu0 %v3062
    %v3943 = vpop.f32.mrb[0].mxu0
    %v3944 = vadd.f32 %v3240, %v3943
    %v3945 = vpop.f32.mrb[0].mxu0
    %v3946 = vadd.f32 %v3244, %v3945
    %v3947 = vpop.f32.mrb[0].mxu0
    %v3948 = vpop.f32.mrb[0].mxu0
    %3949 = vdwg.mxu0
    %3950 = vmatprep.subr.bf16.mxu0 %v3656
    %3951 = vmatpush1.bf16.msra.mxu0 %v3655
    %3952 = vmatprep.subr.bf16.mxu0 %v3664
    %3953 = vmatpush1.bf16.msra.mxu0 %v3663
    %3954 = vmatprep.subr.bf16.mxu0 %v3672
    %3955 = vmatpush1.bf16.msra.mxu0 %v3671
    %3956 = vmatprep.subr.bf16.mxu0 %v3680
    %3957 = vmatpush1.bf16.msra.mxu0 %v3679
    %3958 = vmatprep.subr.bf16.mxu0 %v3688
    %3959 = vmatpush1.bf16.msra.mxu0 %v3687
    %3960 = vmatprep.subr.bf16.mxu0 %v3696
    %3961 = vmatpush1.bf16.msra.mxu0 %v3695
    %3962 = vmatprep.subr.bf16.mxu0 %v3704
    %3963 = vmatpush1.bf16.msra.mxu0 %v3703
    %3964 = vmatprep.subr.bf16.mxu0 %v3712
    %3965 = vmatpush1.bf16.msra.mxu0 %v3711
    %3966 = vmatprep.subr.bf16.mxu0 %v3720
    %3967 = vmatpush1.bf16.msra.mxu0 %v3719
    %3968 = vmatprep.subr.bf16.mxu0 %v3728
    %3969 = vmatpush1.bf16.msra.mxu0 %v3727
    %3970 = vmatprep.subr.bf16.mxu0 %v3736
    %3971 = vmatpush1.bf16.msra.mxu0 %v3735
    %3972 = vmatprep.subr.bf16.mxu0 %v3744
    %3973 = vmatpush1.bf16.msra.mxu0 %v3743
    %3974 = vmatprep.subr.bf16.mxu0 %v3752
    %3975 = vmatpush1.bf16.msra.mxu0 %v3751
    %3976 = vmatprep.subr.bf16.mxu0 %v3760
    %3977 = vmatpush1.bf16.msra.mxu0 %v3759
    %3978 = vmatprep.subr.bf16.mxu0 %v3768
    %3979 = vmatpush1.bf16.msra.mxu0 %v3767
    %3980 = vmatprep.subr.bf16.mxu0 %v3776
    %3981 = vmatpush1.bf16.msra.mxu0 %v3775
    %3982 = vmatprep.mubr.bf16.mxu0 %v3063
    %3983 = vmatmul.mubr.bf16.gmra.mrb[0].mxu0 %v3062
    %v3984 = vpop.f32.mrb[0].mxu0
    %v3985 = vadd.f32 %v3248, %v3984
    %v3986 = vpop.f32.mrb[0].mxu0
    %v3987 = vadd.f32 %v3252, %v3986
    %v3988 = vpop.f32.mrb[0].mxu0
    %v3989 = vpop.f32.mrb[0].mxu0
    %3990 = vdwg.mxu0
    %3991 = vmatprep.subr.bf16.mxu0 %v3658
    %3992 = vmatpush1.bf16.msra.mxu0 %v3657
    %3993 = vmatprep.subr.bf16.mxu0 %v3666
    %3994 = vmatpush1.bf16.msra.mxu0 %v3665
    %3995 = vmatprep.subr.bf16.mxu0 %v3674
    %3996 = vmatpush1.bf16.msra.mxu0 %v3673
    %3997 = vmatprep.subr.bf16.mxu0 %v3682
    %3998 = vmatpush1.bf16.msra.mxu0 %v3681
    %3999 = vmatprep.subr.bf16.mxu0 %v3690
    %4000 = vmatpush1.bf16.msra.mxu0 %v3689
    %4001 = vmatprep.subr.bf16.mxu0 %v3698
    %4002 = vmatpush1.bf16.msra.mxu0 %v3697
    %4003 = vmatprep.subr.bf16.mxu0 %v3706
    %4004 = vmatpush1.bf16.msra.mxu0 %v3705
    %4005 = vmatprep.subr.bf16.mxu0 %v3714
    %4006 = vmatpush1.bf16.msra.mxu0 %v3713
    %4007 = vmatprep.subr.bf16.mxu0 %v3722
    %4008 = vmatpush1.bf16.msra.mxu0 %v3721
    %4009 = vmatprep.subr.bf16.mxu0 %v3730
    %4010 = vmatpush1.bf16.msra.mxu0 %v3729
    %4011 = vmatprep.subr.bf16.mxu0 %v3738
    %4012 = vmatpush1.bf16.msra.mxu0 %v3737
    %4013 = vmatprep.subr.bf16.mxu0 %v3746
    %4014 = vmatpush1.bf16.msra.mxu0 %v3745
    %4015 = vmatprep.subr.bf16.mxu0 %v3754
    %4016 = vmatpush1.bf16.msra.mxu0 %v3753
    %4017 = vmatprep.subr.bf16.mxu0 %v3762
    %4018 = vmatpush1.bf16.msra.mxu0 %v3761
    %4019 = vmatprep.subr.bf16.mxu0 %v3770
    %4020 = vmatpush1.bf16.msra.mxu0 %v3769
    %4021 = vmatprep.subr.bf16.mxu0 %v3778
    %4022 = vmatpush1.bf16.msra.mxu0 %v3777
    %4023 = vmatprep.mubr.bf16.mxu0 %v3063
    %4024 = vmatmul.mubr.bf16.gmra.mrb[0].mxu0 %v3062
    %v4025 = vpop.f32.mrb[0].mxu0
    %v4026 = vadd.f32 %v3256, %v4025
    %v4027 = vpop.f32.mrb[0].mxu0
    %v4028 = vadd.f32 %v3260, %v4027
    %v4029 = vpop.f32.mrb[0].mxu0
    %v4030 = vpop.f32.mrb[0].mxu0
    %4031 = vdwg.mxu0
    %4032 = vmatprep.subr.bf16.mxu0 %v3660
    %4033 = vmatpush1.bf16.msra.mxu0 %v3659
    %4034 = vmatprep.subr.bf16.mxu0 %v3668
    %4035 = vmatpush1.bf16.msra.mxu0 %v3667
    %4036 = vmatprep.subr.bf16.mxu0 %v3676
    %4037 = vmatpush1.bf16.msra.mxu0 %v3675
    %4038 = vmatprep.subr.bf16.mxu0 %v3684
    %4039 = vmatpush1.bf16.msra.mxu0 %v3683
    %4040 = vmatprep.subr.bf16.mxu0 %v3692
    %4041 = vmatpush1.bf16.msra.mxu0 %v3691
    %4042 = vmatprep.subr.bf16.mxu0 %v3700
    %4043 = vmatpush1.bf16.msra.mxu0 %v3699
    %4044 = vmatprep.subr.bf16.mxu0 %v3708
    %4045 = vmatpush1.bf16.msra.mxu0 %v3707
    %4046 = vmatprep.subr.bf16.mxu0 %v3716
    %4047 = vmatpush1.bf16.msra.mxu0 %v3715
    %4048 = vmatprep.subr.bf16.mxu0 %v3724
    %4049 = vmatpush1.bf16.msra.mxu0 %v3723
    %4050 = vmatprep.subr.bf16.mxu0 %v3732
    %4051 = vmatpush1.bf16.msra.mxu0 %v3731
    %4052 = vmatprep.subr.bf16.mxu0 %v3740
    %4053 = vmatpush1.bf16.msra.mxu0 %v3739
    %4054 = vmatprep.subr.bf16.mxu0 %v3748
    %4055 = vmatpush1.bf16.msra.mxu0 %v3747
    %4056 = vmatprep.subr.bf16.mxu0 %v3756
    %4057 = vmatpush1.bf16.msra.mxu0 %v3755
    %4058 = vmatprep.subr.bf16.mxu0 %v3764
    %4059 = vmatpush1.bf16.msra.mxu0 %v3763
    %4060 = vmatprep.subr.bf16.mxu0 %v3772
    %4061 = vmatpush1.bf16.msra.mxu0 %v3771
    %4062 = vmatprep.subr.bf16.mxu0 %v3780
    %4063 = vmatpush1.bf16.msra.mxu0 %v3779
    %4064 = vmatprep.mubr.bf16.mxu0 %v3063
    %4065 = vmatmul.mubr.bf16.gmra.mrb[0].mxu0 %v3062
    %v4066 = vpop.f32.mrb[0].mxu0
    %v4067 = vadd.f32 %v3264, %v4066
    %v4068 = vpop.f32.mrb[0].mxu0
    %v4069 = vadd.f32 %v3268, %v4068
    %v4070 = vpop.f32.mrb[0].mxu0
    %v4071 = vpop.f32.mrb[0].mxu0
    %4072 = vdwg.mxu0
    %v4073 = vld [vmem:[%s5] sm:$0x3]
    %v4074 = vlaneseq
    %v4075 = vand.u32 %v4074, 127
    %v4076 = vadd.s32 %v4075, 128
    %v4077 = vadd.s32 %v4075, 256
    %v4078 = vadd.s32 %v4075, 384
    %v4079 = vadd.s32 %v4075, 512
    %v4080 = vadd.s32 %v4075, 640
    %v4081 = vadd.s32 %v4075, 768
    %v4082 = vadd.s32 %v4075, 896
    %vm4083 = vcmp.lt.s32.totalorder %v4075, 1000
    %vm4084 = vcmp.lt.s32.totalorder %v4076, 1000
    %vm4085 = vcmp.lt.s32.totalorder %v4077, 1000
    %vm4086 = vcmp.lt.s32.totalorder %v4078, 1000
    %vm4087 = vcmp.lt.s32.totalorder %v4079, 1000
    %vm4088 = vcmp.lt.s32.totalorder %v4080, 1000
    %vm4089 = vcmp.lt.s32.totalorder %v4081, 1000
    %vm4090 = vcmp.lt.s32.totalorder %v4082, 1000
    %v4091 = vsel %vm4083, %v3944, -1e+30
    %v4092 = vsel %vm4084, %v3946, -1e+30
    %v4093 = vsel %vm4085, %v3985, -1e+30
    %v4094 = vsel %vm4086, %v3987, -1e+30
    %v4095 = vsel %vm4087, %v4026, -1e+30
    %v4096 = vsel %vm4088, %v4028, -1e+30
    %v4097 = vsel %vm4089, %v4067, -1e+30
    %v4098 = vsel %vm4090, %v4069, -1e+30
    %vm4099 = vcmask 1041408
    %v4100 = vsel %vm4099, %v4091, -inf
    %v4101 = vsel %vm4099, %v4092, -inf
    %v4102 = vsel %vm4099, %v4093, -inf
    %v4103 = vsel %vm4099, %v4094, -inf
    %v4104 = vsel %vm4099, %v4095, -inf
    %v4105 = vmax.f32 %v4100, %v4104
    %v4106 = vsel %vm4099, %v4096, -inf
    %v4107 = vmax.f32 %v4101, %v4106
    %v4108 = vsel %vm4099, %v4097, -inf
    %v4109 = vmax.f32 %v4102, %v4108
    %v4110 = vsel %vm4099, %v4098, -inf
    %v4111 = vmax.f32 %v4103, %v4110
    %v4112 = vmax.f32 %v4105, %v4107
    %v4113 = vmax.f32 %v4109, %v4111
    %v4114 = vmax.f32 %v4112, %v4113
    %4115 = vmax.xlane.f32.xlu0 %v4114
    %v4116 = vpop.xlane.xlu0 %4115
    %v4117 = vsub.f32 %v4091, %v4116
    %v4118 = vsub.f32 %v4092, %v4116
    %v4119 = vsub.f32 %v4093, %v4116
    %v4120 = vsub.f32 %v4094, %v4116
    %v4121 = vsub.f32 %v4095, %v4116
    %v4122 = vsub.f32 %v4096, %v4116
    %v4123 = vsub.f32 %v4097, %v4116
    %v4124 = vsub.f32 %v4098, %v4116
    %v4125 = vmul.f32 %v4117, 1.442695
    %v4126 = vpow.pop %v4125
    %v4127 = vmul.f32 %v4118, 1.442695
    %v4128 = vpow.pop %v4127
    %v4129 = vmul.f32 %v4119, 1.442695
    %v4130 = vpow.pop %v4129
    %v4131 = vmul.f32 %v4120, 1.442695
    %v4132 = vpow.pop %v4131
    %v4133 = vmul.f32 %v4121, 1.442695
    %v4134 = vpow.pop %v4133
    %v4135 = vmul.f32 %v4122, 1.442695
    %v4136 = vpow.pop %v4135
    %v4137 = vmul.f32 %v4123, 1.442695
    %v4138 = vpow.pop %v4137
    %v4139 = vmul.f32 %v4124, 1.442695
    %v4140 = vpow.pop %v4139
    %v4141 = vsel %vm4099, %v4126, 0.0
    %v4142 = vsel %vm4099, %v4128, 0.0
    %v4143 = vadd.f32 %v4141, %v4142
    %v4144 = vsel %vm4099, %v4130, 0.0
    %v4145 = vadd.f32 %v4143, %v4144
    %v4146 = vsel %vm4099, %v4132, 0.0
    %v4147 = vadd.f32 %v4145, %v4146
    %v4148 = vsel %vm4099, %v4134, 0.0
    %v4149 = vadd.f32 %v4147, %v4148
    %v4150 = vsel %vm4099, %v4136, 0.0
    %v4151 = vadd.f32 %v4149, %v4150
    %v4152 = vsel %vm4099, %v4138, 0.0
    %v4153 = vadd.f32 %v4151, %v4152
    %v4154 = vsel %vm4099, %v4140, 0.0
    %v4155 = vadd.f32 %v4153, %v4154
    %4156 = vadd.xlane.f32.xlu0 %v4155
    %v4157 = vpop.xlane.xlu0 %4156
    %v4158 = vlog2.pop %v4157
    %v4159 = vmul.f32 %v4158, 0.6931472
    %v4160 = vadd.f32 %v4116, %v4159
    %4161 = vset.pattern.permute.xlu0 0
    %4162 = vperm.xlu0 %4161, %v4073
    %v4163 = vpop.permute.xlu0 %4162
    %vm4164 = vcmp.eq.s32.totalorder %v4075, %v4163
    %vm4165 = vcmp.eq.s32.totalorder %v4076, %v4163
    %vm4166 = vcmp.eq.s32.totalorder %v4077, %v4163
    %vm4167 = vcmp.eq.s32.totalorder %v4078, %v4163
    %vm4168 = vcmp.eq.s32.totalorder %v4079, %v4163
    %vm4169 = vcmp.eq.s32.totalorder %v4080, %v4163
    %vm4170 = vcmp.eq.s32.totalorder %v4081, %v4163
    %vm4171 = vcmp.eq.s32.totalorder %v4082, %v4163
    %v4172 = vsel %vm4164, %v4091, 0.0
    %v4173 = vsel %vm4165, %v4092, 0.0
    %v4174 = vsel %vm4166, %v4093, 0.0
    %v4175 = vsel %vm4167, %v4094, 0.0
    %v4176 = vsel %vm4168, %v4095, 0.0
    %v4177 = vsel %vm4169, %v4096, 0.0
    %v4178 = vsel %vm4170, %v4097, 0.0
    %v4179 = vsel %vm4171, %v4098, 0.0
    %v4180 = vsel %vm4099, %v4172, 0.0
    %v4181 = vsel %vm4099, %v4173, 0.0
    %v4182 = vadd.f32 %v4180, %v4181
    %v4183 = vsel %vm4099, %v4174, 0.0
    %v4184 = vadd.f32 %v4182, %v4183
    %v4185 = vsel %vm4099, %v4175, 0.0
    %v4186 = vadd.f32 %v4184, %v4185
    %v4187 = vsel %vm4099, %v4176, 0.0
    %v4188 = vadd.f32 %v4186, %v4187
    %v4189 = vsel %vm4099, %v4177, 0.0
    %v4190 = vadd.f32 %v4188, %v4189
    %v4191 = vsel %vm4099, %v4178, 0.0
    %v4192 = vadd.f32 %v4190, %v4191
    %v4193 = vsel %vm4099, %v4179, 0.0
    %v4194 = vadd.f32 %v4192, %v4193
    %4195 = vadd.xlane.f32.xlu0 %v4194
    %v4196 = vpop.xlane.xlu0 %4195
    %v4197 = vsub.f32 %v4160, %v4196
    %vm4198 = vcmask 1024
    %v4199 = vsel %vm4198, %v4197, 0.0
    %4200 = vadd.xlane.f32.xlu0 %v4199
    %v4201 = vpop.xlane.xlu0 %4200
    %v4202 = vrot.slane %v4201, 4
    %v4203 = vadd.f32 %v4201, %v4202
    %v4204 = vrot.slane %v4203, 2
    %v4205 = vadd.f32 %v4203, %v4204
    %v4206 = vrot.slane %v4205, 1
    %v4207 = vadd.f32 %v4205, %v4206
    %s4208 = vtos %v4207
    %v4209 = vrcp.pop 2.0
    %s4210 = vtos %v4209
    %s4211 = smul.f32 %s4208, %s4210
    %s4212 = scalar_lea.smem [#allocation10], 0
    %4213 = sst [smem:[%s4212]] %s4211
    %vm4214 = vcmp.eq.f32.partialorder %v4091, %v4116
    %vm4215 = vcmp.eq.f32.partialorder %v4092, %v4116
    %vm4216 = vcmp.eq.f32.partialorder %v4093, %v4116
    %vm4217 = vcmp.eq.f32.partialorder %v4094, %v4116
    %vm4218 = vcmp.eq.f32.partialorder %v4095, %v4116
    %vm4219 = vcmp.eq.f32.partialorder %v4096, %v4116
    %vm4220 = vcmp.eq.f32.partialorder %v4097, %v4116
    %vm4221 = vcmp.eq.f32.partialorder %v4098, %v4116
    %v4222 = vsel %vm4214, %v4075, 1024
    %v4223 = vsel %vm4215, %v4076, 1024
    %v4224 = vsel %vm4216, %v4077, 1024
    %v4225 = vsel %vm4217, %v4078, 1024
    %v4226 = vsel %vm4218, %v4079, 1024
    %v4227 = vsel %vm4219, %v4080, 1024
    %v4228 = vsel %vm4220, %v4081, 1024
    %v4229 = vsel %vm4221, %v4082, 1024
    %v4230 = vsel %vm4099, %v4222, 2147483647
    %v4231 = vsel %vm4099, %v4223, 2147483647
    %v4232 = vsel %vm4099, %v4224, 2147483647
    %v4233 = vsel %vm4099, %v4225, 2147483647
    %v4234 = vsel %vm4099, %v4226, 2147483647
    %vm4235 = vcmp.lt.s32.totalorder %v4230, %v4234
    %v4236 = vsel %vm4235, %v4230, %v4234
    %v4237 = vsel %vm4099, %v4227, 2147483647
    %vm4238 = vcmp.lt.s32.totalorder %v4231, %v4237
    %v4239 = vsel %vm4238, %v4231, %v4237
    %v4240 = vsel %vm4099, %v4228, 2147483647
    %vm4241 = vcmp.lt.s32.totalorder %v4232, %v4240
    %v4242 = vsel %vm4241, %v4232, %v4240
    %v4243 = vsel %vm4099, %v4229, 2147483647
    %vm4244 = vcmp.lt.s32.totalorder %v4233, %v4243
    %v4245 = vsel %vm4244, %v4233, %v4243
    %vm4246 = vcmp.lt.s32.totalorder %v4236, %v4239
    %v4247 = vsel %vm4246, %v4236, %v4239
    %vm4248 = vcmp.lt.s32.totalorder %v4242, %v4245
    %v4249 = vsel %vm4248, %v4242, %v4245
    %vm4250 = vcmp.lt.s32.totalorder %v4247, %v4249
    %v4251 = vsel %vm4250, %v4247, %v4249
    %v4252 = vand.u32 %v4251, 65535
    %v4253 = vshra.s32 %v4251, 16
    %v4254 = vcvt.s32.f32 %v4252
    %v4255 = vcvt.s32.f32 %v4253
    %4256 = vmin.xlane.f32.xlu0 %v4255
    %v4257 = vpop.xlane.xlu0 %4256
    %vm4258 = vcmp.eq.f32.partialorder %v4255, %v4257
    %v4259 = vsel %vm4258, %v4254, inf
    %4260 = vmin.xlane.f32.xlu0 %v4259
    %v4261 = vpop.xlane.xlu0 %4260
    %v4262 = vcvt.f32.s32 %v4261
    %v4263 = vcvt.f32.s32 %v4257
    %v4264 = vshll.u32 %v4263, 16
    %v4265 = vadd.s32 %v4264, %v4262
    %vm4266 = vcmp.eq.s32.totalorder %v4265, %v4073
    %v4267 = vsel %vm4266, 1, 0
    %v4268 = vcvt.s32.f32 %v4267
    %v4269 = vsel %vm4198, %v4268, 0.0
    %4270 = vadd.xlane.f32.xlu0 %v4269
    %v4271 = vpop.xlane.xlu0 %4270
    %v4272 = vrot.slane %v4271, 4
    %v4273 = vadd.f32 %v4271, %v4272
    %v4274 = vrot.slane %v4273, 2
    %v4275 = vadd.f32 %v4273, %v4274
    %v4276 = vrot.slane %v4275, 1
    %v4277 = vadd.f32 %v4275, %v4276
    %s4278 = vtos %v4277
    %v4279 = vrcp.pop 2.0
    %s4280 = vtos %v4279
    %s4281 = smul.f32 %s4278, %s4280
    %s4282 = scalar_lea.smem [#allocation11], 0
    %4283 = sst [smem:[%s4282]] %s4281
    // Predicated region
    $region42: #{clsloss_forward.1} parent=1 // pred_check
      _
    $region43: #{clsloss_forward.1} parent=1 // pred_check_branch
      %4285 = sbr.rel (0) target = $region45
    $region44: #{clsloss_forward.1} parent=1 // pred_region
      %s4287 = ssub.s32 16, 16
      %4288 = vsyncadd [#allocation4], %s4287
      %4291 = dma.smem_to_hbm [#allocation10], 16, %s6, [#allocation4]
    $region45: #{clsloss_forward.1} parent=1 // pred_fallthru
      _
    // Predicated region
    $region46: #{clsloss_forward.1} parent=1 // pred_check
      _
    $region47: #{clsloss_forward.1} parent=1 // pred_check_branch
      %4293 = sbr.rel (0) target = $region49
    $region48: #{clsloss_forward.1} parent=1 // pred_region
      %s4295 = ssub.s32 16, 16
      %4296 = vsyncadd [#allocation12], %s4295
      %4299 = dma.smem_to_hbm [#allocation11], 16, %s7, [#allocation12]
    $region49: #{clsloss_forward.1} parent=1 // pred_fallthru
      _
    // Predicated region
    $region50: #{clsloss_forward.1} parent=1 // pred_check
      _
    $region51: #{clsloss_forward.1} parent=1 // pred_check_branch
      %4301 = sbr.rel (0) target = $region53
    $region52: #{clsloss_forward.1} parent=1 // pred_region
      %4302 = dma.done [#allocation4], 16
    $region53: #{clsloss_forward.1} parent=1 // pred_fallthru
      _
    // Predicated region
    $region54: #{clsloss_forward.1} parent=1 // pred_check
      _
    $region55: #{clsloss_forward.1} parent=1 // pred_check_branch
      %4304 = sbr.rel (0) target = $region57
    $region56: #{clsloss_forward.1} parent=1 // pred_region
      %4305 = dma.done [#allocation12], 16
    $region57: #{clsloss_forward.1} parent=1 // pred_fallthru
      _
    %4306 = sfence
    %4307 = vsyncpa [#allocation3], 1
    %4308 = vsyncpa [#allocation6], 1
    %4309 = vsyncpa [#allocation9], 1
    %4310 = vsyncpa [#allocation4], 1
    %4311 = vsyncpa [#allocation12], 1

</llo_original>
